<compile_context>
chip_gen: v7x
topology: tpu7x:2x2x1
jax: 0.10.0
libtpu: 0.0.40
codegen_flags: <defaults>
</compile_context>

<pallas_src>
import functools

import jax
import jax.numpy as jnp
from jax.experimental import pallas as pl
from jax.experimental.pallas import tpu as pltpu

_ROW_HALO = 1   # conv padding=1 needs exactly one halo row top/bottom (any dilation)
_COL_HALO = 8   # 8 halo columns keep the interior scratch copy sublane-aligned (VMEM only)


def _fill_padded_scratch(pad_ref, src):
    """Copy `src` into the scratch interior and zero only the four halo strips."""
    h, w, _ = src.shape
    hp, wp, c = pad_ref.shape
    zrow = jnp.zeros((_ROW_HALO, wp, c), pad_ref.dtype)
    pad_ref[0:_ROW_HALO, :, :] = zrow                       # top halo
    pad_ref[hp - _ROW_HALO:hp, :, :] = zrow                 # bottom halo
    zcol = jnp.zeros((h, _COL_HALO, c), pad_ref.dtype)
    pad_ref[_ROW_HALO:_ROW_HALO + h, 0:_COL_HALO, :] = zcol             # left halo
    pad_ref[_ROW_HALO:_ROW_HALO + h, wp - _COL_HALO:wp, :] = zcol       # right halo
    pad_ref[_ROW_HALO:_ROW_HALO + h, _COL_HALO:_COL_HALO + w, :] = (
        src.astype(pad_ref.dtype))                                      # interior (once)


def _conv3x3(pad_ref, w_ref, *, stride, dilation, h_out, w_out):
    """3x3 conv from a zero-halo'd bf16 VMEM scratch as 3 MXU matmuls (one per ky).

    pad_ref : (Hp, Wp, Cin) bf16 scratch, real data starting at (_ROW_HALO, _COL_HALO).
    w_ref   : (3, 3*Cin, Cout) bf16 weights (BN scale folded, kx/cin merged on dim 1).
    Per ky the three kx-shifted patches are concatenated along channels so each matmul
    contracts over 3*Cin; accumulation is f32 via preferred_element_type.
    """
    wp, cin = pad_ref.shape[1], pad_ref.shape[2]
    cout = w_ref.shape[-1]
    h_span = (h_out - 1) * stride + 1
    w_span = (w_out - 1) * stride + 1
    acc = jnp.zeros((h_out * w_out, cout), jnp.float32)
    for ky in range(3):
        r0 = _ROW_HALO - 1 + ky * dilation
        if stride == 1:
            rows = pad_ref[r0:r0 + h_out, :, :]
        else:
            # Compact the strided rows once per ky (not once per tap).
            rows = jax.lax.slice(pad_ref[r0:r0 + h_span, :, :],
                                 (0, 0, 0), (h_span, wp, cin), (stride, 1, 1))
        taps = []
        for kx in range(3):
            c0 = _COL_HALO - 1 + kx * dilation
            if stride == 1:
                taps.append(rows[:, c0:c0 + w_out, :])
            else:
                taps.append(jax.lax.slice(rows, (0, c0, 0),
                                          (h_out, c0 + w_span, cin), (1, stride, 1)))
        tap = jnp.concatenate(taps, axis=-1).reshape(h_out * w_out, 3 * cin)
        acc = acc + jnp.dot(tap, w_ref[ky], preferred_element_type=jnp.float32)
    return acc


def _conv_bn_relu_kernel(x_ref, w_ref, b_ref, o_ref, xpad_ref, *, stride, dilation):
    """conv1 + folded BN1 + ReLU; output stored unpadded in bf16."""
    h_out, w_out, cout = o_ref.shape
    _fill_padded_scratch(xpad_ref, x_ref[...])
    acc = _conv3x3(xpad_ref, w_ref, stride=stride, dilation=dilation,
                   h_out=h_out, w_out=w_out)
    y = jnp.maximum(acc + b_ref[...].astype(jnp.float32), 0.0)
    o_ref[...] = y.reshape(h_out, w_out, cout).astype(o_ref.dtype)


def _conv_bn_add_relu_kernel(y_ref, w_ref, b_ref, r_ref, o_ref, ypad_ref):
    """conv2 + folded BN2 + residual add + final ReLU."""
    h_out, w_out, cout = o_ref.shape
    _fill_padded_scratch(ypad_ref, y_ref[...])
    acc = _conv3x3(ypad_ref, w_ref, stride=1, dilation=1, h_out=h_out, w_out=w_out)
    y = (acc + b_ref[...].astype(jnp.float32)).reshape(h_out, w_out, cout)
    y = y + r_ref[...].astype(jnp.float32)
    o_ref[...] = jnp.maximum(y, 0.0).astype(o_ref.dtype)


def _vmem_limit_bytes():
    """~70% of physical VMEM: ~90 MiB on v5e/v6e (128 MiB), ~45 MiB on v7x (64 MiB)."""
    cap = 64 * 1024 * 1024
    try:
        cap = int(getattr(pltpu.get_tpu_info(), "vmem_capacity_bytes", cap))
    except Exception:
        pass
    return min(int(cap * 0.70), 100 * 1024 * 1024)


def basic_block(x, w1, bn1, w2, bn2, *, stride=1, dilation=1, eps=1e-5, residual=None):
    """BasicBlock forward.  x: NCHW; w1/w2: (3,3,Cin,Cout) HWIO; bn*: dicts of (C,) arrays."""
    N, Cin, H, W = x.shape
    Cout = w1.shape[-1]
    assert w1.shape == (3, 3, Cin, Cout) and w2.shape == (3, 3, Cout, Cout)

    # ---- fold eval-mode BatchNorm into conv weights / bias; bf16 MXU operands ----
    s1 = bn1["gamma"] / jnp.sqrt(bn1["var"] + eps)
    b1 = (bn1["beta"] - bn1["mean"] * s1).reshape(1, Cout).astype(jnp.float32)
    w1f = (w1 * s1).astype(jnp.bfloat16).reshape(3, 3 * Cin, Cout)   # (ky, kx*cin, cout)
    s2 = bn2["gamma"] / jnp.sqrt(bn2["var"] + eps)
    b2 = (bn2["beta"] - bn2["mean"] * s2).reshape(1, Cout).astype(jnp.float32)
    w2f = (w2 * s2).astype(jnp.bfloat16).reshape(3, 3 * Cout, Cout)

    # ---- geometry (kernel=3, padding=1 per the PyTorch conv3x3, any dilation) ----
    H1 = (H + 2 - 2 * dilation - 1) // stride + 1
    W1 = (W + 2 - 2 * dilation - 1) // stride + 1

    # One layout change for the whole block: NCHW -> NHWC (channels on the lane axis).
    # No wrapper-side pad: the zero halo lives only in each kernel's VMEM scratch.
    x_nhwc = jnp.transpose(x, (0, 2, 3, 1))
    if residual is None:
        assert stride == 1 and Cin == Cout and (H1, W1) == (H, W), (
            "identity residual requires stride=1 and inplanes == planes; "
            "pass residual= for a downsampled path")
        res_nhwc = x_nhwc
    else:
        res_nhwc = jnp.transpose(residual, (0, 2, 3, 1))

    cparams = pltpu.CompilerParams(dimension_semantics=("parallel",),
                                   vmem_limit_bytes=_vmem_limit_bytes())
    bf16_bytes = 2
    x_bytes = x.dtype.itemsize

    # ---- kernel 1: conv1 + BN1 + ReLU -> bf16 unpadded intermediate ----
    flops1 = 2 * N * H1 * W1 * Cout * 9 * Cin
    bytes1 = (N * H * W * Cin * x_bytes + 9 * Cin * Cout * bf16_bytes
              + Cout * 4 + N * H1 * W1 * Cout * bf16_bytes)
    y1 = pl.pallas_call(
        functools.partial(_conv_bn_relu_kernel, stride=stride, dilation=dilation),
        out_shape=jax.ShapeDtypeStruct((N, H1, W1, Cout), jnp.bfloat16),
        grid=(N,),
        in_specs=[
            pl.BlockSpec((None, H, W, Cin), lambda n: (n, 0, 0, 0)),   # squeezed batch dim
            pl.BlockSpec((3, 3 * Cin, Cout), lambda n: (0, 0, 0)),
            pl.BlockSpec((1, Cout), lambda n: (0, 0)),
        ],
        out_specs=pl.BlockSpec((None, H1, W1, Cout), lambda n: (n, 0, 0, 0)),
        scratch_shapes=[pltpu.VMEM((H + 2 * _ROW_HALO, W + 2 * _COL_HALO, Cin),
                                   jnp.bfloat16)],
        compiler_params=cparams,
        cost_estimate=pl.CostEstimate(flops=flops1, transcendentals=0,
                                      bytes_accessed=bytes1),
    )(x_nhwc, w1f, b1)

    # ---- kernel 2: conv2 + BN2 + residual add + ReLU ----
    flops2 = 2 * N * H1 * W1 * Cout * 9 * Cout + 2 * N * H1 * W1 * Cout
    bytes2 = (N * H1 * W1 * Cout * bf16_bytes + 9 * Cout * Cout * bf16_bytes
              + Cout * 4 + 2 * N * H1 * W1 * Cout * x_bytes)
    out_nhwc = pl.pallas_call(
        _conv_bn_add_relu_kernel,
        out_shape=jax.ShapeDtypeStruct((N, H1, W1, Cout), x.dtype),
        grid=(N,),
        in_specs=[
            pl.BlockSpec((None, H1, W1, Cout), lambda n: (n, 0, 0, 0)),
            pl.BlockSpec((3, 3 * Cout, Cout), lambda n: (0, 0, 0)),
            pl.BlockSpec((1, Cout), lambda n: (0, 0)),
            pl.BlockSpec((None, H1, W1, Cout), lambda n: (n, 0, 0, 0)),   # residual
        ],
        out_specs=pl.BlockSpec((None, H1, W1, Cout), lambda n: (n, 0, 0, 0)),
        scratch_shapes=[pltpu.VMEM((H1 + 2 * _ROW_HALO, W1 + 2 * _COL_HALO, Cout),
                                   jnp.bfloat16)],
        compiler_params=cparams,
        cost_estimate=pl.CostEstimate(flops=flops2, transcendentals=0,
                                      bytes_accessed=bytes2),
    )(y1, w2f, b2, res_nhwc)

    return jnp.transpose(out_nhwc, (0, 3, 1, 2))    # back to NCHW


def _reference_basic_block(x, w1, bn1, w2, bn2, *, stride=1, dilation=1, eps=1e-5):
    """Pure-JAX reference mirroring the PyTorch forward (eval-mode BN)."""
    hp = jax.lax.Precision.HIGHEST

    def conv(inp, w, s, d):
        return jax.lax.conv_general_dilated(
            inp, w, window_strides=(s, s), padding=((1, 1), (1, 1)),
            rhs_dilation=(d, d), dimension_numbers=("NCHW", "HWIO", "NCHW"),
            precision=hp)

    def bn(y, p):
        sc = p["gamma"] / jnp.sqrt(p["var"] + eps)
        sh = p["beta"] - p["mean"] * sc
        return y * sc[None, :, None, None] + sh[None, :, None, None]

    out = jnp.maximum(bn(conv(x, w1, stride, dilation), bn1), 0.0)
    out = bn(conv(out, w2, 1, 1), bn2)
    return jnp.maximum(out + x, 0.0)


if __name__ == "__main__":
    N, C, H, W = 2, 4, 16, 16
    keys = jax.random.split(jax.random.PRNGKey(0), 11)

    # Quantize inputs/weights to bf16-representable f32 so the first conv is essentially
    # exact; the tolerance below absorbs the bf16 folded-weight / bf16 intermediate
    # rounding of the fused pipeline vs the HIGHEST-precision reference.
    def _bf16(a):
        return a.astype(jnp.bfloat16).astype(jnp.float32)

    x = _bf16(jax.random.normal(keys[0], (N, C, H, W), jnp.float32))
    w1 = _bf16(0.2 * jax.random.normal(keys[1], (3, 3, C, C), jnp.float32))
    w2 = _bf16(0.2 * jax.random.normal(keys[2], (3, 3, C, C), jnp.float32))
    bn1 = dict(gamma=0.8 + 0.4 * jax.random.uniform(keys[3], (C,), jnp.float32),
               beta=0.1 * jax.random.normal(keys[4], (C,), jnp.float32),
               mean=0.1 * jax.random.normal(keys[5], (C,), jnp.float32),
               var=0.8 + 0.4 * jax.random.uniform(keys[6], (C,), jnp.float32))
    bn2 = dict(gamma=0.8 + 0.4 * jax.random.uniform(keys[7], (C,), jnp.float32),
               beta=0.1 * jax.random.normal(keys[8], (C,), jnp.float32),
               mean=0.1 * jax.random.normal(keys[9], (C,), jnp.float32),
               var=0.8 + 0.4 * jax.random.uniform(keys[10], (C,), jnp.float32))

    block_fn = jax.jit(functools.partial(basic_block, stride=1, dilation=1))
    out = jax.block_until_ready(block_fn(x, w1, bn1, w2, bn2))

    ref = _reference_basic_block(x, w1, bn1, w2, bn2, stride=1, dilation=1)
    assert out.shape == x.shape and out.dtype == x.dtype
    assert jnp.allclose(out, ref, atol=3e-2, rtol=3e-2), (
        "mismatch vs reference: max abs err = %e" % float(jnp.max(jnp.abs(out - ref))))

    print("KERNEL_OK")
</pallas_src>

<mosaic_0001>
module attributes {stable_mosaic.version = 11 : i64} {
  func.func @_conv_bn_relu_kernel(%arg0: i32, %arg1: memref<1x16x16x4xf32, #tpu.memory_space<vmem>>, %arg2: memref<3x12x4xbf16, #tpu.memory_space<vmem>>, %arg3: memref<1x4xf32, #tpu.memory_space<vmem>>, %arg4: memref<1x16x16x4xbf16, #tpu.memory_space<vmem>>, %arg5: memref<18x32x4xbf16, #tpu.memory_space<vmem>>) attributes {dimension_semantics = [#tpu.dimension_semantics<parallel>], iteration_bounds = array<i64: 2>, scalar_prefetch = 0 : i64, scratch_operands = 1 : i64, tpu.core_type = #tpu.core_type<tc>, window_params = [{transform_indices = @transform_0, window_bounds = array<i64: 1, 16, 16, 4>}, {pipeline_mode = #tpu.pipeline_mode<synchronous>, transform_indices = @transform_1, window_bounds = array<i64: 3, 12, 4>}, {pipeline_mode = #tpu.pipeline_mode<synchronous>, transform_indices = @transform_2, window_bounds = array<i64: 1, 4>}, {transform_indices = @transform_3, window_bounds = array<i64: 1, 16, 16, 4>}]} {
    %c0 = arith.constant 0 : index
    %c0_0 = arith.constant 0 : index
    %c0_1 = arith.constant 0 : index
    %c0_2 = arith.constant 0 : index
    %0 = vector.load %arg1[%c0, %c0_0, %c0_1, %c0_2] : memref<1x16x16x4xf32, #tpu.memory_space<vmem>>, vector<1x16x16x4xf32>
    %1 = vector.shape_cast %0 : vector<1x16x16x4xf32> to vector<16x16x4xf32>
    %cst = arith.constant 0.000000e+00 : bf16
    %2 = vector.broadcast %cst : bf16 to vector<1x32x4xbf16>
    %c0_3 = arith.constant 0 : index
    %c0_4 = arith.constant 0 : index
    %c0_5 = arith.constant 0 : index
    %3 = vector.load %arg5[%c0_3, %c0_4, %c0_5] : memref<18x32x4xbf16, #tpu.memory_space<vmem>>, vector<1x32x4xbf16>
    tpu.vector_store %arg5[%c0_3, %c0_4, %c0_5], %2 {strides = array<i32>} : memref<18x32x4xbf16, #tpu.memory_space<vmem>>, vector<1x32x4xbf16>,
    %c17 = arith.constant 17 : index
    %c0_6 = arith.constant 0 : index
    %c0_7 = arith.constant 0 : index
    %4 = vector.load %arg5[%c17, %c0_6, %c0_7] : memref<18x32x4xbf16, #tpu.memory_space<vmem>>, vector<1x32x4xbf16>
    tpu.vector_store %arg5[%c17, %c0_6, %c0_7], %2 {strides = array<i32>} : memref<18x32x4xbf16, #tpu.memory_space<vmem>>, vector<1x32x4xbf16>,
    %cst_8 = arith.constant 0.000000e+00 : bf16
    %5 = vector.broadcast %cst_8 : bf16 to vector<16x8x4xbf16>
    %c1 = arith.constant 1 : index
    %c0_9 = arith.constant 0 : index
    %c0_10 = arith.constant 0 : index
    %6 = vector.load %arg5[%c1, %c0_9, %c0_10] : memref<18x32x4xbf16, #tpu.memory_space<vmem>>, vector<16x8x4xbf16>
    tpu.vector_store %arg5[%c1, %c0_9, %c0_10], %5 {strides = array<i32>} : memref<18x32x4xbf16, #tpu.memory_space<vmem>>, vector<16x8x4xbf16>,
    %c1_11 = arith.constant 1 : index
    %c24 = arith.constant 24 : index
    %c0_12 = arith.constant 0 : index
    %7 = vector.load %arg5[%c1_11, %c24, %c0_12] : memref<18x32x4xbf16, #tpu.memory_space<vmem>>, vector<16x8x4xbf16>
    tpu.vector_store %arg5[%c1_11, %c24, %c0_12], %5 {strides = array<i32>} : memref<18x32x4xbf16, #tpu.memory_space<vmem>>, vector<16x8x4xbf16>,
    %8 = arith.truncf %1 : vector<16x16x4xf32> to vector<16x16x4xbf16>
    %c1_13 = arith.constant 1 : index
    %c8 = arith.constant 8 : index
    %c0_14 = arith.constant 0 : index
    %9 = vector.load %arg5[%c1_13, %c8, %c0_14] : memref<18x32x4xbf16, #tpu.memory_space<vmem>>, vector<16x16x4xbf16>
    tpu.vector_store %arg5[%c1_13, %c8, %c0_14], %8 {strides = array<i32>} : memref<18x32x4xbf16, #tpu.memory_space<vmem>>, vector<16x16x4xbf16>,
    %cst_15 = arith.constant 0.000000e+00 : f32
    %10 = vector.broadcast %cst_15 : f32 to vector<256x4xf32>
    %c0_16 = arith.constant 0 : index
    %c0_17 = arith.constant 0 : index
    %c0_18 = arith.constant 0 : index
    %11 = vector.load %arg5[%c0_16, %c0_17, %c0_18] : memref<18x32x4xbf16, #tpu.memory_space<vmem>>, vector<16x32x4xbf16>
    %12 = vector.extract_strided_slice %11 {offsets = [0, 7, 0], sizes = [16, 16, 4], strides = [1, 1, 1]} : vector<16x32x4xbf16> to vector<16x16x4xbf16>
    %13 = vector.extract_strided_slice %11 {offsets = [0, 8, 0], sizes = [16, 16, 4], strides = [1, 1, 1]} : vector<16x32x4xbf16> to vector<16x16x4xbf16>
    %14 = vector.extract_strided_slice %11 {offsets = [0, 9, 0], sizes = [16, 16, 4], strides = [1, 1, 1]} : vector<16x32x4xbf16> to vector<16x16x4xbf16>
    %15 = tpu.concatenate %12, %13, %14 in 2 : vector<16x16x4xbf16>, vector<16x16x4xbf16>, vector<16x16x4xbf16> -> vector<16x16x12xbf16>
    %16 = vector.shape_cast %15 : vector<16x16x12xbf16> to vector<256x12xbf16>
    %c0_19 = arith.constant 0 : index
    %c0_20 = arith.constant 0 : index
    %c0_21 = arith.constant 0 : index
    %17 = vector.load %arg2[%c0_19, %c0_20, %c0_21] : memref<3x12x4xbf16, #tpu.memory_space<vmem>>, vector<1x12x4xbf16>
    %18 = vector.shape_cast %17 : vector<1x12x4xbf16> to vector<12x4xbf16>
    %cst_22 = arith.constant dense<0.000000e+00> : vector<256x4xf32>
    %19 = tpu.matmul %16, %18, %cst_22 {dimension_numbers = #tpu.dot_dimension_numbers<[1], [0], [0], [1], [0, 0, 1, 1], [], []>} : vector<256x12xbf16>, vector<12x4xbf16>, vector<256x4xf32> -> vector<256x4xf32>
    %20 = arith.addf %10, %19 : vector<256x4xf32>
    %c1_23 = arith.constant 1 : index
    %c0_24 = arith.constant 0 : index
    %c0_25 = arith.constant 0 : index
    %21 = vector.load %arg5[%c1_23, %c0_24, %c0_25] : memref<18x32x4xbf16, #tpu.memory_space<vmem>>, vector<16x32x4xbf16>
    %22 = vector.extract_strided_slice %21 {offsets = [0, 7, 0], sizes = [16, 16, 4], strides = [1, 1, 1]} : vector<16x32x4xbf16> to vector<16x16x4xbf16>
    %23 = vector.extract_strided_slice %21 {offsets = [0, 8, 0], sizes = [16, 16, 4], strides = [1, 1, 1]} : vector<16x32x4xbf16> to vector<16x16x4xbf16>
    %24 = vector.extract_strided_slice %21 {offsets = [0, 9, 0], sizes = [16, 16, 4], strides = [1, 1, 1]} : vector<16x32x4xbf16> to vector<16x16x4xbf16>
    %25 = tpu.concatenate %22, %23, %24 in 2 : vector<16x16x4xbf16>, vector<16x16x4xbf16>, vector<16x16x4xbf16> -> vector<16x16x12xbf16>
    %26 = vector.shape_cast %25 : vector<16x16x12xbf16> to vector<256x12xbf16>
    %c1_26 = arith.constant 1 : index
    %c0_27 = arith.constant 0 : index
    %c0_28 = arith.constant 0 : index
    %27 = vector.load %arg2[%c1_26, %c0_27, %c0_28] : memref<3x12x4xbf16, #tpu.memory_space<vmem>>, vector<1x12x4xbf16>
    %28 = vector.shape_cast %27 : vector<1x12x4xbf16> to vector<12x4xbf16>
    %cst_29 = arith.constant dense<0.000000e+00> : vector<256x4xf32>
    %29 = tpu.matmul %26, %28, %cst_29 {dimension_numbers = #tpu.dot_dimension_numbers<[1], [0], [0], [1], [0, 0, 1, 1], [], []>} : vector<256x12xbf16>, vector<12x4xbf16>, vector<256x4xf32> -> vector<256x4xf32>
    %30 = arith.addf %20, %29 : vector<256x4xf32>
    %c2 = arith.constant 2 : index
    %c0_30 = arith.constant 0 : index
    %c0_31 = arith.constant 0 : index
    %31 = vector.load %arg5[%c2, %c0_30, %c0_31] : memref<18x32x4xbf16, #tpu.memory_space<vmem>>, vector<16x32x4xbf16>
    %32 = vector.extract_strided_slice %31 {offsets = [0, 7, 0], sizes = [16, 16, 4], strides = [1, 1, 1]} : vector<16x32x4xbf16> to vector<16x16x4xbf16>
    %33 = vector.extract_strided_slice %31 {offsets = [0, 8, 0], sizes = [16, 16, 4], strides = [1, 1, 1]} : vector<16x32x4xbf16> to vector<16x16x4xbf16>
    %34 = vector.extract_strided_slice %31 {offsets = [0, 9, 0], sizes = [16, 16, 4], strides = [1, 1, 1]} : vector<16x32x4xbf16> to vector<16x16x4xbf16>
    %35 = tpu.concatenate %32, %33, %34 in 2 : vector<16x16x4xbf16>, vector<16x16x4xbf16>, vector<16x16x4xbf16> -> vector<16x16x12xbf16>
    %36 = vector.shape_cast %35 : vector<16x16x12xbf16> to vector<256x12xbf16>
    %c2_32 = arith.constant 2 : index
    %c0_33 = arith.constant 0 : index
    %c0_34 = arith.constant 0 : index
    %37 = vector.load %arg2[%c2_32, %c0_33, %c0_34] : memref<3x12x4xbf16, #tpu.memory_space<vmem>>, vector<1x12x4xbf16>
    %38 = vector.shape_cast %37 : vector<1x12x4xbf16> to vector<12x4xbf16>
    %cst_35 = arith.constant dense<0.000000e+00> : vector<256x4xf32>
    %39 = tpu.matmul %36, %38, %cst_35 {dimension_numbers = #tpu.dot_dimension_numbers<[1], [0], [0], [1], [0, 0, 1, 1], [], []>} : vector<256x12xbf16>, vector<12x4xbf16>, vector<256x4xf32> -> vector<256x4xf32>
    %40 = arith.addf %30, %39 : vector<256x4xf32>
    %c0_36 = arith.constant 0 : index
    %c0_37 = arith.constant 0 : index
    %41 = vector.load %arg3[%c0_36, %c0_37] : memref<1x4xf32, #tpu.memory_space<vmem>>, vector<1x4xf32>
    %42 = vector.broadcast %41 : vector<1x4xf32> to vector<256x4xf32>
    %43 = arith.addf %40, %42 : vector<256x4xf32>
    %cst_38 = arith.constant 0.000000e+00 : f32
    %44 = vector.broadcast %cst_38 : f32 to vector<256x4xf32>
    %45 = arith.maximumf %43, %44 : vector<256x4xf32>
    %46 = vector.shape_cast %45 : vector<256x4xf32> to vector<16x16x4xf32>
    %47 = arith.truncf %46 : vector<16x16x4xf32> to vector<16x16x4xbf16>
    %c0_39 = arith.constant 0 : index
    %c0_40 = arith.constant 0 : index
    %c0_41 = arith.constant 0 : index
    %c0_42 = arith.constant 0 : index
    %48 = vector.load %arg4[%c0_39, %c0_40, %c0_41, %c0_42] : memref<1x16x16x4xbf16, #tpu.memory_space<vmem>>, vector<1x16x16x4xbf16>
    %49 = vector.shape_cast %48 : vector<1x16x16x4xbf16> to vector<16x16x4xbf16>
    %50 = vector.shape_cast %47 : vector<16x16x4xbf16> to vector<1x16x16x4xbf16>
    tpu.vector_store %arg4[%c0_39, %c0_40, %c0_41, %c0_42], %50 {strides = array<i32>} : memref<1x16x16x4xbf16, #tpu.memory_space<vmem>>, vector<1x16x16x4xbf16>,
    return
  }
  func.func @transform_0(%arg0: i32) -> (i32, i32, i32, i32) {
    %c0_i32 = arith.constant 0 : i32
    %c0_i32_0 = arith.constant 0 : i32
    %c0_i32_1 = arith.constant 0 : i32
    %c0_i32_2 = arith.constant 0 : i32
    return %arg0, %c0_i32, %c0_i32_0, %c0_i32_1 : i32, i32, i32, i32
  }
  func.func @transform_1(%arg0: i32) -> (i32, i32, i32) {
    %c0_i32 = arith.constant 0 : i32
    %c0_i32_0 = arith.constant 0 : i32
    %c0_i32_1 = arith.constant 0 : i32
    %c0_i32_2 = arith.constant 0 : i32
    return %c0_i32, %c0_i32_0, %c0_i32_1 : i32, i32, i32
  }
  func.func @transform_2(%arg0: i32) -> (i32, i32) {
    %c0_i32 = arith.constant 0 : i32
    %c0_i32_0 = arith.constant 0 : i32
    %c0_i32_1 = arith.constant 0 : i32
    return %c0_i32, %c0_i32_0 : i32, i32
  }
  func.func @transform_3(%arg0: i32) -> (i32, i32, i32, i32) {
    %c0_i32 = arith.constant 0 : i32
    %c0_i32_0 = arith.constant 0 : i32
    %c0_i32_1 = arith.constant 0 : i32
    %c0_i32_2 = arith.constant 0 : i32
    return %arg0, %c0_i32, %c0_i32_0, %c0_i32_1 : i32, i32, i32, i32
  }
}

module attributes {stable_mosaic.version = 11 : i64} {
  func.func @_conv_bn_add_relu_kernel(%arg0: i32, %arg1: memref<1x16x16x4xbf16, #tpu.memory_space<vmem>>, %arg2: memref<3x12x4xbf16, #tpu.memory_space<vmem>>, %arg3: memref<1x4xf32, #tpu.memory_space<vmem>>, %arg4: memref<1x16x16x4xf32, #tpu.memory_space<vmem>>, %arg5: memref<1x16x16x4xf32, #tpu.memory_space<vmem>>, %arg6: memref<18x32x4xbf16, #tpu.memory_space<vmem>>) attributes {dimension_semantics = [#tpu.dimension_semantics<parallel>], iteration_bounds = array<i64: 2>, scalar_prefetch = 0 : i64, scratch_operands = 1 : i64, tpu.core_type = #tpu.core_type<tc>, window_params = [{transform_indices = @transform_0, window_bounds = array<i64: 1, 16, 16, 4>}, {pipeline_mode = #tpu.pipeline_mode<synchronous>, transform_indices = @transform_1, window_bounds = array<i64: 3, 12, 4>}, {pipeline_mode = #tpu.pipeline_mode<synchronous>, transform_indices = @transform_2, window_bounds = array<i64: 1, 4>}, {transform_indices = @transform_3, window_bounds = array<i64: 1, 16, 16, 4>}, {transform_indices = @transform_4, window_bounds = array<i64: 1, 16, 16, 4>}]} {
    %c0 = arith.constant 0 : index
    %c0_0 = arith.constant 0 : index
    %c0_1 = arith.constant 0 : index
    %c0_2 = arith.constant 0 : index
    %0 = vector.load %arg1[%c0, %c0_0, %c0_1, %c0_2] : memref<1x16x16x4xbf16, #tpu.memory_space<vmem>>, vector<1x16x16x4xbf16>
    %1 = vector.shape_cast %0 : vector<1x16x16x4xbf16> to vector<16x16x4xbf16>
    %cst = arith.constant 0.000000e+00 : bf16
    %2 = vector.broadcast %cst : bf16 to vector<1x32x4xbf16>
    %c0_3 = arith.constant 0 : index
    %c0_4 = arith.constant 0 : index
    %c0_5 = arith.constant 0 : index
    %3 = vector.load %arg6[%c0_3, %c0_4, %c0_5] : memref<18x32x4xbf16, #tpu.memory_space<vmem>>, vector<1x32x4xbf16>
    tpu.vector_store %arg6[%c0_3, %c0_4, %c0_5], %2 {strides = array<i32>} : memref<18x32x4xbf16, #tpu.memory_space<vmem>>, vector<1x32x4xbf16>,
    %c17 = arith.constant 17 : index
    %c0_6 = arith.constant 0 : index
    %c0_7 = arith.constant 0 : index
    %4 = vector.load %arg6[%c17, %c0_6, %c0_7] : memref<18x32x4xbf16, #tpu.memory_space<vmem>>, vector<1x32x4xbf16>
    tpu.vector_store %arg6[%c17, %c0_6, %c0_7], %2 {strides = array<i32>} : memref<18x32x4xbf16, #tpu.memory_space<vmem>>, vector<1x32x4xbf16>,
    %cst_8 = arith.constant 0.000000e+00 : bf16
    %5 = vector.broadcast %cst_8 : bf16 to vector<16x8x4xbf16>
    %c1 = arith.constant 1 : index
    %c0_9 = arith.constant 0 : index
    %c0_10 = arith.constant 0 : index
    %6 = vector.load %arg6[%c1, %c0_9, %c0_10] : memref<18x32x4xbf16, #tpu.memory_space<vmem>>, vector<16x8x4xbf16>
    tpu.vector_store %arg6[%c1, %c0_9, %c0_10], %5 {strides = array<i32>} : memref<18x32x4xbf16, #tpu.memory_space<vmem>>, vector<16x8x4xbf16>,
    %c1_11 = arith.constant 1 : index
    %c24 = arith.constant 24 : index
    %c0_12 = arith.constant 0 : index
    %7 = vector.load %arg6[%c1_11, %c24, %c0_12] : memref<18x32x4xbf16, #tpu.memory_space<vmem>>, vector<16x8x4xbf16>
    tpu.vector_store %arg6[%c1_11, %c24, %c0_12], %5 {strides = array<i32>} : memref<18x32x4xbf16, #tpu.memory_space<vmem>>, vector<16x8x4xbf16>,
    %c1_13 = arith.constant 1 : index
    %c8 = arith.constant 8 : index
    %c0_14 = arith.constant 0 : index
    %8 = vector.load %arg6[%c1_13, %c8, %c0_14] : memref<18x32x4xbf16, #tpu.memory_space<vmem>>, vector<16x16x4xbf16>
    tpu.vector_store %arg6[%c1_13, %c8, %c0_14], %1 {strides = array<i32>} : memref<18x32x4xbf16, #tpu.memory_space<vmem>>, vector<16x16x4xbf16>,
    %cst_15 = arith.constant 0.000000e+00 : f32
    %9 = vector.broadcast %cst_15 : f32 to vector<256x4xf32>
    %c0_16 = arith.constant 0 : index
    %c0_17 = arith.constant 0 : index
    %c0_18 = arith.constant 0 : index
    %10 = vector.load %arg6[%c0_16, %c0_17, %c0_18] : memref<18x32x4xbf16, #tpu.memory_space<vmem>>, vector<16x32x4xbf16>
    %11 = vector.extract_strided_slice %10 {offsets = [0, 7, 0], sizes = [16, 16, 4], strides = [1, 1, 1]} : vector<16x32x4xbf16> to vector<16x16x4xbf16>
    %12 = vector.extract_strided_slice %10 {offsets = [0, 8, 0], sizes = [16, 16, 4], strides = [1, 1, 1]} : vector<16x32x4xbf16> to vector<16x16x4xbf16>
    %13 = vector.extract_strided_slice %10 {offsets = [0, 9, 0], sizes = [16, 16, 4], strides = [1, 1, 1]} : vector<16x32x4xbf16> to vector<16x16x4xbf16>
    %14 = tpu.concatenate %11, %12, %13 in 2 : vector<16x16x4xbf16>, vector<16x16x4xbf16>, vector<16x16x4xbf16> -> vector<16x16x12xbf16>
    %15 = vector.shape_cast %14 : vector<16x16x12xbf16> to vector<256x12xbf16>
    %c0_19 = arith.constant 0 : index
    %c0_20 = arith.constant 0 : index
    %c0_21 = arith.constant 0 : index
    %16 = vector.load %arg2[%c0_19, %c0_20, %c0_21] : memref<3x12x4xbf16, #tpu.memory_space<vmem>>, vector<1x12x4xbf16>
    %17 = vector.shape_cast %16 : vector<1x12x4xbf16> to vector<12x4xbf16>
    %cst_22 = arith.constant dense<0.000000e+00> : vector<256x4xf32>
    %18 = tpu.matmul %15, %17, %cst_22 {dimension_numbers = #tpu.dot_dimension_numbers<[1], [0], [0], [1], [0, 0, 1, 1], [], []>} : vector<256x12xbf16>, vector<12x4xbf16>, vector<256x4xf32> -> vector<256x4xf32>
    %19 = arith.addf %9, %18 : vector<256x4xf32>
    %c1_23 = arith.constant 1 : index
    %c0_24 = arith.constant 0 : index
    %c0_25 = arith.constant 0 : index
    %20 = vector.load %arg6[%c1_23, %c0_24, %c0_25] : memref<18x32x4xbf16, #tpu.memory_space<vmem>>, vector<16x32x4xbf16>
    %21 = vector.extract_strided_slice %20 {offsets = [0, 7, 0], sizes = [16, 16, 4], strides = [1, 1, 1]} : vector<16x32x4xbf16> to vector<16x16x4xbf16>
    %22 = vector.extract_strided_slice %20 {offsets = [0, 8, 0], sizes = [16, 16, 4], strides = [1, 1, 1]} : vector<16x32x4xbf16> to vector<16x16x4xbf16>
    %23 = vector.extract_strided_slice %20 {offsets = [0, 9, 0], sizes = [16, 16, 4], strides = [1, 1, 1]} : vector<16x32x4xbf16> to vector<16x16x4xbf16>
    %24 = tpu.concatenate %21, %22, %23 in 2 : vector<16x16x4xbf16>, vector<16x16x4xbf16>, vector<16x16x4xbf16> -> vector<16x16x12xbf16>
    %25 = vector.shape_cast %24 : vector<16x16x12xbf16> to vector<256x12xbf16>
    %c1_26 = arith.constant 1 : index
    %c0_27 = arith.constant 0 : index
    %c0_28 = arith.constant 0 : index
    %26 = vector.load %arg2[%c1_26, %c0_27, %c0_28] : memref<3x12x4xbf16, #tpu.memory_space<vmem>>, vector<1x12x4xbf16>
    %27 = vector.shape_cast %26 : vector<1x12x4xbf16> to vector<12x4xbf16>
    %cst_29 = arith.constant dense<0.000000e+00> : vector<256x4xf32>
    %28 = tpu.matmul %25, %27, %cst_29 {dimension_numbers = #tpu.dot_dimension_numbers<[1], [0], [0], [1], [0, 0, 1, 1], [], []>} : vector<256x12xbf16>, vector<12x4xbf16>, vector<256x4xf32> -> vector<256x4xf32>
    %29 = arith.addf %19, %28 : vector<256x4xf32>
    %c2 = arith.constant 2 : index
    %c0_30 = arith.constant 0 : index
    %c0_31 = arith.constant 0 : index
    %30 = vector.load %arg6[%c2, %c0_30, %c0_31] : memref<18x32x4xbf16, #tpu.memory_space<vmem>>, vector<16x32x4xbf16>
    %31 = vector.extract_strided_slice %30 {offsets = [0, 7, 0], sizes = [16, 16, 4], strides = [1, 1, 1]} : vector<16x32x4xbf16> to vector<16x16x4xbf16>
    %32 = vector.extract_strided_slice %30 {offsets = [0, 8, 0], sizes = [16, 16, 4], strides = [1, 1, 1]} : vector<16x32x4xbf16> to vector<16x16x4xbf16>
    %33 = vector.extract_strided_slice %30 {offsets = [0, 9, 0], sizes = [16, 16, 4], strides = [1, 1, 1]} : vector<16x32x4xbf16> to vector<16x16x4xbf16>
    %34 = tpu.concatenate %31, %32, %33 in 2 : vector<16x16x4xbf16>, vector<16x16x4xbf16>, vector<16x16x4xbf16> -> vector<16x16x12xbf16>
    %35 = vector.shape_cast %34 : vector<16x16x12xbf16> to vector<256x12xbf16>
    %c2_32 = arith.constant 2 : index
    %c0_33 = arith.constant 0 : index
    %c0_34 = arith.constant 0 : index
    %36 = vector.load %arg2[%c2_32, %c0_33, %c0_34] : memref<3x12x4xbf16, #tpu.memory_space<vmem>>, vector<1x12x4xbf16>
    %37 = vector.shape_cast %36 : vector<1x12x4xbf16> to vector<12x4xbf16>
    %cst_35 = arith.constant dense<0.000000e+00> : vector<256x4xf32>
    %38 = tpu.matmul %35, %37, %cst_35 {dimension_numbers = #tpu.dot_dimension_numbers<[1], [0], [0], [1], [0, 0, 1, 1], [], []>} : vector<256x12xbf16>, vector<12x4xbf16>, vector<256x4xf32> -> vector<256x4xf32>
    %39 = arith.addf %29, %38 : vector<256x4xf32>
    %c0_36 = arith.constant 0 : index
    %c0_37 = arith.constant 0 : index
    %40 = vector.load %arg3[%c0_36, %c0_37] : memref<1x4xf32, #tpu.memory_space<vmem>>, vector<1x4xf32>
    %41 = vector.broadcast %40 : vector<1x4xf32> to vector<256x4xf32>
    %42 = arith.addf %39, %41 : vector<256x4xf32>
    %43 = vector.shape_cast %42 : vector<256x4xf32> to vector<16x16x4xf32>
    %c0_38 = arith.constant 0 : index
    %c0_39 = arith.constant 0 : index
    %c0_40 = arith.constant 0 : index
    %c0_41 = arith.constant 0 : index
    %44 = vector.load %arg4[%c0_38, %c0_39, %c0_40, %c0_41] : memref<1x16x16x4xf32, #tpu.memory_space<vmem>>, vector<1x16x16x4xf32>
    %45 = vector.shape_cast %44 : vector<1x16x16x4xf32> to vector<16x16x4xf32>
    %46 = arith.addf %43, %45 : vector<16x16x4xf32>
    %cst_42 = arith.constant 0.000000e+00 : f32
    %47 = vector.broadcast %cst_42 : f32 to vector<16x16x4xf32>
    %48 = arith.maximumf %46, %47 : vector<16x16x4xf32>
    %c0_43 = arith.constant 0 : index
    %c0_44 = arith.constant 0 : index
    %c0_45 = arith.constant 0 : index
    %c0_46 = arith.constant 0 : index
    %49 = vector.load %arg5[%c0_43, %c0_44, %c0_45, %c0_46] : memref<1x16x16x4xf32, #tpu.memory_space<vmem>>, vector<1x16x16x4xf32>
    %50 = vector.shape_cast %49 : vector<1x16x16x4xf32> to vector<16x16x4xf32>
    %51 = vector.shape_cast %48 : vector<16x16x4xf32> to vector<1x16x16x4xf32>
    tpu.vector_store %arg5[%c0_43, %c0_44, %c0_45, %c0_46], %51 {strides = array<i32>} : memref<1x16x16x4xf32, #tpu.memory_space<vmem>>, vector<1x16x16x4xf32>,
    return
  }
  func.func @transform_0(%arg0: i32) -> (i32, i32, i32, i32) {
    %c0_i32 = arith.constant 0 : i32
    %c0_i32_0 = arith.constant 0 : i32
    %c0_i32_1 = arith.constant 0 : i32
    %c0_i32_2 = arith.constant 0 : i32
    return %arg0, %c0_i32, %c0_i32_0, %c0_i32_1 : i32, i32, i32, i32
  }
  func.func @transform_1(%arg0: i32) -> (i32, i32, i32) {
    %c0_i32 = arith.constant 0 : i32
    %c0_i32_0 = arith.constant 0 : i32
    %c0_i32_1 = arith.constant 0 : i32
    %c0_i32_2 = arith.constant 0 : i32
    return %c0_i32, %c0_i32_0, %c0_i32_1 : i32, i32, i32
  }
  func.func @transform_2(%arg0: i32) -> (i32, i32) {
    %c0_i32 = arith.constant 0 : i32
    %c0_i32_0 = arith.constant 0 : i32
    %c0_i32_1 = arith.constant 0 : i32
    return %c0_i32, %c0_i32_0 : i32, i32
  }
  func.func @transform_3(%arg0: i32) -> (i32, i32, i32, i32) {
    %c0_i32 = arith.constant 0 : i32
    %c0_i32_0 = arith.constant 0 : i32
    %c0_i32_1 = arith.constant 0 : i32
    %c0_i32_2 = arith.constant 0 : i32
    return %arg0, %c0_i32, %c0_i32_0, %c0_i32_1 : i32, i32, i32, i32
  }
  func.func @transform_4(%arg0: i32) -> (i32, i32, i32, i32) {
    %c0_i32 = arith.constant 0 : i32
    %c0_i32_0 = arith.constant 0 : i32
    %c0_i32_1 = arith.constant 0 : i32
    %c0_i32_2 = arith.constant 0 : i32
    return %arg0, %c0_i32, %c0_i32_0, %c0_i32_1 : i32, i32, i32, i32
  }
}

</mosaic_0001>

<llo_original>
// kernel: basic_block.2
$region0: #{basic_block.2}
  #allocation0 [shape = 'u32[]', space=smem, size = 0x4, offset = 0x4, fixed_abs, tag = 'smem constant byte address 0x4 - core index']
  #allocation1 [shape = 'u32[144,128]{1,0:T(1,128)}', space=vmem, size = 0x12000, scoped, tag = 'internal scratch']
  #allocation2 [shape = 'bf16[18,32,4]{2,1,0:T(16,128)(2,1)}', space=vmem, size = 0x24000, scoped, tag = 'scratch operand']
  %s0 = inlined_call_operand.vmem [shape: f32[2,16,16,4], index: 0, kind: input, shape index: {}]
  %s1 = inlined_call_operand.vmem [shape: bf16[3,12,4], index: 1, kind: input, shape index: {}]
  %s2 = inlined_call_operand.vmem [shape: f32[1,4], index: 2, kind: input, shape index: {}]
  %s3 = inlined_call_operand.vmem [shape: bf16[2,16,16,4], index: 3, kind: output, shape index: {}]
  %s4 = sld [smem:[#allocation0]]
  $region45: #{basic_block.2} parent=0
    _
  %s6 = ssub.s32 1, %s4
  %s7 = scalar_select 0, %s6, %s4
  loop: start=0, step=1, limit=4
  $region2: #{basic_block.2} parent=0 // loop_pre_header
    _
  $region3: #{basic_block.2} parent=0 // loop_header
    %s9 = sphi 0, %s13
    %p10 = scmp.ge.s32.totalorder %s9, 4
    %s19 = sphi 0, %s21
    %s22 = sphi 0, %s19
    %s23 = sphi 0, %s22
    %s39 = sphi 0, %s23
    %s43 = sphi 0, %s43
    %s45 = sphi 0, %s43
    %s46 = sphi 0, %s45
    %s60 = sphi 0, %s46
    %s64 = sphi 0, %s64
    %s66 = sphi 0, %s64
    %s67 = sphi 0, %s66
    %s81 = sphi 0, %s67
    %s87 = sphi 0, %s89
    %s90 = sphi 0, %s87
    %s91 = sphi 0, %s90
    %s107 = sphi 0, %s91
  $region4: #{basic_block.2} parent=0 // loop_header_branch
    %12 = sbr.rel (%p10) target = $region8
  $region5: #{basic_block.2} parent=0 // loop_body
    %s14 = ssub.s32 %s9, 1
    %s15 = ssub.s32 %s9, 2
    %s16 = sadd.s32 %s9, 1
    %s17 = ssub.s32 %s9, %s16
    %p18 = scmp.eq.s32.totalorder %s17, 0
    %s20 = sadd.s32 %s19, 1
    %s21 = scalar_select %p18, %s19, %s20
    %p24 = pneg %p18
    %p25 = scmp.eq.s32.totalorder %s9, 1
    %p26 = por %p24, %p25
    %p27 = scmp.ne.s32.totalorder %s19, %s22
    %p28 = scmp.eq.s32.totalorder %s9, 0
    %p29 = por %p27, %p28
    %p30 = scmp.ne.s32.totalorder %s19, %s22
    %p31 = scmp.eq.s32.totalorder %s14, 1
    %p32 = por %p30, %p31
    %p33 = scmp.ne.s32.totalorder %s22, %s23
    %p34 = scmp.eq.s32.totalorder %s14, 0
    %p35 = por %p33, %p34
    %p36 = scmp.ne.s32.totalorder %s22, %s23
    %p37 = scmp.eq.s32.totalorder %s15, 1
    %p38 = por %p36, %p37
    %p40 = scmp.ne.s32.totalorder %s23, %s39
    %p41 = scmp.eq.s32.totalorder %s15, 0
    %p42 = por %p40, %p41
    %s44 = sadd.s32 %s43, 1
    %p47 = scmp.eq.s32.totalorder %s9, 1
    %p48 = scmp.ne.s32.totalorder %s43, %s45
    %p49 = scmp.eq.s32.totalorder %s9, 0
    %p50 = por %p48, %p49
    %p51 = scmp.ne.s32.totalorder %s43, %s45
    %p52 = scmp.eq.s32.totalorder %s14, 1
    %p53 = por %p51, %p52
    %p54 = scmp.ne.s32.totalorder %s45, %s46
    %p55 = scmp.eq.s32.totalorder %s14, 0
    %p56 = por %p54, %p55
    %p57 = scmp.ne.s32.totalorder %s45, %s46
    %p58 = scmp.eq.s32.totalorder %s15, 1
    %p59 = por %p57, %p58
    %p61 = scmp.ne.s32.totalorder %s46, %s60
    %p62 = scmp.eq.s32.totalorder %s15, 0
    %p63 = por %p61, %p62
    %s65 = sadd.s32 %s64, 1
    %p68 = scmp.eq.s32.totalorder %s9, 1
    %p69 = scmp.ne.s32.totalorder %s64, %s66
    %p70 = scmp.eq.s32.totalorder %s9, 0
    %p71 = por %p69, %p70
    %p72 = scmp.ne.s32.totalorder %s64, %s66
    %p73 = scmp.eq.s32.totalorder %s14, 1
    %p74 = por %p72, %p73
    %p75 = scmp.ne.s32.totalorder %s66, %s67
    %p76 = scmp.eq.s32.totalorder %s14, 0
    %p77 = por %p75, %p76
    %p78 = scmp.ne.s32.totalorder %s66, %s67
    %p79 = scmp.eq.s32.totalorder %s15, 1
    %p80 = por %p78, %p79
    %p82 = scmp.ne.s32.totalorder %s67, %s81
    %p83 = scmp.eq.s32.totalorder %s15, 0
    %p84 = por %p82, %p83
    %s85 = ssub.s32 %s9, %s16
    %p86 = scmp.eq.s32.totalorder %s85, 0
    %s88 = sadd.s32 %s87, 1
    %s89 = scalar_select %p86, %s87, %s88
    %p92 = pneg %p86
    %p93 = scmp.eq.s32.totalorder %s9, 1
    %p94 = por %p92, %p93
    %p95 = scmp.ne.s32.totalorder %s87, %s90
    %p96 = scmp.eq.s32.totalorder %s9, 0
    %p97 = por %p95, %p96
    %p98 = scmp.ne.s32.totalorder %s87, %s90
    %p99 = scmp.eq.s32.totalorder %s14, 1
    %p100 = por %p98, %p99
    %p101 = scmp.ne.s32.totalorder %s90, %s91
    %p102 = scmp.eq.s32.totalorder %s14, 0
    %p103 = por %p101, %p102
    %p104 = scmp.ne.s32.totalorder %s90, %s91
    %p105 = scmp.eq.s32.totalorder %s15, 1
    %p106 = por %p104, %p105
    %p108 = scmp.ne.s32.totalorder %s91, %s107
    %p109 = scmp.eq.s32.totalorder %s15, 0
    %p110 = por %p108, %p109
    %p111 = scmp.le.s32.totalorder 1, %s9
    %p112 = scmp.lt.s32.totalorder %s9, 3
    %p113 = pnand %p111, %p112
    %p114 = pneg %p113
    // Predicated region
    $region9: #{basic_block.2} parent=5 // pred_check
      _
    $region10: #{basic_block.2} parent=5 // pred_check_branch
      %116 = sbr.rel (%p113) target = $region12
    $region11: #{basic_block.2} parent=5 // pred_region
      %s117 = ssub.s32 %s9, 1
      // Predicated region
      $region13: #{basic_block.2} parent=11 // pred_check
        %p118 = pneg %p56
      $region14: #{basic_block.2} parent=11 // pred_check_branch
        %120 = sbr.rel (%p118) target = $region16
      $region15: #{basic_block.2} parent=11 // pred_region
        _
      $region16: #{basic_block.2} parent=11 // pred_fallthru
        _
      // Predicated region
      $region17: #{basic_block.2} parent=11 // pred_check
        %p121 = pneg %p77
      $region18: #{basic_block.2} parent=11 // pred_check_branch
        %123 = sbr.rel (%p121) target = $region20
      $region19: #{basic_block.2} parent=11 // pred_region
        _
      $region20: #{basic_block.2} parent=11 // pred_fallthru
        _
    $region12: #{basic_block.2} parent=5 // pred_fallthru
      _
    %p124 = scmp.lt.s32.totalorder %s9, 2
    // Predicated region
    $region21: #{basic_block.2} parent=5 // pred_check
      %p125 = pneg %p124
    $region22: #{basic_block.2} parent=5 // pred_check_branch
      %127 = sbr.rel (%p125) target = $region24
    $region23: #{basic_block.2} parent=5 // pred_region
      // Predicated region
      $region25: #{basic_block.2} parent=23 // pred_check
        %p128 = pneg %p29
      $region26: #{basic_block.2} parent=23 // pred_check_branch
        %130 = sbr.rel (%p128) target = $region28
      $region27: #{basic_block.2} parent=23 // pred_region
        %p131 = scmp.lt.s32.totalorder %s9, 1
        %s132 = scalar_select %p131, %s9, 1
        %s133 = smul.addr %s132, 32
        %s134 = smul.addr %s133, 8
        %s135 = scalar_lea.vmem %s0, %s134
      $region28: #{basic_block.2} parent=23 // pred_fallthru
        _
    $region24: #{basic_block.2} parent=5 // pred_fallthru
      _
    %p136 = scmp.le.s32.totalorder 1, %s9
    %p137 = scmp.lt.s32.totalorder %s9, 3
    %p138 = pnand %p136, %p137
    %p139 = pneg %p138
    // Predicated region
    $region29: #{basic_block.2} parent=5 // pred_check
      _
    $region30: #{basic_block.2} parent=5 // pred_check_branch
      %141 = sbr.rel (%p138) target = $region32
    $region31: #{basic_block.2} parent=5 // pred_region
      %s142 = ssub.s32 %s9, 1
      %p143 = scmp.lt.s32.totalorder %s14, 1
      %s144 = scalar_select %p143, %s14, 1
      %s145 = smul.addr %s144, 32
      %s146 = smul.addr %s145, 8
      %s147 = scalar_lea.vmem %s0, %s146
      %p148 = pneg %p35
      %p149 = pneg %p32
      %p150 = pneg %p56
      %p151 = pneg %p53
      %p152 = pneg %p77
      %p153 = pneg %p74
      %p154 = pneg %p103
      %p155 = pneg %p100
      %p156 = scmp.lt.s32.totalorder %s14, 1
      %s157 = scalar_select %p156, %s14, 1
      %s158 = smul.addr %s157, 32
      %s159 = smul.addr %s158, 4
      %s160 = scalar_lea.vmem %s3, %s159
      %p161 = scmp.lt.s32.totalorder %s14, 1
      %s162 = scalar_select %p161, %s14, 1
      %s163 = smul.addr %s162, 32
      %s164 = smul.addr %s163, 8
      %s165 = scalar_lea.vmem %s0, %s164
      %p166 = scmp.lt.s32.totalorder %s14, 1
      %s167 = scalar_select %p166, %s14, 1
      %s168 = smul.addr %s167, 32
      %s169 = smul.addr %s168, 4
      %s170 = scalar_lea.vmem %s3, %s169
      %v172 = vld [vmem:[%s165] sm:$0xff]
      %v173 = vld [vmem:[%s165 + $0x8] sm:$0xff]
      %v174 = vld [vmem:[%s165 + $0x10] sm:$0xff]
      %v175 = vld [vmem:[%s165 + $0x18] sm:$0xff]
      %v176 = vld [vmem:[%s165 + $0x20] sm:$0xff]
      %v177 = vld [vmem:[%s165 + $0x28] sm:$0xff]
      %v178 = vld [vmem:[%s165 + $0x30] sm:$0xff]
      %v179 = vld [vmem:[%s165 + $0x38] sm:$0xff]
      %v180 = vld [vmem:[%s165 + $0x40] sm:$0xff]
      %v181 = vld [vmem:[%s165 + $0x48] sm:$0xff]
      %v182 = vld [vmem:[%s165 + $0x50] sm:$0xff]
      %v183 = vld [vmem:[%s165 + $0x58] sm:$0xff]
      %v184 = vld [vmem:[%s165 + $0x60] sm:$0xff]
      %v185 = vld [vmem:[%s165 + $0x68] sm:$0xff]
      %v186 = vld [vmem:[%s165 + $0x70] sm:$0xff]
      %v187 = vld [vmem:[%s165 + $0x78] sm:$0xff]
      %v188 = vld [vmem:[%s165 + $0x80] sm:$0xff]
      %v189 = vld [vmem:[%s165 + $0x88] sm:$0xff]
      %v190 = vld [vmem:[%s165 + $0x90] sm:$0xff]
      %v191 = vld [vmem:[%s165 + $0x98] sm:$0xff]
      %v192 = vld [vmem:[%s165 + $0xa0] sm:$0xff]
      %v193 = vld [vmem:[%s165 + $0xa8] sm:$0xff]
      %v194 = vld [vmem:[%s165 + $0xb0] sm:$0xff]
      %v195 = vld [vmem:[%s165 + $0xb8] sm:$0xff]
      %v196 = vld [vmem:[%s165 + $0xc0] sm:$0xff]
      %v197 = vld [vmem:[%s165 + $0xc8] sm:$0xff]
      %v198 = vld [vmem:[%s165 + $0xd0] sm:$0xff]
      %v199 = vld [vmem:[%s165 + $0xd8] sm:$0xff]
      %v200 = vld [vmem:[%s165 + $0xe0] sm:$0xff]
      %v201 = vld [vmem:[%s165 + $0xe8] sm:$0xff]
      %v202 = vld [vmem:[%s165 + $0xf0] sm:$0xff]
      %v203 = vld [vmem:[%s165 + $0xf8] sm:$0xff]
      %vm204 = vcmask 31744
      %205 = vst.msk [vmem:[#allocation2] sm:$0xff] %vm204, 0
      %206 = vst.msk [vmem:[#allocation2 + $0x8] sm:$0xff] %vm204, 0
      %s207 = scalar_lea.vmem [#allocation2], 272
      %208 = vst.msk [vmem:[%s207] sm:$0xff] %vm204, 0
      %209 = vst.msk [vmem:[%s207 + $0x8] sm:$0xff] %vm204, 0
      %s210 = scalar_lea.vmem [#allocation2], 16
      %vm211 = vcmask 27648
      %212 = vst.msk [vmem:[%s210] sm:$0xf] %vm211, 0
      %213 = vst.msk [vmem:[%s210 + $0x10] sm:$0xf] %vm211, 0
      %214 = vst.msk [vmem:[%s210 + $0x20] sm:$0xf] %vm211, 0
      %215 = vst.msk [vmem:[%s210 + $0x30] sm:$0xf] %vm211, 0
      %216 = vst.msk [vmem:[%s210 + $0x40] sm:$0xf] %vm211, 0
      %217 = vst.msk [vmem:[%s210 + $0x50] sm:$0xf] %vm211, 0
      %218 = vst.msk [vmem:[%s210 + $0x60] sm:$0xf] %vm211, 0
      %219 = vst.msk [vmem:[%s210 + $0x70] sm:$0xf] %vm211, 0
      %220 = vst.msk [vmem:[%s210 + $0x80] sm:$0xf] %vm211, 0
      %221 = vst.msk [vmem:[%s210 + $0x90] sm:$0xf] %vm211, 0
      %222 = vst.msk [vmem:[%s210 + $0xa0] sm:$0xf] %vm211, 0
      %223 = vst.msk [vmem:[%s210 + $0xb0] sm:$0xf] %vm211, 0
      %224 = vst.msk [vmem:[%s210 + $0xc0] sm:$0xf] %vm211, 0
      %225 = vst.msk [vmem:[%s210 + $0xd0] sm:$0xf] %vm211, 0
      %226 = vst.msk [vmem:[%s210 + $0xe0] sm:$0xf] %vm211, 0
      %227 = vst.msk [vmem:[%s210 + $0xf0] sm:$0xf] %vm211, 0
      %vm228 = vcmask 31748
      %229 = vst.msk [vmem:[%s210 + $0x8] sm:$0xf0] %vm228, 0
      %230 = vst.msk [vmem:[%s210 + $0x18] sm:$0xf0] %vm228, 0
      %231 = vst.msk [vmem:[%s210 + $0x28] sm:$0xf0] %vm228, 0
      %232 = vst.msk [vmem:[%s210 + $0x38] sm:$0xf0] %vm228, 0
      %233 = vst.msk [vmem:[%s210 + $0x48] sm:$0xf0] %vm228, 0
      %234 = vst.msk [vmem:[%s210 + $0x58] sm:$0xf0] %vm228, 0
      %235 = vst.msk [vmem:[%s210 + $0x68] sm:$0xf0] %vm228, 0
      %236 = vst.msk [vmem:[%s210 + $0x78] sm:$0xf0] %vm228, 0
      %237 = vst.msk [vmem:[%s210 + $0x88] sm:$0xf0] %vm228, 0
      %238 = vst.msk [vmem:[%s210 + $0x98] sm:$0xf0] %vm228, 0
      %239 = vst.msk [vmem:[%s210 + $0xa8] sm:$0xf0] %vm228, 0
      %240 = vst.msk [vmem:[%s210 + $0xb8] sm:$0xf0] %vm228, 0
      %241 = vst.msk [vmem:[%s210 + $0xc8] sm:$0xf0] %vm228, 0
      %242 = vst.msk [vmem:[%s210 + $0xd8] sm:$0xf0] %vm228, 0
      %243 = vst.msk [vmem:[%s210 + $0xe8] sm:$0xf0] %vm228, 0
      %244 = vst.msk [vmem:[%s210 + $0xf8] sm:$0xf0] %vm228, 0
      %v245 = vpack.c.bf16 %v173, %v172
      %v246 = vpack.c.bf16 %v175, %v174
      %v247 = vpack.c.bf16 %v177, %v176
      %v248 = vpack.c.bf16 %v179, %v178
      %v249 = vpack.c.bf16 %v181, %v180
      %v250 = vpack.c.bf16 %v183, %v182
      %v251 = vpack.c.bf16 %v185, %v184
      %v252 = vpack.c.bf16 %v187, %v186
      %v253 = vpack.c.bf16 %v189, %v188
      %v254 = vpack.c.bf16 %v191, %v190
      %v255 = vpack.c.bf16 %v193, %v192
      %v256 = vpack.c.bf16 %v195, %v194
      %v257 = vpack.c.bf16 %v197, %v196
      %v258 = vpack.c.bf16 %v199, %v198
      %v259 = vpack.c.bf16 %v201, %v200
      %v260 = vpack.c.bf16 %v203, %v202
      %v277 = vrot.slane %v245, 4
      %v278 = vrot.slane %v246, 4
      %v279 = vrot.slane %v247, 4
      %v280 = vrot.slane %v248, 4
      %v281 = vrot.slane %v249, 4
      %v282 = vrot.slane %v250, 4
      %v283 = vrot.slane %v251, 4
      %v284 = vrot.slane %v252, 4
      %v285 = vrot.slane %v253, 4
      %v286 = vrot.slane %v254, 4
      %v287 = vrot.slane %v255, 4
      %v288 = vrot.slane %v256, 4
      %v289 = vrot.slane %v257, 4
      %v290 = vrot.slane %v258, 4
      %v291 = vrot.slane %v259, 4
      %v292 = vrot.slane %v260, 4
      %309 = vst.msk [vmem:[%s210] sm:$0xf0] %vm228, %v277
      %310 = vst.msk [vmem:[%s210 + $0x8] sm:$0xf] %vm211, %v277
      %311 = vst.msk [vmem:[%s210 + $0x10] sm:$0xf0] %vm228, %v278
      %312 = vst.msk [vmem:[%s210 + $0x18] sm:$0xf] %vm211, %v278
      %313 = vst.msk [vmem:[%s210 + $0x20] sm:$0xf0] %vm228, %v279
      %314 = vst.msk [vmem:[%s210 + $0x28] sm:$0xf] %vm211, %v279
      %315 = vst.msk [vmem:[%s210 + $0x30] sm:$0xf0] %vm228, %v280
      %316 = vst.msk [vmem:[%s210 + $0x38] sm:$0xf] %vm211, %v280
      %317 = vst.msk [vmem:[%s210 + $0x40] sm:$0xf0] %vm228, %v281
      %318 = vst.msk [vmem:[%s210 + $0x48] sm:$0xf] %vm211, %v281
      %319 = vst.msk [vmem:[%s210 + $0x50] sm:$0xf0] %vm228, %v282
      %320 = vst.msk [vmem:[%s210 + $0x58] sm:$0xf] %vm211, %v282
      %321 = vst.msk [vmem:[%s210 + $0x60] sm:$0xf0] %vm228, %v283
      %322 = vst.msk [vmem:[%s210 + $0x68] sm:$0xf] %vm211, %v283
      %323 = vst.msk [vmem:[%s210 + $0x70] sm:$0xf0] %vm228, %v284
      %324 = vst.msk [vmem:[%s210 + $0x78] sm:$0xf] %vm211, %v284
      %325 = vst.msk [vmem:[%s210 + $0x80] sm:$0xf0] %vm228, %v285
      %326 = vst.msk [vmem:[%s210 + $0x88] sm:$0xf] %vm211, %v285
      %327 = vst.msk [vmem:[%s210 + $0x90] sm:$0xf0] %vm228, %v286
      %328 = vst.msk [vmem:[%s210 + $0x98] sm:$0xf] %vm211, %v286
      %329 = vst.msk [vmem:[%s210 + $0xa0] sm:$0xf0] %vm228, %v287
      %330 = vst.msk [vmem:[%s210 + $0xa8] sm:$0xf] %vm211, %v287
      %331 = vst.msk [vmem:[%s210 + $0xb0] sm:$0xf0] %vm228, %v288
      %332 = vst.msk [vmem:[%s210 + $0xb8] sm:$0xf] %vm211, %v288
      %333 = vst.msk [vmem:[%s210 + $0xc0] sm:$0xf0] %vm228, %v289
      %334 = vst.msk [vmem:[%s210 + $0xc8] sm:$0xf] %vm211, %v289
      %335 = vst.msk [vmem:[%s210 + $0xd0] sm:$0xf0] %vm228, %v290
      %336 = vst.msk [vmem:[%s210 + $0xd8] sm:$0xf] %vm211, %v290
      %337 = vst.msk [vmem:[%s210 + $0xe0] sm:$0xf0] %vm228, %v291
      %338 = vst.msk [vmem:[%s210 + $0xe8] sm:$0xf] %vm211, %v291
      %339 = vst.msk [vmem:[%s210 + $0xf0] sm:$0xf0] %vm228, %v292
      %340 = vst.msk [vmem:[%s210 + $0xf8] sm:$0xf] %vm211, %v292
      %v341 = vld [vmem:[#allocation2] sm:$0xff]
      %v342 = vld [vmem:[#allocation2 + $0x8] sm:$0xff]
      %v343 = vld [vmem:[#allocation2 + $0x10] sm:$0xff]
      %v344 = vld [vmem:[#allocation2 + $0x18] sm:$0xff]
      %v345 = vld [vmem:[#allocation2 + $0x20] sm:$0xff]
      %v346 = vld [vmem:[#allocation2 + $0x28] sm:$0xff]
      %v347 = vld [vmem:[#allocation2 + $0x30] sm:$0xff]
      %v348 = vld [vmem:[#allocation2 + $0x38] sm:$0xff]
      %v349 = vld [vmem:[#allocation2 + $0x40] sm:$0xff]
      %v350 = vld [vmem:[#allocation2 + $0x48] sm:$0xff]
      %v351 = vld [vmem:[#allocation2 + $0x50] sm:$0xff]
      %v352 = vld [vmem:[#allocation2 + $0x58] sm:$0xff]
      %v353 = vld [vmem:[#allocation2 + $0x60] sm:$0xff]
      %v354 = vld [vmem:[#allocation2 + $0x68] sm:$0xff]
      %v355 = vld [vmem:[#allocation2 + $0x70] sm:$0xff]
      %v356 = vld [vmem:[#allocation2 + $0x78] sm:$0xff]
      %v357 = vld [vmem:[#allocation2 + $0x80] sm:$0xff]
      %v358 = vld [vmem:[#allocation2 + $0x88] sm:$0xff]
      %v359 = vld [vmem:[#allocation2 + $0x90] sm:$0xff]
      %v360 = vld [vmem:[#allocation2 + $0x98] sm:$0xff]
      %v361 = vld [vmem:[#allocation2 + $0xa0] sm:$0xff]
      %v362 = vld [vmem:[#allocation2 + $0xa8] sm:$0xff]
      %v363 = vld [vmem:[#allocation2 + $0xb0] sm:$0xff]
      %v364 = vld [vmem:[#allocation2 + $0xb8] sm:$0xff]
      %v365 = vld [vmem:[#allocation2 + $0xc0] sm:$0xff]
      %v366 = vld [vmem:[#allocation2 + $0xc8] sm:$0xff]
      %v367 = vld [vmem:[#allocation2 + $0xd0] sm:$0xff]
      %v368 = vld [vmem:[#allocation2 + $0xd8] sm:$0xff]
      %v369 = vld [vmem:[#allocation2 + $0xe0] sm:$0xff]
      %v370 = vld [vmem:[#allocation2 + $0xe8] sm:$0xff]
      %v371 = vld [vmem:[#allocation2 + $0xf0] sm:$0xff]
      %v372 = vld [vmem:[#allocation2 + $0xf8] sm:$0xff]
      %vm373 = vsmask.f32 7424
      %v375 = vshrl.u32 %v341, 16
      %v377 = vshll.u32 %v341, 16
      %v379 = vrot.slane %v377, 1
      %v380 = vor.u32 %v375, %v379
      %v382 = vshll.u32 %v342, 16
      %v384 = vrot.slane %v382, 1
      %v385 = vsel %vm373, %v380, %v384
      %v386 = vshrl.u32 %v342, 16
      %v388 = vor.u32 %v386, %v384
      %v390 = vshrl.u32 %v343, 16
      %v392 = vshll.u32 %v343, 16
      %v394 = vrot.slane %v392, 1
      %v395 = vor.u32 %v390, %v394
      %v397 = vshll.u32 %v344, 16
      %v399 = vrot.slane %v397, 1
      %v400 = vsel %vm373, %v395, %v399
      %v401 = vshrl.u32 %v344, 16
      %v403 = vor.u32 %v401, %v399
      %v405 = vshrl.u32 %v345, 16
      %v407 = vshll.u32 %v345, 16
      %v409 = vrot.slane %v407, 1
      %v410 = vor.u32 %v405, %v409
      %v412 = vshll.u32 %v346, 16
      %v414 = vrot.slane %v412, 1
      %v415 = vsel %vm373, %v410, %v414
      %v416 = vshrl.u32 %v346, 16
      %v418 = vor.u32 %v416, %v414
      %v420 = vshrl.u32 %v347, 16
      %v422 = vshll.u32 %v347, 16
      %v424 = vrot.slane %v422, 1
      %v425 = vor.u32 %v420, %v424
      %v427 = vshll.u32 %v348, 16
      %v429 = vrot.slane %v427, 1
      %v430 = vsel %vm373, %v425, %v429
      %v431 = vshrl.u32 %v348, 16
      %v433 = vor.u32 %v431, %v429
      %v435 = vshrl.u32 %v349, 16
      %v437 = vshll.u32 %v349, 16
      %v439 = vrot.slane %v437, 1
      %v440 = vor.u32 %v435, %v439
      %v442 = vshll.u32 %v350, 16
      %v444 = vrot.slane %v442, 1
      %v445 = vsel %vm373, %v440, %v444
      %v446 = vshrl.u32 %v350, 16
      %v448 = vor.u32 %v446, %v444
      %v450 = vshrl.u32 %v351, 16
      %v452 = vshll.u32 %v351, 16
      %v454 = vrot.slane %v452, 1
      %v455 = vor.u32 %v450, %v454
      %v457 = vshll.u32 %v352, 16
      %v459 = vrot.slane %v457, 1
      %v460 = vsel %vm373, %v455, %v459
      %v461 = vshrl.u32 %v352, 16
      %v463 = vor.u32 %v461, %v459
      %v465 = vshrl.u32 %v353, 16
      %v467 = vshll.u32 %v353, 16
      %v469 = vrot.slane %v467, 1
      %v470 = vor.u32 %v465, %v469
      %v472 = vshll.u32 %v354, 16
      %v474 = vrot.slane %v472, 1
      %v475 = vsel %vm373, %v470, %v474
      %v476 = vshrl.u32 %v354, 16
      %v478 = vor.u32 %v476, %v474
      %v480 = vshrl.u32 %v355, 16
      %v482 = vshll.u32 %v355, 16
      %v484 = vrot.slane %v482, 1
      %v485 = vor.u32 %v480, %v484
      %v487 = vshll.u32 %v356, 16
      %v489 = vrot.slane %v487, 1
      %v490 = vsel %vm373, %v485, %v489
      %v491 = vshrl.u32 %v356, 16
      %v493 = vor.u32 %v491, %v489
      %v495 = vshrl.u32 %v357, 16
      %v497 = vshll.u32 %v357, 16
      %v499 = vrot.slane %v497, 1
      %v500 = vor.u32 %v495, %v499
      %v502 = vshll.u32 %v358, 16
      %v504 = vrot.slane %v502, 1
      %v505 = vsel %vm373, %v500, %v504
      %v506 = vshrl.u32 %v358, 16
      %v508 = vor.u32 %v506, %v504
      %v510 = vshrl.u32 %v359, 16
      %v512 = vshll.u32 %v359, 16
      %v514 = vrot.slane %v512, 1
      %v515 = vor.u32 %v510, %v514
      %v517 = vshll.u32 %v360, 16
      %v519 = vrot.slane %v517, 1
      %v520 = vsel %vm373, %v515, %v519
      %v521 = vshrl.u32 %v360, 16
      %v523 = vor.u32 %v521, %v519
      %v525 = vshrl.u32 %v361, 16
      %v527 = vshll.u32 %v361, 16
      %v529 = vrot.slane %v527, 1
      %v530 = vor.u32 %v525, %v529
      %v532 = vshll.u32 %v362, 16
      %v534 = vrot.slane %v532, 1
      %v535 = vsel %vm373, %v530, %v534
      %v536 = vshrl.u32 %v362, 16
      %v538 = vor.u32 %v536, %v534
      %v540 = vshrl.u32 %v363, 16
      %v542 = vshll.u32 %v363, 16
      %v544 = vrot.slane %v542, 1
      %v545 = vor.u32 %v540, %v544
      %v547 = vshll.u32 %v364, 16
      %v549 = vrot.slane %v547, 1
      %v550 = vsel %vm373, %v545, %v549
      %v551 = vshrl.u32 %v364, 16
      %v553 = vor.u32 %v551, %v549
      %v555 = vshrl.u32 %v365, 16
      %v557 = vshll.u32 %v365, 16
      %v559 = vrot.slane %v557, 1
      %v560 = vor.u32 %v555, %v559
      %v562 = vshll.u32 %v366, 16
      %v564 = vrot.slane %v562, 1
      %v565 = vsel %vm373, %v560, %v564
      %v566 = vshrl.u32 %v366, 16
      %v568 = vor.u32 %v566, %v564
      %v570 = vshrl.u32 %v367, 16
      %v572 = vshll.u32 %v367, 16
      %v574 = vrot.slane %v572, 1
      %v575 = vor.u32 %v570, %v574
      %v577 = vshll.u32 %v368, 16
      %v579 = vrot.slane %v577, 1
      %v580 = vsel %vm373, %v575, %v579
      %v581 = vshrl.u32 %v368, 16
      %v583 = vor.u32 %v581, %v579
      %v585 = vshrl.u32 %v369, 16
      %v587 = vshll.u32 %v369, 16
      %v589 = vrot.slane %v587, 1
      %v590 = vor.u32 %v585, %v589
      %v592 = vshll.u32 %v370, 16
      %v594 = vrot.slane %v592, 1
      %v595 = vsel %vm373, %v590, %v594
      %v596 = vshrl.u32 %v370, 16
      %v598 = vor.u32 %v596, %v594
      %v600 = vshrl.u32 %v371, 16
      %v602 = vshll.u32 %v371, 16
      %v604 = vrot.slane %v602, 1
      %v605 = vor.u32 %v600, %v604
      %v607 = vshll.u32 %v372, 16
      %v609 = vrot.slane %v607, 1
      %v610 = vsel %vm373, %v605, %v609
      %v611 = vshrl.u32 %v372, 16
      %v613 = vor.u32 %v611, %v609
      %614 = vrot.lane.b32.xlu0 %v385, 4
      %v615 = vpop.permute.xlu0 %614
      %616 = vrot.lane.b32.xlu0 %v388, 4
      %v617 = vpop.permute.xlu0 %616
      %618 = vrot.lane.b32.xlu0 %v400, 4
      %v619 = vpop.permute.xlu0 %618
      %620 = vrot.lane.b32.xlu0 %v403, 4
      %v621 = vpop.permute.xlu0 %620
      %622 = vrot.lane.b32.xlu0 %v415, 4
      %v623 = vpop.permute.xlu0 %622
      %624 = vrot.lane.b32.xlu0 %v418, 4
      %v625 = vpop.permute.xlu0 %624
      %626 = vrot.lane.b32.xlu0 %v430, 4
      %v627 = vpop.permute.xlu0 %626
      %628 = vrot.lane.b32.xlu0 %v433, 4
      %v629 = vpop.permute.xlu0 %628
      %630 = vrot.lane.b32.xlu0 %v445, 4
      %v631 = vpop.permute.xlu0 %630
      %632 = vrot.lane.b32.xlu0 %v448, 4
      %v633 = vpop.permute.xlu0 %632
      %634 = vrot.lane.b32.xlu0 %v460, 4
      %v635 = vpop.permute.xlu0 %634
      %636 = vrot.lane.b32.xlu0 %v463, 4
      %v637 = vpop.permute.xlu0 %636
      %638 = vrot.lane.b32.xlu0 %v475, 4
      %v639 = vpop.permute.xlu0 %638
      %640 = vrot.lane.b32.xlu0 %v478, 4
      %v641 = vpop.permute.xlu0 %640
      %642 = vrot.lane.b32.xlu0 %v490, 4
      %v643 = vpop.permute.xlu0 %642
      %644 = vrot.lane.b32.xlu0 %v493, 4
      %v645 = vpop.permute.xlu0 %644
      %646 = vrot.lane.b32.xlu0 %v505, 4
      %v647 = vpop.permute.xlu0 %646
      %648 = vrot.lane.b32.xlu0 %v508, 4
      %v649 = vpop.permute.xlu0 %648
      %650 = vrot.lane.b32.xlu0 %v520, 4
      %v651 = vpop.permute.xlu0 %650
      %652 = vrot.lane.b32.xlu0 %v523, 4
      %v653 = vpop.permute.xlu0 %652
      %654 = vrot.lane.b32.xlu0 %v535, 4
      %v655 = vpop.permute.xlu0 %654
      %656 = vrot.lane.b32.xlu0 %v538, 4
      %v657 = vpop.permute.xlu0 %656
      %658 = vrot.lane.b32.xlu0 %v550, 4
      %v659 = vpop.permute.xlu0 %658
      %660 = vrot.lane.b32.xlu0 %v553, 4
      %v661 = vpop.permute.xlu0 %660
      %662 = vrot.lane.b32.xlu0 %v565, 4
      %v663 = vpop.permute.xlu0 %662
      %664 = vrot.lane.b32.xlu0 %v568, 4
      %v665 = vpop.permute.xlu0 %664
      %666 = vrot.lane.b32.xlu0 %v580, 4
      %v667 = vpop.permute.xlu0 %666
      %668 = vrot.lane.b32.xlu0 %v583, 4
      %v669 = vpop.permute.xlu0 %668
      %670 = vrot.lane.b32.xlu0 %v595, 4
      %v671 = vpop.permute.xlu0 %670
      %672 = vrot.lane.b32.xlu0 %v598, 4
      %v673 = vpop.permute.xlu0 %672
      %674 = vrot.lane.b32.xlu0 %v610, 4
      %v675 = vpop.permute.xlu0 %674
      %676 = vrot.lane.b32.xlu0 %v613, 4
      %v677 = vpop.permute.xlu0 %676
      %vm710 = vcmask 1046528
      %v711 = vrot.slane %v341, 1
      %v712 = vrot.slane %v342, 1
      %v713 = vsel %vm710, %v711, %v712
      %v714 = vrot.slane %v343, 1
      %v715 = vrot.slane %v344, 1
      %v716 = vsel %vm710, %v714, %v715
      %v717 = vrot.slane %v345, 1
      %v718 = vrot.slane %v346, 1
      %v719 = vsel %vm710, %v717, %v718
      %v720 = vrot.slane %v347, 1
      %v721 = vrot.slane %v348, 1
      %v722 = vsel %vm710, %v720, %v721
      %v723 = vrot.slane %v349, 1
      %v724 = vrot.slane %v350, 1
      %v725 = vsel %vm710, %v723, %v724
      %v726 = vrot.slane %v351, 1
      %v727 = vrot.slane %v352, 1
      %v728 = vsel %vm710, %v726, %v727
      %v729 = vrot.slane %v353, 1
      %v730 = vrot.slane %v354, 1
      %v731 = vsel %vm710, %v729, %v730
      %v732 = vrot.slane %v355, 1
      %v733 = vrot.slane %v356, 1
      %v734 = vsel %vm710, %v732, %v733
      %v735 = vrot.slane %v357, 1
      %v736 = vrot.slane %v358, 1
      %v737 = vsel %vm710, %v735, %v736
      %v738 = vrot.slane %v359, 1
      %v739 = vrot.slane %v360, 1
      %v740 = vsel %vm710, %v738, %v739
      %v741 = vrot.slane %v361, 1
      %v742 = vrot.slane %v362, 1
      %v743 = vsel %vm710, %v741, %v742
      %v744 = vrot.slane %v363, 1
      %v745 = vrot.slane %v364, 1
      %v746 = vsel %vm710, %v744, %v745
      %v747 = vrot.slane %v365, 1
      %v748 = vrot.slane %v366, 1
      %v749 = vsel %vm710, %v747, %v748
      %v750 = vrot.slane %v367, 1
      %v751 = vrot.slane %v368, 1
      %v752 = vsel %vm710, %v750, %v751
      %v753 = vrot.slane %v369, 1
      %v754 = vrot.slane %v370, 1
      %v755 = vsel %vm710, %v753, %v754
      %v756 = vrot.slane %v371, 1
      %v757 = vrot.slane %v372, 1
      %v758 = vsel %vm710, %v756, %v757
      %759 = vrot.lane.b32.xlu0 %v713, 8
      %v760 = vpop.permute.xlu0 %759
      %761 = vrot.lane.b32.xlu0 %v712, 8
      %v762 = vpop.permute.xlu0 %761
      %763 = vrot.lane.b32.xlu0 %v716, 8
      %v764 = vpop.permute.xlu0 %763
      %765 = vrot.lane.b32.xlu0 %v715, 8
      %v766 = vpop.permute.xlu0 %765
      %767 = vrot.lane.b32.xlu0 %v719, 8
      %v768 = vpop.permute.xlu0 %767
      %769 = vrot.lane.b32.xlu0 %v718, 8
      %v770 = vpop.permute.xlu0 %769
      %771 = vrot.lane.b32.xlu0 %v722, 8
      %v772 = vpop.permute.xlu0 %771
      %773 = vrot.lane.b32.xlu0 %v721, 8
      %v774 = vpop.permute.xlu0 %773
      %775 = vrot.lane.b32.xlu0 %v725, 8
      %v776 = vpop.permute.xlu0 %775
      %777 = vrot.lane.b32.xlu0 %v724, 8
      %v778 = vpop.permute.xlu0 %777
      %779 = vrot.lane.b32.xlu0 %v728, 8
      %v780 = vpop.permute.xlu0 %779
      %781 = vrot.lane.b32.xlu0 %v727, 8
      %v782 = vpop.permute.xlu0 %781
      %783 = vrot.lane.b32.xlu0 %v731, 8
      %v784 = vpop.permute.xlu0 %783
      %785 = vrot.lane.b32.xlu0 %v730, 8
      %v786 = vpop.permute.xlu0 %785
      %787 = vrot.lane.b32.xlu0 %v734, 8
      %v788 = vpop.permute.xlu0 %787
      %789 = vrot.lane.b32.xlu0 %v733, 8
      %v790 = vpop.permute.xlu0 %789
      %791 = vrot.lane.b32.xlu0 %v737, 8
      %v792 = vpop.permute.xlu0 %791
      %793 = vrot.lane.b32.xlu0 %v736, 8
      %v794 = vpop.permute.xlu0 %793
      %795 = vrot.lane.b32.xlu0 %v740, 8
      %v796 = vpop.permute.xlu0 %795
      %797 = vrot.lane.b32.xlu0 %v739, 8
      %v798 = vpop.permute.xlu0 %797
      %799 = vrot.lane.b32.xlu0 %v743, 8
      %v800 = vpop.permute.xlu0 %799
      %801 = vrot.lane.b32.xlu0 %v742, 8
      %v802 = vpop.permute.xlu0 %801
      %803 = vrot.lane.b32.xlu0 %v746, 8
      %v804 = vpop.permute.xlu0 %803
      %805 = vrot.lane.b32.xlu0 %v745, 8
      %v806 = vpop.permute.xlu0 %805
      %807 = vrot.lane.b32.xlu0 %v749, 8
      %v808 = vpop.permute.xlu0 %807
      %809 = vrot.lane.b32.xlu0 %v748, 8
      %v810 = vpop.permute.xlu0 %809
      %811 = vrot.lane.b32.xlu0 %v752, 8
      %v812 = vpop.permute.xlu0 %811
      %813 = vrot.lane.b32.xlu0 %v751, 8
      %v814 = vpop.permute.xlu0 %813
      %815 = vrot.lane.b32.xlu0 %v755, 8
      %v816 = vpop.permute.xlu0 %815
      %817 = vrot.lane.b32.xlu0 %v754, 8
      %v818 = vpop.permute.xlu0 %817
      %819 = vrot.lane.b32.xlu0 %v758, 8
      %v820 = vpop.permute.xlu0 %819
      %821 = vrot.lane.b32.xlu0 %v757, 8
      %v822 = vpop.permute.xlu0 %821
      %v824 = vsel %vm204, %v341, %v615
      %v826 = vsel %vm204, %v342, %v617
      %v828 = vsel %vm204, %v343, %v619
      %v830 = vsel %vm204, %v344, %v621
      %v832 = vsel %vm204, %v345, %v623
      %v834 = vsel %vm204, %v346, %v625
      %v836 = vsel %vm204, %v347, %v627
      %v838 = vsel %vm204, %v348, %v629
      %v840 = vsel %vm204, %v349, %v631
      %v842 = vsel %vm204, %v350, %v633
      %v844 = vsel %vm204, %v351, %v635
      %v846 = vsel %vm204, %v352, %v637
      %v848 = vsel %vm204, %v353, %v639
      %v850 = vsel %vm204, %v354, %v641
      %v852 = vsel %vm204, %v355, %v643
      %v854 = vsel %vm204, %v356, %v645
      %v856 = vsel %vm204, %v357, %v647
      %v858 = vsel %vm204, %v358, %v649
      %v860 = vsel %vm204, %v359, %v651
      %v862 = vsel %vm204, %v360, %v653
      %v864 = vsel %vm204, %v361, %v655
      %v866 = vsel %vm204, %v362, %v657
      %v868 = vsel %vm204, %v363, %v659
      %v870 = vsel %vm204, %v364, %v661
      %v872 = vsel %vm204, %v365, %v663
      %v874 = vsel %vm204, %v366, %v665
      %v876 = vsel %vm204, %v367, %v667
      %v878 = vsel %vm204, %v368, %v669
      %v880 = vsel %vm204, %v369, %v671
      %v882 = vsel %vm204, %v370, %v673
      %v884 = vsel %vm204, %v371, %v675
      %v886 = vsel %vm204, %v372, %v677
      %vm887 = vcmask 64512
      %v889 = vsel %vm887, %v824, %v760
      %v891 = vsel %vm887, %v826, %v762
      %v893 = vsel %vm887, %v828, %v764
      %v895 = vsel %vm887, %v830, %v766
      %v897 = vsel %vm887, %v832, %v768
      %v899 = vsel %vm887, %v834, %v770
      %v901 = vsel %vm887, %v836, %v772
      %v903 = vsel %vm887, %v838, %v774
      %v905 = vsel %vm887, %v840, %v776
      %v907 = vsel %vm887, %v842, %v778
      %v909 = vsel %vm887, %v844, %v780
      %v911 = vsel %vm887, %v846, %v782
      %v913 = vsel %vm887, %v848, %v784
      %v915 = vsel %vm887, %v850, %v786
      %v917 = vsel %vm887, %v852, %v788
      %v919 = vsel %vm887, %v854, %v790
      %v921 = vsel %vm887, %v856, %v792
      %v923 = vsel %vm887, %v858, %v794
      %v925 = vsel %vm887, %v860, %v796
      %v927 = vsel %vm887, %v862, %v798
      %v929 = vsel %vm887, %v864, %v800
      %v931 = vsel %vm887, %v866, %v802
      %v933 = vsel %vm887, %v868, %v804
      %v935 = vsel %vm887, %v870, %v806
      %v937 = vsel %vm887, %v872, %v808
      %v939 = vsel %vm887, %v874, %v810
      %v941 = vsel %vm887, %v876, %v812
      %v943 = vsel %vm887, %v878, %v814
      %v945 = vsel %vm887, %v880, %v816
      %v947 = vsel %vm887, %v882, %v818
      %v949 = vsel %vm887, %v884, %v820
      %v951 = vsel %vm887, %v886, %v822
      %vm952 = vsmask.f32 4352
      %v953 = vshrl.u32 %v889, 16
      %v955 = vrot.slane %v953, 3
      %v956 = vshll.u32 %v889, 16
      %v958 = vrot.slane %v956, 4
      %v959 = vor.u32 %v955, %v958
      %v960 = vshrl.u32 %v891, 16
      %v962 = vrot.slane %v960, 3
      %v963 = vshll.u32 %v891, 16
      %v965 = vrot.slane %v963, 4
      %v966 = vor.u32 %v962, %v965
      %v967 = vsel %vm952, %v959, %v966
      %v968 = vshrl.u32 %v893, 16
      %v970 = vrot.slane %v968, 3
      %v971 = vshll.u32 %v893, 16
      %v973 = vrot.slane %v971, 4
      %v974 = vor.u32 %v970, %v973
      %v975 = vshrl.u32 %v895, 16
      %v977 = vrot.slane %v975, 3
      %v978 = vshll.u32 %v895, 16
      %v980 = vrot.slane %v978, 4
      %v981 = vor.u32 %v977, %v980
      %v982 = vsel %vm952, %v974, %v981
      %v983 = vshrl.u32 %v897, 16
      %v985 = vrot.slane %v983, 3
      %v986 = vshll.u32 %v897, 16
      %v988 = vrot.slane %v986, 4
      %v989 = vor.u32 %v985, %v988
      %v990 = vshrl.u32 %v899, 16
      %v992 = vrot.slane %v990, 3
      %v993 = vshll.u32 %v899, 16
      %v995 = vrot.slane %v993, 4
      %v996 = vor.u32 %v992, %v995
      %v997 = vsel %vm952, %v989, %v996
      %v998 = vshrl.u32 %v901, 16
      %v1000 = vrot.slane %v998, 3
      %v1001 = vshll.u32 %v901, 16
      %v1003 = vrot.slane %v1001, 4
      %v1004 = vor.u32 %v1000, %v1003
      %v1005 = vshrl.u32 %v903, 16
      %v1007 = vrot.slane %v1005, 3
      %v1008 = vshll.u32 %v903, 16
      %v1010 = vrot.slane %v1008, 4
      %v1011 = vor.u32 %v1007, %v1010
      %v1012 = vsel %vm952, %v1004, %v1011
      %v1013 = vshrl.u32 %v905, 16
      %v1015 = vrot.slane %v1013, 3
      %v1016 = vshll.u32 %v905, 16
      %v1018 = vrot.slane %v1016, 4
      %v1019 = vor.u32 %v1015, %v1018
      %v1020 = vshrl.u32 %v907, 16
      %v1022 = vrot.slane %v1020, 3
      %v1023 = vshll.u32 %v907, 16
      %v1025 = vrot.slane %v1023, 4
      %v1026 = vor.u32 %v1022, %v1025
      %v1027 = vsel %vm952, %v1019, %v1026
      %v1028 = vshrl.u32 %v909, 16
      %v1030 = vrot.slane %v1028, 3
      %v1031 = vshll.u32 %v909, 16
      %v1033 = vrot.slane %v1031, 4
      %v1034 = vor.u32 %v1030, %v1033
      %v1035 = vshrl.u32 %v911, 16
      %v1037 = vrot.slane %v1035, 3
      %v1038 = vshll.u32 %v911, 16
      %v1040 = vrot.slane %v1038, 4
      %v1041 = vor.u32 %v1037, %v1040
      %v1042 = vsel %vm952, %v1034, %v1041
      %v1043 = vshrl.u32 %v913, 16
      %v1045 = vrot.slane %v1043, 3
      %v1046 = vshll.u32 %v913, 16
      %v1048 = vrot.slane %v1046, 4
      %v1049 = vor.u32 %v1045, %v1048
      %v1050 = vshrl.u32 %v915, 16
      %v1052 = vrot.slane %v1050, 3
      %v1053 = vshll.u32 %v915, 16
      %v1055 = vrot.slane %v1053, 4
      %v1056 = vor.u32 %v1052, %v1055
      %v1057 = vsel %vm952, %v1049, %v1056
      %v1058 = vshrl.u32 %v917, 16
      %v1060 = vrot.slane %v1058, 3
      %v1061 = vshll.u32 %v917, 16
      %v1063 = vrot.slane %v1061, 4
      %v1064 = vor.u32 %v1060, %v1063
      %v1065 = vshrl.u32 %v919, 16
      %v1067 = vrot.slane %v1065, 3
      %v1068 = vshll.u32 %v919, 16
      %v1070 = vrot.slane %v1068, 4
      %v1071 = vor.u32 %v1067, %v1070
      %v1072 = vsel %vm952, %v1064, %v1071
      %v1073 = vshrl.u32 %v921, 16
      %v1075 = vrot.slane %v1073, 3
      %v1076 = vshll.u32 %v921, 16
      %v1078 = vrot.slane %v1076, 4
      %v1079 = vor.u32 %v1075, %v1078
      %v1080 = vshrl.u32 %v923, 16
      %v1082 = vrot.slane %v1080, 3
      %v1083 = vshll.u32 %v923, 16
      %v1085 = vrot.slane %v1083, 4
      %v1086 = vor.u32 %v1082, %v1085
      %v1087 = vsel %vm952, %v1079, %v1086
      %v1088 = vshrl.u32 %v925, 16
      %v1090 = vrot.slane %v1088, 3
      %v1091 = vshll.u32 %v925, 16
      %v1093 = vrot.slane %v1091, 4
      %v1094 = vor.u32 %v1090, %v1093
      %v1095 = vshrl.u32 %v927, 16
      %v1097 = vrot.slane %v1095, 3
      %v1098 = vshll.u32 %v927, 16
      %v1100 = vrot.slane %v1098, 4
      %v1101 = vor.u32 %v1097, %v1100
      %v1102 = vsel %vm952, %v1094, %v1101
      %v1103 = vshrl.u32 %v929, 16
      %v1105 = vrot.slane %v1103, 3
      %v1106 = vshll.u32 %v929, 16
      %v1108 = vrot.slane %v1106, 4
      %v1109 = vor.u32 %v1105, %v1108
      %v1110 = vshrl.u32 %v931, 16
      %v1112 = vrot.slane %v1110, 3
      %v1113 = vshll.u32 %v931, 16
      %v1115 = vrot.slane %v1113, 4
      %v1116 = vor.u32 %v1112, %v1115
      %v1117 = vsel %vm952, %v1109, %v1116
      %v1118 = vshrl.u32 %v933, 16
      %v1120 = vrot.slane %v1118, 3
      %v1121 = vshll.u32 %v933, 16
      %v1123 = vrot.slane %v1121, 4
      %v1124 = vor.u32 %v1120, %v1123
      %v1125 = vshrl.u32 %v935, 16
      %v1127 = vrot.slane %v1125, 3
      %v1128 = vshll.u32 %v935, 16
      %v1130 = vrot.slane %v1128, 4
      %v1131 = vor.u32 %v1127, %v1130
      %v1132 = vsel %vm952, %v1124, %v1131
      %v1133 = vshrl.u32 %v937, 16
      %v1135 = vrot.slane %v1133, 3
      %v1136 = vshll.u32 %v937, 16
      %v1138 = vrot.slane %v1136, 4
      %v1139 = vor.u32 %v1135, %v1138
      %v1140 = vshrl.u32 %v939, 16
      %v1142 = vrot.slane %v1140, 3
      %v1143 = vshll.u32 %v939, 16
      %v1145 = vrot.slane %v1143, 4
      %v1146 = vor.u32 %v1142, %v1145
      %v1147 = vsel %vm952, %v1139, %v1146
      %v1148 = vshrl.u32 %v941, 16
      %v1150 = vrot.slane %v1148, 3
      %v1151 = vshll.u32 %v941, 16
      %v1153 = vrot.slane %v1151, 4
      %v1154 = vor.u32 %v1150, %v1153
      %v1155 = vshrl.u32 %v943, 16
      %v1157 = vrot.slane %v1155, 3
      %v1158 = vshll.u32 %v943, 16
      %v1160 = vrot.slane %v1158, 4
      %v1161 = vor.u32 %v1157, %v1160
      %v1162 = vsel %vm952, %v1154, %v1161
      %v1163 = vshrl.u32 %v945, 16
      %v1165 = vrot.slane %v1163, 3
      %v1166 = vshll.u32 %v945, 16
      %v1168 = vrot.slane %v1166, 4
      %v1169 = vor.u32 %v1165, %v1168
      %v1170 = vshrl.u32 %v947, 16
      %v1172 = vrot.slane %v1170, 3
      %v1173 = vshll.u32 %v947, 16
      %v1175 = vrot.slane %v1173, 4
      %v1176 = vor.u32 %v1172, %v1175
      %v1177 = vsel %vm952, %v1169, %v1176
      %v1178 = vshrl.u32 %v949, 16
      %v1180 = vrot.slane %v1178, 3
      %v1181 = vshll.u32 %v949, 16
      %v1183 = vrot.slane %v1181, 4
      %v1184 = vor.u32 %v1180, %v1183
      %v1185 = vshrl.u32 %v951, 16
      %v1187 = vrot.slane %v1185, 3
      %v1188 = vshll.u32 %v951, 16
      %v1190 = vrot.slane %v1188, 4
      %v1191 = vor.u32 %v1187, %v1190
      %v1192 = vsel %vm952, %v1184, %v1191
      %v1193 = vld [vmem:[%s1] sm:$0xf]
      %v1194 = vld [vmem:[%s1 + $0x4] sm:$0x3]
      %v1195 = vld [vmem:[%s210] sm:$0xff]
      %v1196 = vld [vmem:[%s210 + $0x8] sm:$0xff]
      %v1197 = vld [vmem:[%s210 + $0x10] sm:$0xff]
      %v1198 = vld [vmem:[%s210 + $0x18] sm:$0xff]
      %v1199 = vld [vmem:[%s210 + $0x20] sm:$0xff]
      %v1200 = vld [vmem:[%s210 + $0x28] sm:$0xff]
      %v1201 = vld [vmem:[%s210 + $0x30] sm:$0xff]
      %v1202 = vld [vmem:[%s210 + $0x38] sm:$0xff]
      %v1203 = vld [vmem:[%s210 + $0x40] sm:$0xff]
      %v1204 = vld [vmem:[%s210 + $0x48] sm:$0xff]
      %v1205 = vld [vmem:[%s210 + $0x50] sm:$0xff]
      %v1206 = vld [vmem:[%s210 + $0x58] sm:$0xff]
      %v1207 = vld [vmem:[%s210 + $0x60] sm:$0xff]
      %v1208 = vld [vmem:[%s210 + $0x68] sm:$0xff]
      %v1209 = vld [vmem:[%s210 + $0x70] sm:$0xff]
      %v1210 = vld [vmem:[%s210 + $0x78] sm:$0xff]
      %v1211 = vld [vmem:[%s210 + $0x80] sm:$0xff]
      %v1212 = vld [vmem:[%s210 + $0x88] sm:$0xff]
      %v1213 = vld [vmem:[%s210 + $0x90] sm:$0xff]
      %v1214 = vld [vmem:[%s210 + $0x98] sm:$0xff]
      %v1215 = vld [vmem:[%s210 + $0xa0] sm:$0xff]
      %v1216 = vld [vmem:[%s210 + $0xa8] sm:$0xff]
      %v1217 = vld [vmem:[%s210 + $0xb0] sm:$0xff]
      %v1218 = vld [vmem:[%s210 + $0xb8] sm:$0xff]
      %v1219 = vld [vmem:[%s210 + $0xc0] sm:$0xff]
      %v1220 = vld [vmem:[%s210 + $0xc8] sm:$0xff]
      %v1221 = vld [vmem:[%s210 + $0xd0] sm:$0xff]
      %v1222 = vld [vmem:[%s210 + $0xd8] sm:$0xff]
      %v1223 = vld [vmem:[%s210 + $0xe0] sm:$0xff]
      %v1224 = vld [vmem:[%s210 + $0xe8] sm:$0xff]
      %v1225 = vld [vmem:[%s210 + $0xf0] sm:$0xff]
      %v1226 = vld [vmem:[%s210 + $0xf8] sm:$0xff]
      %v1228 = vshrl.u32 %v1195, 16
      %v1230 = vshll.u32 %v1195, 16
      %v1232 = vrot.slane %v1230, 1
      %v1233 = vor.u32 %v1228, %v1232
      %v1235 = vshll.u32 %v1196, 16
      %v1237 = vrot.slane %v1235, 1
      %v1238 = vsel %vm373, %v1233, %v1237
      %v1239 = vshrl.u32 %v1196, 16
      %v1241 = vor.u32 %v1239, %v1237
      %v1243 = vshrl.u32 %v1197, 16
      %v1245 = vshll.u32 %v1197, 16
      %v1247 = vrot.slane %v1245, 1
      %v1248 = vor.u32 %v1243, %v1247
      %v1250 = vshll.u32 %v1198, 16
      %v1252 = vrot.slane %v1250, 1
      %v1253 = vsel %vm373, %v1248, %v1252
      %v1254 = vshrl.u32 %v1198, 16
      %v1256 = vor.u32 %v1254, %v1252
      %v1258 = vshrl.u32 %v1199, 16
      %v1260 = vshll.u32 %v1199, 16
      %v1262 = vrot.slane %v1260, 1
      %v1263 = vor.u32 %v1258, %v1262
      %v1265 = vshll.u32 %v1200, 16
      %v1267 = vrot.slane %v1265, 1
      %v1268 = vsel %vm373, %v1263, %v1267
      %v1269 = vshrl.u32 %v1200, 16
      %v1271 = vor.u32 %v1269, %v1267
      %v1273 = vshrl.u32 %v1201, 16
      %v1275 = vshll.u32 %v1201, 16
      %v1277 = vrot.slane %v1275, 1
      %v1278 = vor.u32 %v1273, %v1277
      %v1280 = vshll.u32 %v1202, 16
      %v1282 = vrot.slane %v1280, 1
      %v1283 = vsel %vm373, %v1278, %v1282
      %v1284 = vshrl.u32 %v1202, 16
      %v1286 = vor.u32 %v1284, %v1282
      %v1288 = vshrl.u32 %v1203, 16
      %v1290 = vshll.u32 %v1203, 16
      %v1292 = vrot.slane %v1290, 1
      %v1293 = vor.u32 %v1288, %v1292
      %v1295 = vshll.u32 %v1204, 16
      %v1297 = vrot.slane %v1295, 1
      %v1298 = vsel %vm373, %v1293, %v1297
      %v1299 = vshrl.u32 %v1204, 16
      %v1301 = vor.u32 %v1299, %v1297
      %v1303 = vshrl.u32 %v1205, 16
      %v1305 = vshll.u32 %v1205, 16
      %v1307 = vrot.slane %v1305, 1
      %v1308 = vor.u32 %v1303, %v1307
      %v1310 = vshll.u32 %v1206, 16
      %v1312 = vrot.slane %v1310, 1
      %v1313 = vsel %vm373, %v1308, %v1312
      %v1314 = vshrl.u32 %v1206, 16
      %v1316 = vor.u32 %v1314, %v1312
      %v1318 = vshrl.u32 %v1207, 16
      %v1320 = vshll.u32 %v1207, 16
      %v1322 = vrot.slane %v1320, 1
      %v1323 = vor.u32 %v1318, %v1322
      %v1325 = vshll.u32 %v1208, 16
      %v1327 = vrot.slane %v1325, 1
      %v1328 = vsel %vm373, %v1323, %v1327
      %v1329 = vshrl.u32 %v1208, 16
      %v1331 = vor.u32 %v1329, %v1327
      %v1333 = vshrl.u32 %v1209, 16
      %v1335 = vshll.u32 %v1209, 16
      %v1337 = vrot.slane %v1335, 1
      %v1338 = vor.u32 %v1333, %v1337
      %v1340 = vshll.u32 %v1210, 16
      %v1342 = vrot.slane %v1340, 1
      %v1343 = vsel %vm373, %v1338, %v1342
      %v1344 = vshrl.u32 %v1210, 16
      %v1346 = vor.u32 %v1344, %v1342
      %v1348 = vshrl.u32 %v1211, 16
      %v1350 = vshll.u32 %v1211, 16
      %v1352 = vrot.slane %v1350, 1
      %v1353 = vor.u32 %v1348, %v1352
      %v1355 = vshll.u32 %v1212, 16
      %v1357 = vrot.slane %v1355, 1
      %v1358 = vsel %vm373, %v1353, %v1357
      %v1359 = vshrl.u32 %v1212, 16
      %v1361 = vor.u32 %v1359, %v1357
      %v1363 = vshrl.u32 %v1213, 16
      %v1365 = vshll.u32 %v1213, 16
      %v1367 = vrot.slane %v1365, 1
      %v1368 = vor.u32 %v1363, %v1367
      %v1370 = vshll.u32 %v1214, 16
      %v1372 = vrot.slane %v1370, 1
      %v1373 = vsel %vm373, %v1368, %v1372
      %v1374 = vshrl.u32 %v1214, 16
      %v1376 = vor.u32 %v1374, %v1372
      %v1378 = vshrl.u32 %v1215, 16
      %v1380 = vshll.u32 %v1215, 16
      %v1382 = vrot.slane %v1380, 1
      %v1383 = vor.u32 %v1378, %v1382
      %v1385 = vshll.u32 %v1216, 16
      %v1387 = vrot.slane %v1385, 1
      %v1388 = vsel %vm373, %v1383, %v1387
      %v1389 = vshrl.u32 %v1216, 16
      %v1391 = vor.u32 %v1389, %v1387
      %v1393 = vshrl.u32 %v1217, 16
      %v1395 = vshll.u32 %v1217, 16
      %v1397 = vrot.slane %v1395, 1
      %v1398 = vor.u32 %v1393, %v1397
      %v1400 = vshll.u32 %v1218, 16
      %v1402 = vrot.slane %v1400, 1
      %v1403 = vsel %vm373, %v1398, %v1402
      %v1404 = vshrl.u32 %v1218, 16
      %v1406 = vor.u32 %v1404, %v1402
      %v1408 = vshrl.u32 %v1219, 16
      %v1410 = vshll.u32 %v1219, 16
      %v1412 = vrot.slane %v1410, 1
      %v1413 = vor.u32 %v1408, %v1412
      %v1415 = vshll.u32 %v1220, 16
      %v1417 = vrot.slane %v1415, 1
      %v1418 = vsel %vm373, %v1413, %v1417
      %v1419 = vshrl.u32 %v1220, 16
      %v1421 = vor.u32 %v1419, %v1417
      %v1423 = vshrl.u32 %v1221, 16
      %v1425 = vshll.u32 %v1221, 16
      %v1427 = vrot.slane %v1425, 1
      %v1428 = vor.u32 %v1423, %v1427
      %v1430 = vshll.u32 %v1222, 16
      %v1432 = vrot.slane %v1430, 1
      %v1433 = vsel %vm373, %v1428, %v1432
      %v1434 = vshrl.u32 %v1222, 16
      %v1436 = vor.u32 %v1434, %v1432
      %v1438 = vshrl.u32 %v1223, 16
      %v1440 = vshll.u32 %v1223, 16
      %v1442 = vrot.slane %v1440, 1
      %v1443 = vor.u32 %v1438, %v1442
      %v1445 = vshll.u32 %v1224, 16
      %v1447 = vrot.slane %v1445, 1
      %v1448 = vsel %vm373, %v1443, %v1447
      %v1449 = vshrl.u32 %v1224, 16
      %v1451 = vor.u32 %v1449, %v1447
      %v1453 = vshrl.u32 %v1225, 16
      %v1455 = vshll.u32 %v1225, 16
      %v1457 = vrot.slane %v1455, 1
      %v1458 = vor.u32 %v1453, %v1457
      %v1460 = vshll.u32 %v1226, 16
      %v1462 = vrot.slane %v1460, 1
      %v1463 = vsel %vm373, %v1458, %v1462
      %v1464 = vshrl.u32 %v1226, 16
      %v1466 = vor.u32 %v1464, %v1462
      %1467 = vrot.lane.b32.xlu0 %v1238, 4
      %v1468 = vpop.permute.xlu0 %1467
      %1469 = vrot.lane.b32.xlu0 %v1241, 4
      %v1470 = vpop.permute.xlu0 %1469
      %1471 = vrot.lane.b32.xlu0 %v1253, 4
      %v1472 = vpop.permute.xlu0 %1471
      %1473 = vrot.lane.b32.xlu0 %v1256, 4
      %v1474 = vpop.permute.xlu0 %1473
      %1475 = vrot.lane.b32.xlu0 %v1268, 4
      %v1476 = vpop.permute.xlu0 %1475
      %1477 = vrot.lane.b32.xlu0 %v1271, 4
      %v1478 = vpop.permute.xlu0 %1477
      %1479 = vrot.lane.b32.xlu0 %v1283, 4
      %v1480 = vpop.permute.xlu0 %1479
      %1481 = vrot.lane.b32.xlu0 %v1286, 4
      %v1482 = vpop.permute.xlu0 %1481
      %1483 = vrot.lane.b32.xlu0 %v1298, 4
      %v1484 = vpop.permute.xlu0 %1483
      %1485 = vrot.lane.b32.xlu0 %v1301, 4
      %v1486 = vpop.permute.xlu0 %1485
      %1487 = vrot.lane.b32.xlu0 %v1313, 4
      %v1488 = vpop.permute.xlu0 %1487
      %1489 = vrot.lane.b32.xlu0 %v1316, 4
      %v1490 = vpop.permute.xlu0 %1489
      %1491 = vrot.lane.b32.xlu0 %v1328, 4
      %v1492 = vpop.permute.xlu0 %1491
      %1493 = vrot.lane.b32.xlu0 %v1331, 4
      %v1494 = vpop.permute.xlu0 %1493
      %1495 = vrot.lane.b32.xlu0 %v1343, 4
      %v1496 = vpop.permute.xlu0 %1495
      %1497 = vrot.lane.b32.xlu0 %v1346, 4
      %v1498 = vpop.permute.xlu0 %1497
      %1499 = vrot.lane.b32.xlu0 %v1358, 4
      %v1500 = vpop.permute.xlu0 %1499
      %1501 = vrot.lane.b32.xlu0 %v1361, 4
      %v1502 = vpop.permute.xlu0 %1501
      %1503 = vrot.lane.b32.xlu0 %v1373, 4
      %v1504 = vpop.permute.xlu0 %1503
      %1505 = vrot.lane.b32.xlu0 %v1376, 4
      %v1506 = vpop.permute.xlu0 %1505
      %1507 = vrot.lane.b32.xlu0 %v1388, 4
      %v1508 = vpop.permute.xlu0 %1507
      %1509 = vrot.lane.b32.xlu0 %v1391, 4
      %v1510 = vpop.permute.xlu0 %1509
      %1511 = vrot.lane.b32.xlu0 %v1403, 4
      %v1512 = vpop.permute.xlu0 %1511
      %1513 = vrot.lane.b32.xlu0 %v1406, 4
      %v1514 = vpop.permute.xlu0 %1513
      %1515 = vrot.lane.b32.xlu0 %v1418, 4
      %v1516 = vpop.permute.xlu0 %1515
      %1517 = vrot.lane.b32.xlu0 %v1421, 4
      %v1518 = vpop.permute.xlu0 %1517
      %1519 = vrot.lane.b32.xlu0 %v1433, 4
      %v1520 = vpop.permute.xlu0 %1519
      %1521 = vrot.lane.b32.xlu0 %v1436, 4
      %v1522 = vpop.permute.xlu0 %1521
      %1523 = vrot.lane.b32.xlu0 %v1448, 4
      %v1524 = vpop.permute.xlu0 %1523
      %1525 = vrot.lane.b32.xlu0 %v1451, 4
      %v1526 = vpop.permute.xlu0 %1525
      %1527 = vrot.lane.b32.xlu0 %v1463, 4
      %v1528 = vpop.permute.xlu0 %1527
      %1529 = vrot.lane.b32.xlu0 %v1466, 4
      %v1530 = vpop.permute.xlu0 %1529
      %v1563 = vrot.slane %v1195, 1
      %v1564 = vrot.slane %v1196, 1
      %v1565 = vsel %vm710, %v1563, %v1564
      %v1566 = vrot.slane %v1197, 1
      %v1567 = vrot.slane %v1198, 1
      %v1568 = vsel %vm710, %v1566, %v1567
      %v1569 = vrot.slane %v1199, 1
      %v1570 = vrot.slane %v1200, 1
      %v1571 = vsel %vm710, %v1569, %v1570
      %v1572 = vrot.slane %v1201, 1
      %v1573 = vrot.slane %v1202, 1
      %v1574 = vsel %vm710, %v1572, %v1573
      %v1575 = vrot.slane %v1203, 1
      %v1576 = vrot.slane %v1204, 1
      %v1577 = vsel %vm710, %v1575, %v1576
      %v1578 = vrot.slane %v1205, 1
      %v1579 = vrot.slane %v1206, 1
      %v1580 = vsel %vm710, %v1578, %v1579
      %v1581 = vrot.slane %v1207, 1
      %v1582 = vrot.slane %v1208, 1
      %v1583 = vsel %vm710, %v1581, %v1582
      %v1584 = vrot.slane %v1209, 1
      %v1585 = vrot.slane %v1210, 1
      %v1586 = vsel %vm710, %v1584, %v1585
      %v1587 = vrot.slane %v1211, 1
      %v1588 = vrot.slane %v1212, 1
      %v1589 = vsel %vm710, %v1587, %v1588
      %v1590 = vrot.slane %v1213, 1
      %v1591 = vrot.slane %v1214, 1
      %v1592 = vsel %vm710, %v1590, %v1591
      %v1593 = vrot.slane %v1215, 1
      %v1594 = vrot.slane %v1216, 1
      %v1595 = vsel %vm710, %v1593, %v1594
      %v1596 = vrot.slane %v1217, 1
      %v1597 = vrot.slane %v1218, 1
      %v1598 = vsel %vm710, %v1596, %v1597
      %v1599 = vrot.slane %v1219, 1
      %v1600 = vrot.slane %v1220, 1
      %v1601 = vsel %vm710, %v1599, %v1600
      %v1602 = vrot.slane %v1221, 1
      %v1603 = vrot.slane %v1222, 1
      %v1604 = vsel %vm710, %v1602, %v1603
      %v1605 = vrot.slane %v1223, 1
      %v1606 = vrot.slane %v1224, 1
      %v1607 = vsel %vm710, %v1605, %v1606
      %v1608 = vrot.slane %v1225, 1
      %v1609 = vrot.slane %v1226, 1
      %v1610 = vsel %vm710, %v1608, %v1609
      %1611 = vrot.lane.b32.xlu0 %v1565, 8
      %v1612 = vpop.permute.xlu0 %1611
      %1613 = vrot.lane.b32.xlu0 %v1564, 8
      %v1614 = vpop.permute.xlu0 %1613
      %1615 = vrot.lane.b32.xlu0 %v1568, 8
      %v1616 = vpop.permute.xlu0 %1615
      %1617 = vrot.lane.b32.xlu0 %v1567, 8
      %v1618 = vpop.permute.xlu0 %1617
      %1619 = vrot.lane.b32.xlu0 %v1571, 8
      %v1620 = vpop.permute.xlu0 %1619
      %1621 = vrot.lane.b32.xlu0 %v1570, 8
      %v1622 = vpop.permute.xlu0 %1621
      %1623 = vrot.lane.b32.xlu0 %v1574, 8
      %v1624 = vpop.permute.xlu0 %1623
      %1625 = vrot.lane.b32.xlu0 %v1573, 8
      %v1626 = vpop.permute.xlu0 %1625
      %1627 = vrot.lane.b32.xlu0 %v1577, 8
      %v1628 = vpop.permute.xlu0 %1627
      %1629 = vrot.lane.b32.xlu0 %v1576, 8
      %v1630 = vpop.permute.xlu0 %1629
      %1631 = vrot.lane.b32.xlu0 %v1580, 8
      %v1632 = vpop.permute.xlu0 %1631
      %1633 = vrot.lane.b32.xlu0 %v1579, 8
      %v1634 = vpop.permute.xlu0 %1633
      %1635 = vrot.lane.b32.xlu0 %v1583, 8
      %v1636 = vpop.permute.xlu0 %1635
      %1637 = vrot.lane.b32.xlu0 %v1582, 8
      %v1638 = vpop.permute.xlu0 %1637
      %1639 = vrot.lane.b32.xlu0 %v1586, 8
      %v1640 = vpop.permute.xlu0 %1639
      %1641 = vrot.lane.b32.xlu0 %v1585, 8
      %v1642 = vpop.permute.xlu0 %1641
      %1643 = vrot.lane.b32.xlu0 %v1589, 8
      %v1644 = vpop.permute.xlu0 %1643
      %1645 = vrot.lane.b32.xlu0 %v1588, 8
      %v1646 = vpop.permute.xlu0 %1645
      %1647 = vrot.lane.b32.xlu0 %v1592, 8
      %v1648 = vpop.permute.xlu0 %1647
      %1649 = vrot.lane.b32.xlu0 %v1591, 8
      %v1650 = vpop.permute.xlu0 %1649
      %1651 = vrot.lane.b32.xlu0 %v1595, 8
      %v1652 = vpop.permute.xlu0 %1651
      %1653 = vrot.lane.b32.xlu0 %v1594, 8
      %v1654 = vpop.permute.xlu0 %1653
      %1655 = vrot.lane.b32.xlu0 %v1598, 8
      %v1656 = vpop.permute.xlu0 %1655
      %1657 = vrot.lane.b32.xlu0 %v1597, 8
      %v1658 = vpop.permute.xlu0 %1657
      %1659 = vrot.lane.b32.xlu0 %v1601, 8
      %v1660 = vpop.permute.xlu0 %1659
      %1661 = vrot.lane.b32.xlu0 %v1600, 8
      %v1662 = vpop.permute.xlu0 %1661
      %1663 = vrot.lane.b32.xlu0 %v1604, 8
      %v1664 = vpop.permute.xlu0 %1663
      %1665 = vrot.lane.b32.xlu0 %v1603, 8
      %v1666 = vpop.permute.xlu0 %1665
      %1667 = vrot.lane.b32.xlu0 %v1607, 8
      %v1668 = vpop.permute.xlu0 %1667
      %1669 = vrot.lane.b32.xlu0 %v1606, 8
      %v1670 = vpop.permute.xlu0 %1669
      %1671 = vrot.lane.b32.xlu0 %v1610, 8
      %v1672 = vpop.permute.xlu0 %1671
      %1673 = vrot.lane.b32.xlu0 %v1609, 8
      %v1674 = vpop.permute.xlu0 %1673
      %v1676 = vsel %vm204, %v1195, %v1468
      %v1678 = vsel %vm204, %v1196, %v1470
      %v1680 = vsel %vm204, %v1197, %v1472
      %v1682 = vsel %vm204, %v1198, %v1474
      %v1684 = vsel %vm204, %v1199, %v1476
      %v1686 = vsel %vm204, %v1200, %v1478
      %v1688 = vsel %vm204, %v1201, %v1480
      %v1690 = vsel %vm204, %v1202, %v1482
      %v1692 = vsel %vm204, %v1203, %v1484
      %v1694 = vsel %vm204, %v1204, %v1486
      %v1696 = vsel %vm204, %v1205, %v1488
      %v1698 = vsel %vm204, %v1206, %v1490
      %v1700 = vsel %vm204, %v1207, %v1492
      %v1702 = vsel %vm204, %v1208, %v1494
      %v1704 = vsel %vm204, %v1209, %v1496
      %v1706 = vsel %vm204, %v1210, %v1498
      %v1708 = vsel %vm204, %v1211, %v1500
      %v1710 = vsel %vm204, %v1212, %v1502
      %v1712 = vsel %vm204, %v1213, %v1504
      %v1714 = vsel %vm204, %v1214, %v1506
      %v1716 = vsel %vm204, %v1215, %v1508
      %v1718 = vsel %vm204, %v1216, %v1510
      %v1720 = vsel %vm204, %v1217, %v1512
      %v1722 = vsel %vm204, %v1218, %v1514
      %v1724 = vsel %vm204, %v1219, %v1516
      %v1726 = vsel %vm204, %v1220, %v1518
      %v1728 = vsel %vm204, %v1221, %v1520
      %v1730 = vsel %vm204, %v1222, %v1522
      %v1732 = vsel %vm204, %v1223, %v1524
      %v1734 = vsel %vm204, %v1224, %v1526
      %v1736 = vsel %vm204, %v1225, %v1528
      %v1738 = vsel %vm204, %v1226, %v1530
      %v1740 = vsel %vm887, %v1676, %v1612
      %v1742 = vsel %vm887, %v1678, %v1614
      %v1744 = vsel %vm887, %v1680, %v1616
      %v1746 = vsel %vm887, %v1682, %v1618
      %v1748 = vsel %vm887, %v1684, %v1620
      %v1750 = vsel %vm887, %v1686, %v1622
      %v1752 = vsel %vm887, %v1688, %v1624
      %v1754 = vsel %vm887, %v1690, %v1626
      %v1756 = vsel %vm887, %v1692, %v1628
      %v1758 = vsel %vm887, %v1694, %v1630
      %v1760 = vsel %vm887, %v1696, %v1632
      %v1762 = vsel %vm887, %v1698, %v1634
      %v1764 = vsel %vm887, %v1700, %v1636
      %v1766 = vsel %vm887, %v1702, %v1638
      %v1768 = vsel %vm887, %v1704, %v1640
      %v1770 = vsel %vm887, %v1706, %v1642
      %v1772 = vsel %vm887, %v1708, %v1644
      %v1774 = vsel %vm887, %v1710, %v1646
      %v1776 = vsel %vm887, %v1712, %v1648
      %v1778 = vsel %vm887, %v1714, %v1650
      %v1780 = vsel %vm887, %v1716, %v1652
      %v1782 = vsel %vm887, %v1718, %v1654
      %v1784 = vsel %vm887, %v1720, %v1656
      %v1786 = vsel %vm887, %v1722, %v1658
      %v1788 = vsel %vm887, %v1724, %v1660
      %v1790 = vsel %vm887, %v1726, %v1662
      %v1792 = vsel %vm887, %v1728, %v1664
      %v1794 = vsel %vm887, %v1730, %v1666
      %v1796 = vsel %vm887, %v1732, %v1668
      %v1798 = vsel %vm887, %v1734, %v1670
      %v1800 = vsel %vm887, %v1736, %v1672
      %v1802 = vsel %vm887, %v1738, %v1674
      %v1803 = vshrl.u32 %v1740, 16
      %v1805 = vrot.slane %v1803, 3
      %v1806 = vshll.u32 %v1740, 16
      %v1808 = vrot.slane %v1806, 4
      %v1809 = vor.u32 %v1805, %v1808
      %v1810 = vshrl.u32 %v1742, 16
      %v1812 = vrot.slane %v1810, 3
      %v1813 = vshll.u32 %v1742, 16
      %v1815 = vrot.slane %v1813, 4
      %v1816 = vor.u32 %v1812, %v1815
      %v1817 = vsel %vm952, %v1809, %v1816
      %v1818 = vshrl.u32 %v1744, 16
      %v1820 = vrot.slane %v1818, 3
      %v1821 = vshll.u32 %v1744, 16
      %v1823 = vrot.slane %v1821, 4
      %v1824 = vor.u32 %v1820, %v1823
      %v1825 = vshrl.u32 %v1746, 16
      %v1827 = vrot.slane %v1825, 3
      %v1828 = vshll.u32 %v1746, 16
      %v1830 = vrot.slane %v1828, 4
      %v1831 = vor.u32 %v1827, %v1830
      %v1832 = vsel %vm952, %v1824, %v1831
      %v1833 = vshrl.u32 %v1748, 16
      %v1835 = vrot.slane %v1833, 3
      %v1836 = vshll.u32 %v1748, 16
      %v1838 = vrot.slane %v1836, 4
      %v1839 = vor.u32 %v1835, %v1838
      %v1840 = vshrl.u32 %v1750, 16
      %v1842 = vrot.slane %v1840, 3
      %v1843 = vshll.u32 %v1750, 16
      %v1845 = vrot.slane %v1843, 4
      %v1846 = vor.u32 %v1842, %v1845
      %v1847 = vsel %vm952, %v1839, %v1846
      %v1848 = vshrl.u32 %v1752, 16
      %v1850 = vrot.slane %v1848, 3
      %v1851 = vshll.u32 %v1752, 16
      %v1853 = vrot.slane %v1851, 4
      %v1854 = vor.u32 %v1850, %v1853
      %v1855 = vshrl.u32 %v1754, 16
      %v1857 = vrot.slane %v1855, 3
      %v1858 = vshll.u32 %v1754, 16
      %v1860 = vrot.slane %v1858, 4
      %v1861 = vor.u32 %v1857, %v1860
      %v1862 = vsel %vm952, %v1854, %v1861
      %v1863 = vshrl.u32 %v1756, 16
      %v1865 = vrot.slane %v1863, 3
      %v1866 = vshll.u32 %v1756, 16
      %v1868 = vrot.slane %v1866, 4
      %v1869 = vor.u32 %v1865, %v1868
      %v1870 = vshrl.u32 %v1758, 16
      %v1872 = vrot.slane %v1870, 3
      %v1873 = vshll.u32 %v1758, 16
      %v1875 = vrot.slane %v1873, 4
      %v1876 = vor.u32 %v1872, %v1875
      %v1877 = vsel %vm952, %v1869, %v1876
      %v1878 = vshrl.u32 %v1760, 16
      %v1880 = vrot.slane %v1878, 3
      %v1881 = vshll.u32 %v1760, 16
      %v1883 = vrot.slane %v1881, 4
      %v1884 = vor.u32 %v1880, %v1883
      %v1885 = vshrl.u32 %v1762, 16
      %v1887 = vrot.slane %v1885, 3
      %v1888 = vshll.u32 %v1762, 16
      %v1890 = vrot.slane %v1888, 4
      %v1891 = vor.u32 %v1887, %v1890
      %v1892 = vsel %vm952, %v1884, %v1891
      %v1893 = vshrl.u32 %v1764, 16
      %v1895 = vrot.slane %v1893, 3
      %v1896 = vshll.u32 %v1764, 16
      %v1898 = vrot.slane %v1896, 4
      %v1899 = vor.u32 %v1895, %v1898
      %v1900 = vshrl.u32 %v1766, 16
      %v1902 = vrot.slane %v1900, 3
      %v1903 = vshll.u32 %v1766, 16
      %v1905 = vrot.slane %v1903, 4
      %v1906 = vor.u32 %v1902, %v1905
      %v1907 = vsel %vm952, %v1899, %v1906
      %v1908 = vshrl.u32 %v1768, 16
      %v1910 = vrot.slane %v1908, 3
      %v1911 = vshll.u32 %v1768, 16
      %v1913 = vrot.slane %v1911, 4
      %v1914 = vor.u32 %v1910, %v1913
      %v1915 = vshrl.u32 %v1770, 16
      %v1917 = vrot.slane %v1915, 3
      %v1918 = vshll.u32 %v1770, 16
      %v1920 = vrot.slane %v1918, 4
      %v1921 = vor.u32 %v1917, %v1920
      %v1922 = vsel %vm952, %v1914, %v1921
      %v1923 = vshrl.u32 %v1772, 16
      %v1925 = vrot.slane %v1923, 3
      %v1926 = vshll.u32 %v1772, 16
      %v1928 = vrot.slane %v1926, 4
      %v1929 = vor.u32 %v1925, %v1928
      %v1930 = vshrl.u32 %v1774, 16
      %v1932 = vrot.slane %v1930, 3
      %v1933 = vshll.u32 %v1774, 16
      %v1935 = vrot.slane %v1933, 4
      %v1936 = vor.u32 %v1932, %v1935
      %v1937 = vsel %vm952, %v1929, %v1936
      %v1938 = vshrl.u32 %v1776, 16
      %v1940 = vrot.slane %v1938, 3
      %v1941 = vshll.u32 %v1776, 16
      %v1943 = vrot.slane %v1941, 4
      %v1944 = vor.u32 %v1940, %v1943
      %v1945 = vshrl.u32 %v1778, 16
      %v1947 = vrot.slane %v1945, 3
      %v1948 = vshll.u32 %v1778, 16
      %v1950 = vrot.slane %v1948, 4
      %v1951 = vor.u32 %v1947, %v1950
      %v1952 = vsel %vm952, %v1944, %v1951
      %v1953 = vshrl.u32 %v1780, 16
      %v1955 = vrot.slane %v1953, 3
      %v1956 = vshll.u32 %v1780, 16
      %v1958 = vrot.slane %v1956, 4
      %v1959 = vor.u32 %v1955, %v1958
      %v1960 = vshrl.u32 %v1782, 16
      %v1962 = vrot.slane %v1960, 3
      %v1963 = vshll.u32 %v1782, 16
      %v1965 = vrot.slane %v1963, 4
      %v1966 = vor.u32 %v1962, %v1965
      %v1967 = vsel %vm952, %v1959, %v1966
      %v1968 = vshrl.u32 %v1784, 16
      %v1970 = vrot.slane %v1968, 3
      %v1971 = vshll.u32 %v1784, 16
      %v1973 = vrot.slane %v1971, 4
      %v1974 = vor.u32 %v1970, %v1973
      %v1975 = vshrl.u32 %v1786, 16
      %v1977 = vrot.slane %v1975, 3
      %v1978 = vshll.u32 %v1786, 16
      %v1980 = vrot.slane %v1978, 4
      %v1981 = vor.u32 %v1977, %v1980
      %v1982 = vsel %vm952, %v1974, %v1981
      %v1983 = vshrl.u32 %v1788, 16
      %v1985 = vrot.slane %v1983, 3
      %v1986 = vshll.u32 %v1788, 16
      %v1988 = vrot.slane %v1986, 4
      %v1989 = vor.u32 %v1985, %v1988
      %v1990 = vshrl.u32 %v1790, 16
      %v1992 = vrot.slane %v1990, 3
      %v1993 = vshll.u32 %v1790, 16
      %v1995 = vrot.slane %v1993, 4
      %v1996 = vor.u32 %v1992, %v1995
      %v1997 = vsel %vm952, %v1989, %v1996
      %v1998 = vshrl.u32 %v1792, 16
      %v2000 = vrot.slane %v1998, 3
      %v2001 = vshll.u32 %v1792, 16
      %v2003 = vrot.slane %v2001, 4
      %v2004 = vor.u32 %v2000, %v2003
      %v2005 = vshrl.u32 %v1794, 16
      %v2007 = vrot.slane %v2005, 3
      %v2008 = vshll.u32 %v1794, 16
      %v2010 = vrot.slane %v2008, 4
      %v2011 = vor.u32 %v2007, %v2010
      %v2012 = vsel %vm952, %v2004, %v2011
      %v2013 = vshrl.u32 %v1796, 16
      %v2015 = vrot.slane %v2013, 3
      %v2016 = vshll.u32 %v1796, 16
      %v2018 = vrot.slane %v2016, 4
      %v2019 = vor.u32 %v2015, %v2018
      %v2020 = vshrl.u32 %v1798, 16
      %v2022 = vrot.slane %v2020, 3
      %v2023 = vshll.u32 %v1798, 16
      %v2025 = vrot.slane %v2023, 4
      %v2026 = vor.u32 %v2022, %v2025
      %v2027 = vsel %vm952, %v2019, %v2026
      %v2028 = vshrl.u32 %v1800, 16
      %v2030 = vrot.slane %v2028, 3
      %v2031 = vshll.u32 %v1800, 16
      %v2033 = vrot.slane %v2031, 4
      %v2034 = vor.u32 %v2030, %v2033
      %v2035 = vshrl.u32 %v1802, 16
      %v2037 = vrot.slane %v2035, 3
      %v2038 = vshll.u32 %v1802, 16
      %v2040 = vrot.slane %v2038, 4
      %v2041 = vor.u32 %v2037, %v2040
      %v2042 = vsel %vm952, %v2034, %v2041
      %s2043 = scalar_lea.vmem %s1, 8
      %v2044 = vld [vmem:[%s2043] sm:$0xf]
      %v2045 = vld [vmem:[%s2043 + $0x4] sm:$0x3]
      %v2048 = vunpack.c.l.b16 %v2044
      %v2049 = vunpack.c.l.b16 %v2045
      %v2050 = vpack.c.b16 %v2049, %v2048
      %vm2051 = vcmask 97280
      %v2053 = vsel %vm2051, %v1817, 0
      %v2056 = vsel %vm2051, %v1832, 0
      %v2059 = vsel %vm2051, %v1847, 0
      %v2062 = vsel %vm2051, %v1862, 0
      %v2065 = vsel %vm2051, %v1877, 0
      %v2068 = vsel %vm2051, %v1892, 0
      %v2071 = vsel %vm2051, %v1907, 0
      %v2074 = vsel %vm2051, %v1922, 0
      %v2077 = vsel %vm2051, %v1937, 0
      %v2080 = vsel %vm2051, %v1952, 0
      %v2083 = vsel %vm2051, %v1967, 0
      %v2086 = vsel %vm2051, %v1982, 0
      %v2089 = vsel %vm2051, %v1997, 0
      %v2092 = vsel %vm2051, %v2012, 0
      %v2095 = vsel %vm2051, %v2027, 0
      %v2098 = vsel %vm2051, %v2042, 0
      %vm2100 = vcmask 1045504
      %v2102 = vsel %vm2100, %v2050, 0
      %2104 = vmatprep.subr.bf16.mxu0 0
      %2105 = vmatpush1.bf16.msra.mxu0 %v2102
      %2106 = vmatprep.subr.bf16.mxu0 0
      %2107 = vmatpush1.bf16.msra.mxu0 0
      %2108 = vmatprep.subr.bf16.mxu0 0
      %2109 = vmatpush1.bf16.msra.mxu0 0
      %2110 = vmatprep.subr.bf16.mxu0 0
      %2111 = vmatpush1.bf16.msra.mxu0 0
      %2112 = vmatprep.subr.bf16.mxu0 0
      %2113 = vmatpush1.bf16.msra.mxu0 0
      %2114 = vmatprep.subr.bf16.mxu0 0
      %2115 = vmatpush1.bf16.msra.mxu0 0
      %2116 = vmatprep.subr.bf16.mxu0 0
      %2117 = vmatpush1.bf16.msra.mxu0 0
      %2118 = vmatprep.subr.bf16.mxu0 0
      %2119 = vmatpush1.bf16.msra.mxu0 0
      %2120 = vmatprep.subr.bf16.mxu0 0
      %2121 = vmatpush1.bf16.msra.mxu0 0
      %2122 = vmatprep.subr.bf16.mxu0 0
      %2123 = vmatpush1.bf16.msra.mxu0 0
      %2124 = vmatprep.subr.bf16.mxu0 0
      %2125 = vmatpush1.bf16.msra.mxu0 0
      %2126 = vmatprep.subr.bf16.mxu0 0
      %2127 = vmatpush1.bf16.msra.mxu0 0
      %2128 = vmatprep.subr.bf16.mxu0 0
      %2129 = vmatpush1.bf16.msra.mxu0 0
      %2130 = vmatprep.subr.bf16.mxu0 0
      %2131 = vmatpush1.bf16.msra.mxu0 0
      %2132 = vmatprep.subr.bf16.mxu0 0
      %2133 = vmatpush1.bf16.msra.mxu0 0
      %2134 = vmatprep.subr.bf16.mxu0 0
      %2135 = vmatpush1.bf16.msra.mxu0 0
      %2136 = vmatprep.mubr.bf16.mxu0 0
      %2137 = vmatmul.mubr.bf16.gmra.mrb[0].mxu0 %v2053
      %v2138 = vpop.f32.mrb[0].mxu0
      %v2139 = vadd.f32 0.0, %v2138
      %v2140 = vpop.f32.mrb[0].mxu0
      %v2141 = vpop.f32.mrb[0].mxu0
      %v2142 = vadd.f32 0.0, %v2141
      %v2143 = vpop.f32.mrb[0].mxu0
      %2144 = vmatprep.mubr.bf16.mxu0 0
      %2145 = vmatmul.mubr.bf16.gmra.mrb[0].mxu0 %v2056
      %v2146 = vpop.f32.mrb[0].mxu0
      %v2147 = vadd.f32 0.0, %v2146
      %v2148 = vpop.f32.mrb[0].mxu0
      %v2149 = vpop.f32.mrb[0].mxu0
      %v2150 = vadd.f32 0.0, %v2149
      %v2151 = vpop.f32.mrb[0].mxu0
      %2152 = vmatprep.mubr.bf16.mxu0 0
      %2153 = vmatmul.mubr.bf16.gmra.mrb[0].mxu0 %v2059
      %v2154 = vpop.f32.mrb[0].mxu0
      %v2155 = vadd.f32 0.0, %v2154
      %v2156 = vpop.f32.mrb[0].mxu0
      %v2157 = vpop.f32.mrb[0].mxu0
      %v2158 = vadd.f32 0.0, %v2157
      %v2159 = vpop.f32.mrb[0].mxu0
      %2160 = vmatprep.mubr.bf16.mxu0 0
      %2161 = vmatmul.mubr.bf16.gmra.mrb[0].mxu0 %v2062
      %v2162 = vpop.f32.mrb[0].mxu0
      %v2163 = vadd.f32 0.0, %v2162
      %v2164 = vpop.f32.mrb[0].mxu0
      %v2165 = vpop.f32.mrb[0].mxu0
      %v2166 = vadd.f32 0.0, %v2165
      %v2167 = vpop.f32.mrb[0].mxu0
      %2168 = vmatprep.mubr.bf16.mxu0 0
      %2169 = vmatmul.mubr.bf16.gmra.mrb[0].mxu0 %v2065
      %v2170 = vpop.f32.mrb[0].mxu0
      %v2171 = vadd.f32 0.0, %v2170
      %v2172 = vpop.f32.mrb[0].mxu0
      %v2173 = vpop.f32.mrb[0].mxu0
      %v2174 = vadd.f32 0.0, %v2173
      %v2175 = vpop.f32.mrb[0].mxu0
      %2176 = vmatprep.mubr.bf16.mxu0 0
      %2177 = vmatmul.mubr.bf16.gmra.mrb[0].mxu0 %v2068
      %v2178 = vpop.f32.mrb[0].mxu0
      %v2179 = vadd.f32 0.0, %v2178
      %v2180 = vpop.f32.mrb[0].mxu0
      %v2181 = vpop.f32.mrb[0].mxu0
      %v2182 = vadd.f32 0.0, %v2181
      %v2183 = vpop.f32.mrb[0].mxu0
      %2184 = vmatprep.mubr.bf16.mxu0 0
      %2185 = vmatmul.mubr.bf16.gmra.mrb[0].mxu0 %v2071
      %v2186 = vpop.f32.mrb[0].mxu0
      %v2187 = vadd.f32 0.0, %v2186
      %v2188 = vpop.f32.mrb[0].mxu0
      %v2189 = vpop.f32.mrb[0].mxu0
      %v2190 = vadd.f32 0.0, %v2189
      %v2191 = vpop.f32.mrb[0].mxu0
      %2192 = vmatprep.mubr.bf16.mxu0 0
      %2193 = vmatmul.mubr.bf16.gmra.mrb[0].mxu0 %v2074
      %v2194 = vpop.f32.mrb[0].mxu0
      %v2195 = vadd.f32 0.0, %v2194
      %v2196 = vpop.f32.mrb[0].mxu0
      %v2197 = vpop.f32.mrb[0].mxu0
      %v2198 = vadd.f32 0.0, %v2197
      %v2199 = vpop.f32.mrb[0].mxu0
      %2200 = vmatprep.mubr.bf16.mxu0 0
      %2201 = vmatmul.mubr.bf16.gmra.mrb[0].mxu0 %v2077
      %v2202 = vpop.f32.mrb[0].mxu0
      %v2203 = vadd.f32 0.0, %v2202
      %v2204 = vpop.f32.mrb[0].mxu0
      %v2205 = vpop.f32.mrb[0].mxu0
      %v2206 = vadd.f32 0.0, %v2205
      %v2207 = vpop.f32.mrb[0].mxu0
      %2208 = vmatprep.mubr.bf16.mxu0 0
      %2209 = vmatmul.mubr.bf16.gmra.mrb[0].mxu0 %v2080
      %v2210 = vpop.f32.mrb[0].mxu0
      %v2211 = vadd.f32 0.0, %v2210
      %v2212 = vpop.f32.mrb[0].mxu0
      %v2213 = vpop.f32.mrb[0].mxu0
      %v2214 = vadd.f32 0.0, %v2213
      %v2215 = vpop.f32.mrb[0].mxu0
      %2216 = vmatprep.mubr.bf16.mxu0 0
      %2217 = vmatmul.mubr.bf16.gmra.mrb[0].mxu0 %v2083
      %v2218 = vpop.f32.mrb[0].mxu0
      %v2219 = vadd.f32 0.0, %v2218
      %v2220 = vpop.f32.mrb[0].mxu0
      %v2221 = vpop.f32.mrb[0].mxu0
      %v2222 = vadd.f32 0.0, %v2221
      %v2223 = vpop.f32.mrb[0].mxu0
      %2224 = vmatprep.mubr.bf16.mxu0 0
      %2225 = vmatmul.mubr.bf16.gmra.mrb[0].mxu0 %v2086
      %v2226 = vpop.f32.mrb[0].mxu0
      %v2227 = vadd.f32 0.0, %v2226
      %v2228 = vpop.f32.mrb[0].mxu0
      %v2229 = vpop.f32.mrb[0].mxu0
      %v2230 = vadd.f32 0.0, %v2229
      %v2231 = vpop.f32.mrb[0].mxu0
      %2232 = vmatprep.mubr.bf16.mxu0 0
      %2233 = vmatmul.mubr.bf16.gmra.mrb[0].mxu0 %v2089
      %v2234 = vpop.f32.mrb[0].mxu0
      %v2235 = vadd.f32 0.0, %v2234
      %v2236 = vpop.f32.mrb[0].mxu0
      %v2237 = vpop.f32.mrb[0].mxu0
      %v2238 = vadd.f32 0.0, %v2237
      %v2239 = vpop.f32.mrb[0].mxu0
      %2240 = vmatprep.mubr.bf16.mxu0 0
      %2241 = vmatmul.mubr.bf16.gmra.mrb[0].mxu0 %v2092
      %v2242 = vpop.f32.mrb[0].mxu0
      %v2243 = vadd.f32 0.0, %v2242
      %v2244 = vpop.f32.mrb[0].mxu0
      %v2245 = vpop.f32.mrb[0].mxu0
      %v2246 = vadd.f32 0.0, %v2245
      %v2247 = vpop.f32.mrb[0].mxu0
      %2248 = vmatprep.mubr.bf16.mxu0 0
      %2249 = vmatmul.mubr.bf16.gmra.mrb[0].mxu0 %v2095
      %v2250 = vpop.f32.mrb[0].mxu0
      %v2251 = vadd.f32 0.0, %v2250
      %v2252 = vpop.f32.mrb[0].mxu0
      %v2253 = vpop.f32.mrb[0].mxu0
      %v2254 = vadd.f32 0.0, %v2253
      %v2255 = vpop.f32.mrb[0].mxu0
      %2256 = vmatprep.mubr.bf16.mxu0 0
      %2257 = vmatmul.mubr.bf16.gmra.mrb[0].mxu0 %v2098
      %v2258 = vpop.f32.mrb[0].mxu0
      %v2259 = vadd.f32 0.0, %v2258
      %v2260 = vpop.f32.mrb[0].mxu0
      %v2261 = vpop.f32.mrb[0].mxu0
      %v2262 = vadd.f32 0.0, %v2261
      %v2263 = vpop.f32.mrb[0].mxu0
      %2264 = vdwg.mxu0
      %v2267 = vunpack.c.l.b16 %v1193
      %v2268 = vunpack.c.l.b16 %v1194
      %v2269 = vpack.c.b16 %v2268, %v2267
      %v2271 = vsel %vm2051, %v967, 0
      %v2274 = vsel %vm2051, %v982, 0
      %v2277 = vsel %vm2051, %v997, 0
      %v2280 = vsel %vm2051, %v1012, 0
      %v2283 = vsel %vm2051, %v1027, 0
      %v2286 = vsel %vm2051, %v1042, 0
      %v2289 = vsel %vm2051, %v1057, 0
      %v2292 = vsel %vm2051, %v1072, 0
      %v2295 = vsel %vm2051, %v1087, 0
      %v2298 = vsel %vm2051, %v1102, 0
      %v2301 = vsel %vm2051, %v1117, 0
      %v2304 = vsel %vm2051, %v1132, 0
      %v2307 = vsel %vm2051, %v1147, 0
      %v2310 = vsel %vm2051, %v1162, 0
      %v2313 = vsel %vm2051, %v1177, 0
      %v2316 = vsel %vm2051, %v1192, 0
      %v2319 = vsel %vm2100, %v2269, 0
      %2321 = vmatprep.subr.bf16.mxu0 0
      %2322 = vmatpush1.bf16.msra.mxu0 %v2319
      %2323 = vmatprep.subr.bf16.mxu0 0
      %2324 = vmatpush1.bf16.msra.mxu0 0
      %2325 = vmatprep.subr.bf16.mxu0 0
      %2326 = vmatpush1.bf16.msra.mxu0 0
      %2327 = vmatprep.subr.bf16.mxu0 0
      %2328 = vmatpush1.bf16.msra.mxu0 0
      %2329 = vmatprep.subr.bf16.mxu0 0
      %2330 = vmatpush1.bf16.msra.mxu0 0
      %2331 = vmatprep.subr.bf16.mxu0 0
      %2332 = vmatpush1.bf16.msra.mxu0 0
      %2333 = vmatprep.subr.bf16.mxu0 0
      %2334 = vmatpush1.bf16.msra.mxu0 0
      %2335 = vmatprep.subr.bf16.mxu0 0
      %2336 = vmatpush1.bf16.msra.mxu0 0
      %2337 = vmatprep.subr.bf16.mxu0 0
      %2338 = vmatpush1.bf16.msra.mxu0 0
      %2339 = vmatprep.subr.bf16.mxu0 0
      %2340 = vmatpush1.bf16.msra.mxu0 0
      %2341 = vmatprep.subr.bf16.mxu0 0
      %2342 = vmatpush1.bf16.msra.mxu0 0
      %2343 = vmatprep.subr.bf16.mxu0 0
      %2344 = vmatpush1.bf16.msra.mxu0 0
      %2345 = vmatprep.subr.bf16.mxu0 0
      %2346 = vmatpush1.bf16.msra.mxu0 0
      %2347 = vmatprep.subr.bf16.mxu0 0
      %2348 = vmatpush1.bf16.msra.mxu0 0
      %2349 = vmatprep.subr.bf16.mxu0 0
      %2350 = vmatpush1.bf16.msra.mxu0 0
      %2351 = vmatprep.subr.bf16.mxu0 0
      %2352 = vmatpush1.bf16.msra.mxu0 0
      %2353 = vmatprep.mubr.bf16.mxu0 0
      %2354 = vmatmul.mubr.bf16.gmra.mrb[0].mxu0 %v2271
      %v2355 = vpop.f32.mrb[0].mxu0
      %v2356 = vadd.f32 %v2139, %v2355
      %v2357 = vpop.f32.mrb[0].mxu0
      %v2358 = vpop.f32.mrb[0].mxu0
      %v2359 = vadd.f32 %v2142, %v2358
      %v2360 = vpop.f32.mrb[0].mxu0
      %2361 = vmatprep.mubr.bf16.mxu0 0
      %2362 = vmatmul.mubr.bf16.gmra.mrb[0].mxu0 %v2274
      %v2363 = vpop.f32.mrb[0].mxu0
      %v2364 = vadd.f32 %v2147, %v2363
      %v2365 = vpop.f32.mrb[0].mxu0
      %v2366 = vpop.f32.mrb[0].mxu0
      %v2367 = vadd.f32 %v2150, %v2366
      %v2368 = vpop.f32.mrb[0].mxu0
      %2369 = vmatprep.mubr.bf16.mxu0 0
      %2370 = vmatmul.mubr.bf16.gmra.mrb[0].mxu0 %v2277
      %v2371 = vpop.f32.mrb[0].mxu0
      %v2372 = vadd.f32 %v2155, %v2371
      %v2373 = vpop.f32.mrb[0].mxu0
      %v2374 = vpop.f32.mrb[0].mxu0
      %v2375 = vadd.f32 %v2158, %v2374
      %v2376 = vpop.f32.mrb[0].mxu0
      %2377 = vmatprep.mubr.bf16.mxu0 0
      %2378 = vmatmul.mubr.bf16.gmra.mrb[0].mxu0 %v2280
      %v2379 = vpop.f32.mrb[0].mxu0
      %v2380 = vadd.f32 %v2163, %v2379
      %v2381 = vpop.f32.mrb[0].mxu0
      %v2382 = vpop.f32.mrb[0].mxu0
      %v2383 = vadd.f32 %v2166, %v2382
      %v2384 = vpop.f32.mrb[0].mxu0
      %2385 = vmatprep.mubr.bf16.mxu0 0
      %2386 = vmatmul.mubr.bf16.gmra.mrb[0].mxu0 %v2283
      %v2387 = vpop.f32.mrb[0].mxu0
      %v2388 = vadd.f32 %v2171, %v2387
      %v2389 = vpop.f32.mrb[0].mxu0
      %v2390 = vpop.f32.mrb[0].mxu0
      %v2391 = vadd.f32 %v2174, %v2390
      %v2392 = vpop.f32.mrb[0].mxu0
      %2393 = vmatprep.mubr.bf16.mxu0 0
      %2394 = vmatmul.mubr.bf16.gmra.mrb[0].mxu0 %v2286
      %v2395 = vpop.f32.mrb[0].mxu0
      %v2396 = vadd.f32 %v2179, %v2395
      %v2397 = vpop.f32.mrb[0].mxu0
      %v2398 = vpop.f32.mrb[0].mxu0
      %v2399 = vadd.f32 %v2182, %v2398
      %v2400 = vpop.f32.mrb[0].mxu0
      %2401 = vmatprep.mubr.bf16.mxu0 0
      %2402 = vmatmul.mubr.bf16.gmra.mrb[0].mxu0 %v2289
      %v2403 = vpop.f32.mrb[0].mxu0
      %v2404 = vadd.f32 %v2187, %v2403
      %v2405 = vpop.f32.mrb[0].mxu0
      %v2406 = vpop.f32.mrb[0].mxu0
      %v2407 = vadd.f32 %v2190, %v2406
      %v2408 = vpop.f32.mrb[0].mxu0
      %2409 = vmatprep.mubr.bf16.mxu0 0
      %2410 = vmatmul.mubr.bf16.gmra.mrb[0].mxu0 %v2292
      %v2411 = vpop.f32.mrb[0].mxu0
      %v2412 = vadd.f32 %v2195, %v2411
      %v2413 = vpop.f32.mrb[0].mxu0
      %v2414 = vpop.f32.mrb[0].mxu0
      %v2415 = vadd.f32 %v2198, %v2414
      %v2416 = vpop.f32.mrb[0].mxu0
      %2417 = vmatprep.mubr.bf16.mxu0 0
      %2418 = vmatmul.mubr.bf16.gmra.mrb[0].mxu0 %v2295
      %v2419 = vpop.f32.mrb[0].mxu0
      %v2420 = vadd.f32 %v2203, %v2419
      %v2421 = vpop.f32.mrb[0].mxu0
      %v2422 = vpop.f32.mrb[0].mxu0
      %v2423 = vadd.f32 %v2206, %v2422
      %v2424 = vpop.f32.mrb[0].mxu0
      %2425 = vmatprep.mubr.bf16.mxu0 0
      %2426 = vmatmul.mubr.bf16.gmra.mrb[0].mxu0 %v2298
      %v2427 = vpop.f32.mrb[0].mxu0
      %v2428 = vadd.f32 %v2211, %v2427
      %v2429 = vpop.f32.mrb[0].mxu0
      %v2430 = vpop.f32.mrb[0].mxu0
      %v2431 = vadd.f32 %v2214, %v2430
      %v2432 = vpop.f32.mrb[0].mxu0
      %2433 = vmatprep.mubr.bf16.mxu0 0
      %2434 = vmatmul.mubr.bf16.gmra.mrb[0].mxu0 %v2301
      %v2435 = vpop.f32.mrb[0].mxu0
      %v2436 = vadd.f32 %v2219, %v2435
      %v2437 = vpop.f32.mrb[0].mxu0
      %v2438 = vpop.f32.mrb[0].mxu0
      %v2439 = vadd.f32 %v2222, %v2438
      %v2440 = vpop.f32.mrb[0].mxu0
      %2441 = vmatprep.mubr.bf16.mxu0 0
      %2442 = vmatmul.mubr.bf16.gmra.mrb[0].mxu0 %v2304
      %v2443 = vpop.f32.mrb[0].mxu0
      %v2444 = vadd.f32 %v2227, %v2443
      %v2445 = vpop.f32.mrb[0].mxu0
      %v2446 = vpop.f32.mrb[0].mxu0
      %v2447 = vadd.f32 %v2230, %v2446
      %v2448 = vpop.f32.mrb[0].mxu0
      %2449 = vmatprep.mubr.bf16.mxu0 0
      %2450 = vmatmul.mubr.bf16.gmra.mrb[0].mxu0 %v2307
      %v2451 = vpop.f32.mrb[0].mxu0
      %v2452 = vadd.f32 %v2235, %v2451
      %v2453 = vpop.f32.mrb[0].mxu0
      %v2454 = vpop.f32.mrb[0].mxu0
      %v2455 = vadd.f32 %v2238, %v2454
      %v2456 = vpop.f32.mrb[0].mxu0
      %2457 = vmatprep.mubr.bf16.mxu0 0
      %2458 = vmatmul.mubr.bf16.gmra.mrb[0].mxu0 %v2310
      %v2459 = vpop.f32.mrb[0].mxu0
      %v2460 = vadd.f32 %v2243, %v2459
      %v2461 = vpop.f32.mrb[0].mxu0
      %v2462 = vpop.f32.mrb[0].mxu0
      %v2463 = vadd.f32 %v2246, %v2462
      %v2464 = vpop.f32.mrb[0].mxu0
      %2465 = vmatprep.mubr.bf16.mxu0 0
      %2466 = vmatmul.mubr.bf16.gmra.mrb[0].mxu0 %v2313
      %v2467 = vpop.f32.mrb[0].mxu0
      %v2468 = vadd.f32 %v2251, %v2467
      %v2469 = vpop.f32.mrb[0].mxu0
      %v2470 = vpop.f32.mrb[0].mxu0
      %v2471 = vadd.f32 %v2254, %v2470
      %v2472 = vpop.f32.mrb[0].mxu0
      %2473 = vmatprep.mubr.bf16.mxu0 0
      %2474 = vmatmul.mubr.bf16.gmra.mrb[0].mxu0 %v2316
      %v2475 = vpop.f32.mrb[0].mxu0
      %v2476 = vadd.f32 %v2259, %v2475
      %v2477 = vpop.f32.mrb[0].mxu0
      %v2478 = vpop.f32.mrb[0].mxu0
      %v2479 = vadd.f32 %v2262, %v2478
      %v2480 = vpop.f32.mrb[0].mxu0
      %2481 = vdwg.mxu0
      %s2482 = scalar_lea.vmem [#allocation2], 32
      %v2483 = vld [vmem:[%s2482] sm:$0xff]
      %v2484 = vld [vmem:[%s2482 + $0x8] sm:$0xff]
      %v2485 = vld [vmem:[%s2482 + $0x10] sm:$0xff]
      %v2486 = vld [vmem:[%s2482 + $0x18] sm:$0xff]
      %v2487 = vld [vmem:[%s2482 + $0x20] sm:$0xff]
      %v2488 = vld [vmem:[%s2482 + $0x28] sm:$0xff]
      %v2489 = vld [vmem:[%s2482 + $0x30] sm:$0xff]
      %v2490 = vld [vmem:[%s2482 + $0x38] sm:$0xff]
      %v2491 = vld [vmem:[%s2482 + $0x40] sm:$0xff]
      %v2492 = vld [vmem:[%s2482 + $0x48] sm:$0xff]
      %v2493 = vld [vmem:[%s2482 + $0x50] sm:$0xff]
      %v2494 = vld [vmem:[%s2482 + $0x58] sm:$0xff]
      %v2495 = vld [vmem:[%s2482 + $0x60] sm:$0xff]
      %v2496 = vld [vmem:[%s2482 + $0x68] sm:$0xff]
      %v2497 = vld [vmem:[%s2482 + $0x70] sm:$0xff]
      %v2498 = vld [vmem:[%s2482 + $0x78] sm:$0xff]
      %v2499 = vld [vmem:[%s2482 + $0x80] sm:$0xff]
      %v2500 = vld [vmem:[%s2482 + $0x88] sm:$0xff]
      %v2501 = vld [vmem:[%s2482 + $0x90] sm:$0xff]
      %v2502 = vld [vmem:[%s2482 + $0x98] sm:$0xff]
      %v2503 = vld [vmem:[%s2482 + $0xa0] sm:$0xff]
      %v2504 = vld [vmem:[%s2482 + $0xa8] sm:$0xff]
      %v2505 = vld [vmem:[%s2482 + $0xb0] sm:$0xff]
      %v2506 = vld [vmem:[%s2482 + $0xb8] sm:$0xff]
      %v2507 = vld [vmem:[%s2482 + $0xc0] sm:$0xff]
      %v2508 = vld [vmem:[%s2482 + $0xc8] sm:$0xff]
      %v2509 = vld [vmem:[%s2482 + $0xd0] sm:$0xff]
      %v2510 = vld [vmem:[%s2482 + $0xd8] sm:$0xff]
      %v2511 = vld [vmem:[%s2482 + $0xe0] sm:$0xff]
      %v2512 = vld [vmem:[%s2482 + $0xe8] sm:$0xff]
      %v2513 = vld [vmem:[%s2482 + $0xf0] sm:$0xff]
      %v2514 = vld [vmem:[%s2482 + $0xf8] sm:$0xff]
      %v2516 = vshrl.u32 %v2483, 16
      %v2518 = vshll.u32 %v2483, 16
      %v2520 = vrot.slane %v2518, 1
      %v2521 = vor.u32 %v2516, %v2520
      %v2523 = vshll.u32 %v2484, 16
      %v2525 = vrot.slane %v2523, 1
      %v2526 = vsel %vm373, %v2521, %v2525
      %v2527 = vshrl.u32 %v2484, 16
      %v2529 = vor.u32 %v2527, %v2525
      %v2531 = vshrl.u32 %v2485, 16
      %v2533 = vshll.u32 %v2485, 16
      %v2535 = vrot.slane %v2533, 1
      %v2536 = vor.u32 %v2531, %v2535
      %v2538 = vshll.u32 %v2486, 16
      %v2540 = vrot.slane %v2538, 1
      %v2541 = vsel %vm373, %v2536, %v2540
      %v2542 = vshrl.u32 %v2486, 16
      %v2544 = vor.u32 %v2542, %v2540
      %v2546 = vshrl.u32 %v2487, 16
      %v2548 = vshll.u32 %v2487, 16
      %v2550 = vrot.slane %v2548, 1
      %v2551 = vor.u32 %v2546, %v2550
      %v2553 = vshll.u32 %v2488, 16
      %v2555 = vrot.slane %v2553, 1
      %v2556 = vsel %vm373, %v2551, %v2555
      %v2557 = vshrl.u32 %v2488, 16
      %v2559 = vor.u32 %v2557, %v2555
      %v2561 = vshrl.u32 %v2489, 16
      %v2563 = vshll.u32 %v2489, 16
      %v2565 = vrot.slane %v2563, 1
      %v2566 = vor.u32 %v2561, %v2565
      %v2568 = vshll.u32 %v2490, 16
      %v2570 = vrot.slane %v2568, 1
      %v2571 = vsel %vm373, %v2566, %v2570
      %v2572 = vshrl.u32 %v2490, 16
      %v2574 = vor.u32 %v2572, %v2570
      %v2576 = vshrl.u32 %v2491, 16
      %v2578 = vshll.u32 %v2491, 16
      %v2580 = vrot.slane %v2578, 1
      %v2581 = vor.u32 %v2576, %v2580
      %v2583 = vshll.u32 %v2492, 16
      %v2585 = vrot.slane %v2583, 1
      %v2586 = vsel %vm373, %v2581, %v2585
      %v2587 = vshrl.u32 %v2492, 16
      %v2589 = vor.u32 %v2587, %v2585
      %v2591 = vshrl.u32 %v2493, 16
      %v2593 = vshll.u32 %v2493, 16
      %v2595 = vrot.slane %v2593, 1
      %v2596 = vor.u32 %v2591, %v2595
      %v2598 = vshll.u32 %v2494, 16
      %v2600 = vrot.slane %v2598, 1
      %v2601 = vsel %vm373, %v2596, %v2600
      %v2602 = vshrl.u32 %v2494, 16
      %v2604 = vor.u32 %v2602, %v2600
      %v2606 = vshrl.u32 %v2495, 16
      %v2608 = vshll.u32 %v2495, 16
      %v2610 = vrot.slane %v2608, 1
      %v2611 = vor.u32 %v2606, %v2610
      %v2613 = vshll.u32 %v2496, 16
      %v2615 = vrot.slane %v2613, 1
      %v2616 = vsel %vm373, %v2611, %v2615
      %v2617 = vshrl.u32 %v2496, 16
      %v2619 = vor.u32 %v2617, %v2615
      %v2621 = vshrl.u32 %v2497, 16
      %v2623 = vshll.u32 %v2497, 16
      %v2625 = vrot.slane %v2623, 1
      %v2626 = vor.u32 %v2621, %v2625
      %v2628 = vshll.u32 %v2498, 16
      %v2630 = vrot.slane %v2628, 1
      %v2631 = vsel %vm373, %v2626, %v2630
      %v2632 = vshrl.u32 %v2498, 16
      %v2634 = vor.u32 %v2632, %v2630
      %v2636 = vshrl.u32 %v2499, 16
      %v2638 = vshll.u32 %v2499, 16
      %v2640 = vrot.slane %v2638, 1
      %v2641 = vor.u32 %v2636, %v2640
      %v2643 = vshll.u32 %v2500, 16
      %v2645 = vrot.slane %v2643, 1
      %v2646 = vsel %vm373, %v2641, %v2645
      %v2647 = vshrl.u32 %v2500, 16
      %v2649 = vor.u32 %v2647, %v2645
      %v2651 = vshrl.u32 %v2501, 16
      %v2653 = vshll.u32 %v2501, 16
      %v2655 = vrot.slane %v2653, 1
      %v2656 = vor.u32 %v2651, %v2655
      %v2658 = vshll.u32 %v2502, 16
      %v2660 = vrot.slane %v2658, 1
      %v2661 = vsel %vm373, %v2656, %v2660
      %v2662 = vshrl.u32 %v2502, 16
      %v2664 = vor.u32 %v2662, %v2660
      %v2666 = vshrl.u32 %v2503, 16
      %v2668 = vshll.u32 %v2503, 16
      %v2670 = vrot.slane %v2668, 1
      %v2671 = vor.u32 %v2666, %v2670
      %v2673 = vshll.u32 %v2504, 16
      %v2675 = vrot.slane %v2673, 1
      %v2676 = vsel %vm373, %v2671, %v2675
      %v2677 = vshrl.u32 %v2504, 16
      %v2679 = vor.u32 %v2677, %v2675
      %v2681 = vshrl.u32 %v2505, 16
      %v2683 = vshll.u32 %v2505, 16
      %v2685 = vrot.slane %v2683, 1
      %v2686 = vor.u32 %v2681, %v2685
      %v2688 = vshll.u32 %v2506, 16
      %v2690 = vrot.slane %v2688, 1
      %v2691 = vsel %vm373, %v2686, %v2690
      %v2692 = vshrl.u32 %v2506, 16
      %v2694 = vor.u32 %v2692, %v2690
      %v2696 = vshrl.u32 %v2507, 16
      %v2698 = vshll.u32 %v2507, 16
      %v2700 = vrot.slane %v2698, 1
      %v2701 = vor.u32 %v2696, %v2700
      %v2703 = vshll.u32 %v2508, 16
      %v2705 = vrot.slane %v2703, 1
      %v2706 = vsel %vm373, %v2701, %v2705
      %v2707 = vshrl.u32 %v2508, 16
      %v2709 = vor.u32 %v2707, %v2705
      %v2711 = vshrl.u32 %v2509, 16
      %v2713 = vshll.u32 %v2509, 16
      %v2715 = vrot.slane %v2713, 1
      %v2716 = vor.u32 %v2711, %v2715
      %v2718 = vshll.u32 %v2510, 16
      %v2720 = vrot.slane %v2718, 1
      %v2721 = vsel %vm373, %v2716, %v2720
      %v2722 = vshrl.u32 %v2510, 16
      %v2724 = vor.u32 %v2722, %v2720
      %v2726 = vshrl.u32 %v2511, 16
      %v2728 = vshll.u32 %v2511, 16
      %v2730 = vrot.slane %v2728, 1
      %v2731 = vor.u32 %v2726, %v2730
      %v2733 = vshll.u32 %v2512, 16
      %v2735 = vrot.slane %v2733, 1
      %v2736 = vsel %vm373, %v2731, %v2735
      %v2737 = vshrl.u32 %v2512, 16
      %v2739 = vor.u32 %v2737, %v2735
      %v2741 = vshrl.u32 %v2513, 16
      %v2743 = vshll.u32 %v2513, 16
      %v2745 = vrot.slane %v2743, 1
      %v2746 = vor.u32 %v2741, %v2745
      %v2748 = vshll.u32 %v2514, 16
      %v2750 = vrot.slane %v2748, 1
      %v2751 = vsel %vm373, %v2746, %v2750
      %v2752 = vshrl.u32 %v2514, 16
      %v2754 = vor.u32 %v2752, %v2750
      %2755 = vrot.lane.b32.xlu0 %v2526, 4
      %v2756 = vpop.permute.xlu0 %2755
      %2757 = vrot.lane.b32.xlu0 %v2529, 4
      %v2758 = vpop.permute.xlu0 %2757
      %2759 = vrot.lane.b32.xlu0 %v2541, 4
      %v2760 = vpop.permute.xlu0 %2759
      %2761 = vrot.lane.b32.xlu0 %v2544, 4
      %v2762 = vpop.permute.xlu0 %2761
      %2763 = vrot.lane.b32.xlu0 %v2556, 4
      %v2764 = vpop.permute.xlu0 %2763
      %2765 = vrot.lane.b32.xlu0 %v2559, 4
      %v2766 = vpop.permute.xlu0 %2765
      %2767 = vrot.lane.b32.xlu0 %v2571, 4
      %v2768 = vpop.permute.xlu0 %2767
      %2769 = vrot.lane.b32.xlu0 %v2574, 4
      %v2770 = vpop.permute.xlu0 %2769
      %2771 = vrot.lane.b32.xlu0 %v2586, 4
      %v2772 = vpop.permute.xlu0 %2771
      %2773 = vrot.lane.b32.xlu0 %v2589, 4
      %v2774 = vpop.permute.xlu0 %2773
      %2775 = vrot.lane.b32.xlu0 %v2601, 4
      %v2776 = vpop.permute.xlu0 %2775
      %2777 = vrot.lane.b32.xlu0 %v2604, 4
      %v2778 = vpop.permute.xlu0 %2777
      %2779 = vrot.lane.b32.xlu0 %v2616, 4
      %v2780 = vpop.permute.xlu0 %2779
      %2781 = vrot.lane.b32.xlu0 %v2619, 4
      %v2782 = vpop.permute.xlu0 %2781
      %2783 = vrot.lane.b32.xlu0 %v2631, 4
      %v2784 = vpop.permute.xlu0 %2783
      %2785 = vrot.lane.b32.xlu0 %v2634, 4
      %v2786 = vpop.permute.xlu0 %2785
      %2787 = vrot.lane.b32.xlu0 %v2646, 4
      %v2788 = vpop.permute.xlu0 %2787
      %2789 = vrot.lane.b32.xlu0 %v2649, 4
      %v2790 = vpop.permute.xlu0 %2789
      %2791 = vrot.lane.b32.xlu0 %v2661, 4
      %v2792 = vpop.permute.xlu0 %2791
      %2793 = vrot.lane.b32.xlu0 %v2664, 4
      %v2794 = vpop.permute.xlu0 %2793
      %2795 = vrot.lane.b32.xlu0 %v2676, 4
      %v2796 = vpop.permute.xlu0 %2795
      %2797 = vrot.lane.b32.xlu0 %v2679, 4
      %v2798 = vpop.permute.xlu0 %2797
      %2799 = vrot.lane.b32.xlu0 %v2691, 4
      %v2800 = vpop.permute.xlu0 %2799
      %2801 = vrot.lane.b32.xlu0 %v2694, 4
      %v2802 = vpop.permute.xlu0 %2801
      %2803 = vrot.lane.b32.xlu0 %v2706, 4
      %v2804 = vpop.permute.xlu0 %2803
      %2805 = vrot.lane.b32.xlu0 %v2709, 4
      %v2806 = vpop.permute.xlu0 %2805
      %2807 = vrot.lane.b32.xlu0 %v2721, 4
      %v2808 = vpop.permute.xlu0 %2807
      %2809 = vrot.lane.b32.xlu0 %v2724, 4
      %v2810 = vpop.permute.xlu0 %2809
      %2811 = vrot.lane.b32.xlu0 %v2736, 4
      %v2812 = vpop.permute.xlu0 %2811
      %2813 = vrot.lane.b32.xlu0 %v2739, 4
      %v2814 = vpop.permute.xlu0 %2813
      %2815 = vrot.lane.b32.xlu0 %v2751, 4
      %v2816 = vpop.permute.xlu0 %2815
      %2817 = vrot.lane.b32.xlu0 %v2754, 4
      %v2818 = vpop.permute.xlu0 %2817
      %v2851 = vrot.slane %v2483, 1
      %v2852 = vrot.slane %v2484, 1
      %v2853 = vsel %vm710, %v2851, %v2852
      %v2854 = vrot.slane %v2485, 1
      %v2855 = vrot.slane %v2486, 1
      %v2856 = vsel %vm710, %v2854, %v2855
      %v2857 = vrot.slane %v2487, 1
      %v2858 = vrot.slane %v2488, 1
      %v2859 = vsel %vm710, %v2857, %v2858
      %v2860 = vrot.slane %v2489, 1
      %v2861 = vrot.slane %v2490, 1
      %v2862 = vsel %vm710, %v2860, %v2861
      %v2863 = vrot.slane %v2491, 1
      %v2864 = vrot.slane %v2492, 1
      %v2865 = vsel %vm710, %v2863, %v2864
      %v2866 = vrot.slane %v2493, 1
      %v2867 = vrot.slane %v2494, 1
      %v2868 = vsel %vm710, %v2866, %v2867
      %v2869 = vrot.slane %v2495, 1
      %v2870 = vrot.slane %v2496, 1
      %v2871 = vsel %vm710, %v2869, %v2870
      %v2872 = vrot.slane %v2497, 1
      %v2873 = vrot.slane %v2498, 1
      %v2874 = vsel %vm710, %v2872, %v2873
      %v2875 = vrot.slane %v2499, 1
      %v2876 = vrot.slane %v2500, 1
      %v2877 = vsel %vm710, %v2875, %v2876
      %v2878 = vrot.slane %v2501, 1
      %v2879 = vrot.slane %v2502, 1
      %v2880 = vsel %vm710, %v2878, %v2879
      %v2881 = vrot.slane %v2503, 1
      %v2882 = vrot.slane %v2504, 1
      %v2883 = vsel %vm710, %v2881, %v2882
      %v2884 = vrot.slane %v2505, 1
      %v2885 = vrot.slane %v2506, 1
      %v2886 = vsel %vm710, %v2884, %v2885
      %v2887 = vrot.slane %v2507, 1
      %v2888 = vrot.slane %v2508, 1
      %v2889 = vsel %vm710, %v2887, %v2888
      %v2890 = vrot.slane %v2509, 1
      %v2891 = vrot.slane %v2510, 1
      %v2892 = vsel %vm710, %v2890, %v2891
      %v2893 = vrot.slane %v2511, 1
      %v2894 = vrot.slane %v2512, 1
      %v2895 = vsel %vm710, %v2893, %v2894
      %v2896 = vrot.slane %v2513, 1
      %v2897 = vrot.slane %v2514, 1
      %v2898 = vsel %vm710, %v2896, %v2897
      %2899 = vrot.lane.b32.xlu0 %v2853, 8
      %v2900 = vpop.permute.xlu0 %2899
      %2901 = vrot.lane.b32.xlu0 %v2852, 8
      %v2902 = vpop.permute.xlu0 %2901
      %2903 = vrot.lane.b32.xlu0 %v2856, 8
      %v2904 = vpop.permute.xlu0 %2903
      %2905 = vrot.lane.b32.xlu0 %v2855, 8
      %v2906 = vpop.permute.xlu0 %2905
      %2907 = vrot.lane.b32.xlu0 %v2859, 8
      %v2908 = vpop.permute.xlu0 %2907
      %2909 = vrot.lane.b32.xlu0 %v2858, 8
      %v2910 = vpop.permute.xlu0 %2909
      %2911 = vrot.lane.b32.xlu0 %v2862, 8
      %v2912 = vpop.permute.xlu0 %2911
      %2913 = vrot.lane.b32.xlu0 %v2861, 8
      %v2914 = vpop.permute.xlu0 %2913
      %2915 = vrot.lane.b32.xlu0 %v2865, 8
      %v2916 = vpop.permute.xlu0 %2915
      %2917 = vrot.lane.b32.xlu0 %v2864, 8
      %v2918 = vpop.permute.xlu0 %2917
      %2919 = vrot.lane.b32.xlu0 %v2868, 8
      %v2920 = vpop.permute.xlu0 %2919
      %2921 = vrot.lane.b32.xlu0 %v2867, 8
      %v2922 = vpop.permute.xlu0 %2921
      %2923 = vrot.lane.b32.xlu0 %v2871, 8
      %v2924 = vpop.permute.xlu0 %2923
      %2925 = vrot.lane.b32.xlu0 %v2870, 8
      %v2926 = vpop.permute.xlu0 %2925
      %2927 = vrot.lane.b32.xlu0 %v2874, 8
      %v2928 = vpop.permute.xlu0 %2927
      %2929 = vrot.lane.b32.xlu0 %v2873, 8
      %v2930 = vpop.permute.xlu0 %2929
      %2931 = vrot.lane.b32.xlu0 %v2877, 8
      %v2932 = vpop.permute.xlu0 %2931
      %2933 = vrot.lane.b32.xlu0 %v2876, 8
      %v2934 = vpop.permute.xlu0 %2933
      %2935 = vrot.lane.b32.xlu0 %v2880, 8
      %v2936 = vpop.permute.xlu0 %2935
      %2937 = vrot.lane.b32.xlu0 %v2879, 8
      %v2938 = vpop.permute.xlu0 %2937
      %2939 = vrot.lane.b32.xlu0 %v2883, 8
      %v2940 = vpop.permute.xlu0 %2939
      %2941 = vrot.lane.b32.xlu0 %v2882, 8
      %v2942 = vpop.permute.xlu0 %2941
      %2943 = vrot.lane.b32.xlu0 %v2886, 8
      %v2944 = vpop.permute.xlu0 %2943
      %2945 = vrot.lane.b32.xlu0 %v2885, 8
      %v2946 = vpop.permute.xlu0 %2945
      %2947 = vrot.lane.b32.xlu0 %v2889, 8
      %v2948 = vpop.permute.xlu0 %2947
      %2949 = vrot.lane.b32.xlu0 %v2888, 8
      %v2950 = vpop.permute.xlu0 %2949
      %2951 = vrot.lane.b32.xlu0 %v2892, 8
      %v2952 = vpop.permute.xlu0 %2951
      %2953 = vrot.lane.b32.xlu0 %v2891, 8
      %v2954 = vpop.permute.xlu0 %2953
      %2955 = vrot.lane.b32.xlu0 %v2895, 8
      %v2956 = vpop.permute.xlu0 %2955
      %2957 = vrot.lane.b32.xlu0 %v2894, 8
      %v2958 = vpop.permute.xlu0 %2957
      %2959 = vrot.lane.b32.xlu0 %v2898, 8
      %v2960 = vpop.permute.xlu0 %2959
      %2961 = vrot.lane.b32.xlu0 %v2897, 8
      %v2962 = vpop.permute.xlu0 %2961
      %v2964 = vsel %vm204, %v2483, %v2756
      %v2966 = vsel %vm204, %v2484, %v2758
      %v2968 = vsel %vm204, %v2485, %v2760
      %v2970 = vsel %vm204, %v2486, %v2762
      %v2972 = vsel %vm204, %v2487, %v2764
      %v2974 = vsel %vm204, %v2488, %v2766
      %v2976 = vsel %vm204, %v2489, %v2768
      %v2978 = vsel %vm204, %v2490, %v2770
      %v2980 = vsel %vm204, %v2491, %v2772
      %v2982 = vsel %vm204, %v2492, %v2774
      %v2984 = vsel %vm204, %v2493, %v2776
      %v2986 = vsel %vm204, %v2494, %v2778
      %v2988 = vsel %vm204, %v2495, %v2780
      %v2990 = vsel %vm204, %v2496, %v2782
      %v2992 = vsel %vm204, %v2497, %v2784
      %v2994 = vsel %vm204, %v2498, %v2786
      %v2996 = vsel %vm204, %v2499, %v2788
      %v2998 = vsel %vm204, %v2500, %v2790
      %v3000 = vsel %vm204, %v2501, %v2792
      %v3002 = vsel %vm204, %v2502, %v2794
      %v3004 = vsel %vm204, %v2503, %v2796
      %v3006 = vsel %vm204, %v2504, %v2798
      %v3008 = vsel %vm204, %v2505, %v2800
      %v3010 = vsel %vm204, %v2506, %v2802
      %v3012 = vsel %vm204, %v2507, %v2804
      %v3014 = vsel %vm204, %v2508, %v2806
      %v3016 = vsel %vm204, %v2509, %v2808
      %v3018 = vsel %vm204, %v2510, %v2810
      %v3020 = vsel %vm204, %v2511, %v2812
      %v3022 = vsel %vm204, %v2512, %v2814
      %v3024 = vsel %vm204, %v2513, %v2816
      %v3026 = vsel %vm204, %v2514, %v2818
      %v3028 = vsel %vm887, %v2964, %v2900
      %v3030 = vsel %vm887, %v2966, %v2902
      %v3032 = vsel %vm887, %v2968, %v2904
      %v3034 = vsel %vm887, %v2970, %v2906
      %v3036 = vsel %vm887, %v2972, %v2908
      %v3038 = vsel %vm887, %v2974, %v2910
      %v3040 = vsel %vm887, %v2976, %v2912
      %v3042 = vsel %vm887, %v2978, %v2914
      %v3044 = vsel %vm887, %v2980, %v2916
      %v3046 = vsel %vm887, %v2982, %v2918
      %v3048 = vsel %vm887, %v2984, %v2920
      %v3050 = vsel %vm887, %v2986, %v2922
      %v3052 = vsel %vm887, %v2988, %v2924
      %v3054 = vsel %vm887, %v2990, %v2926
      %v3056 = vsel %vm887, %v2992, %v2928
      %v3058 = vsel %vm887, %v2994, %v2930
      %v3060 = vsel %vm887, %v2996, %v2932
      %v3062 = vsel %vm887, %v2998, %v2934
      %v3064 = vsel %vm887, %v3000, %v2936
      %v3066 = vsel %vm887, %v3002, %v2938
      %v3068 = vsel %vm887, %v3004, %v2940
      %v3070 = vsel %vm887, %v3006, %v2942
      %v3072 = vsel %vm887, %v3008, %v2944
      %v3074 = vsel %vm887, %v3010, %v2946
      %v3076 = vsel %vm887, %v3012, %v2948
      %v3078 = vsel %vm887, %v3014, %v2950
      %v3080 = vsel %vm887, %v3016, %v2952
      %v3082 = vsel %vm887, %v3018, %v2954
      %v3084 = vsel %vm887, %v3020, %v2956
      %v3086 = vsel %vm887, %v3022, %v2958
      %v3088 = vsel %vm887, %v3024, %v2960
      %v3090 = vsel %vm887, %v3026, %v2962
      %v3091 = vshrl.u32 %v3028, 16
      %v3093 = vrot.slane %v3091, 3
      %v3094 = vshll.u32 %v3028, 16
      %v3096 = vrot.slane %v3094, 4
      %v3097 = vor.u32 %v3093, %v3096
      %v3098 = vshrl.u32 %v3030, 16
      %v3100 = vrot.slane %v3098, 3
      %v3101 = vshll.u32 %v3030, 16
      %v3103 = vrot.slane %v3101, 4
      %v3104 = vor.u32 %v3100, %v3103
      %v3105 = vsel %vm952, %v3097, %v3104
      %v3106 = vshrl.u32 %v3032, 16
      %v3108 = vrot.slane %v3106, 3
      %v3109 = vshll.u32 %v3032, 16
      %v3111 = vrot.slane %v3109, 4
      %v3112 = vor.u32 %v3108, %v3111
      %v3113 = vshrl.u32 %v3034, 16
      %v3115 = vrot.slane %v3113, 3
      %v3116 = vshll.u32 %v3034, 16
      %v3118 = vrot.slane %v3116, 4
      %v3119 = vor.u32 %v3115, %v3118
      %v3120 = vsel %vm952, %v3112, %v3119
      %v3121 = vshrl.u32 %v3036, 16
      %v3123 = vrot.slane %v3121, 3
      %v3124 = vshll.u32 %v3036, 16
      %v3126 = vrot.slane %v3124, 4
      %v3127 = vor.u32 %v3123, %v3126
      %v3128 = vshrl.u32 %v3038, 16
      %v3130 = vrot.slane %v3128, 3
      %v3131 = vshll.u32 %v3038, 16
      %v3133 = vrot.slane %v3131, 4
      %v3134 = vor.u32 %v3130, %v3133
      %v3135 = vsel %vm952, %v3127, %v3134
      %v3136 = vshrl.u32 %v3040, 16
      %v3138 = vrot.slane %v3136, 3
      %v3139 = vshll.u32 %v3040, 16
      %v3141 = vrot.slane %v3139, 4
      %v3142 = vor.u32 %v3138, %v3141
      %v3143 = vshrl.u32 %v3042, 16
      %v3145 = vrot.slane %v3143, 3
      %v3146 = vshll.u32 %v3042, 16
      %v3148 = vrot.slane %v3146, 4
      %v3149 = vor.u32 %v3145, %v3148
      %v3150 = vsel %vm952, %v3142, %v3149
      %v3151 = vshrl.u32 %v3044, 16
      %v3153 = vrot.slane %v3151, 3
      %v3154 = vshll.u32 %v3044, 16
      %v3156 = vrot.slane %v3154, 4
      %v3157 = vor.u32 %v3153, %v3156
      %v3158 = vshrl.u32 %v3046, 16
      %v3160 = vrot.slane %v3158, 3
      %v3161 = vshll.u32 %v3046, 16
      %v3163 = vrot.slane %v3161, 4
      %v3164 = vor.u32 %v3160, %v3163
      %v3165 = vsel %vm952, %v3157, %v3164
      %v3166 = vshrl.u32 %v3048, 16
      %v3168 = vrot.slane %v3166, 3
      %v3169 = vshll.u32 %v3048, 16
      %v3171 = vrot.slane %v3169, 4
      %v3172 = vor.u32 %v3168, %v3171
      %v3173 = vshrl.u32 %v3050, 16
      %v3175 = vrot.slane %v3173, 3
      %v3176 = vshll.u32 %v3050, 16
      %v3178 = vrot.slane %v3176, 4
      %v3179 = vor.u32 %v3175, %v3178
      %v3180 = vsel %vm952, %v3172, %v3179
      %v3181 = vshrl.u32 %v3052, 16
      %v3183 = vrot.slane %v3181, 3
      %v3184 = vshll.u32 %v3052, 16
      %v3186 = vrot.slane %v3184, 4
      %v3187 = vor.u32 %v3183, %v3186
      %v3188 = vshrl.u32 %v3054, 16
      %v3190 = vrot.slane %v3188, 3
      %v3191 = vshll.u32 %v3054, 16
      %v3193 = vrot.slane %v3191, 4
      %v3194 = vor.u32 %v3190, %v3193
      %v3195 = vsel %vm952, %v3187, %v3194
      %v3196 = vshrl.u32 %v3056, 16
      %v3198 = vrot.slane %v3196, 3
      %v3199 = vshll.u32 %v3056, 16
      %v3201 = vrot.slane %v3199, 4
      %v3202 = vor.u32 %v3198, %v3201
      %v3203 = vshrl.u32 %v3058, 16
      %v3205 = vrot.slane %v3203, 3
      %v3206 = vshll.u32 %v3058, 16
      %v3208 = vrot.slane %v3206, 4
      %v3209 = vor.u32 %v3205, %v3208
      %v3210 = vsel %vm952, %v3202, %v3209
      %v3211 = vshrl.u32 %v3060, 16
      %v3213 = vrot.slane %v3211, 3
      %v3214 = vshll.u32 %v3060, 16
      %v3216 = vrot.slane %v3214, 4
      %v3217 = vor.u32 %v3213, %v3216
      %v3218 = vshrl.u32 %v3062, 16
      %v3220 = vrot.slane %v3218, 3
      %v3221 = vshll.u32 %v3062, 16
      %v3223 = vrot.slane %v3221, 4
      %v3224 = vor.u32 %v3220, %v3223
      %v3225 = vsel %vm952, %v3217, %v3224
      %v3226 = vshrl.u32 %v3064, 16
      %v3228 = vrot.slane %v3226, 3
      %v3229 = vshll.u32 %v3064, 16
      %v3231 = vrot.slane %v3229, 4
      %v3232 = vor.u32 %v3228, %v3231
      %v3233 = vshrl.u32 %v3066, 16
      %v3235 = vrot.slane %v3233, 3
      %v3236 = vshll.u32 %v3066, 16
      %v3238 = vrot.slane %v3236, 4
      %v3239 = vor.u32 %v3235, %v3238
      %v3240 = vsel %vm952, %v3232, %v3239
      %v3241 = vshrl.u32 %v3068, 16
      %v3243 = vrot.slane %v3241, 3
      %v3244 = vshll.u32 %v3068, 16
      %v3246 = vrot.slane %v3244, 4
      %v3247 = vor.u32 %v3243, %v3246
      %v3248 = vshrl.u32 %v3070, 16
      %v3250 = vrot.slane %v3248, 3
      %v3251 = vshll.u32 %v3070, 16
      %v3253 = vrot.slane %v3251, 4
      %v3254 = vor.u32 %v3250, %v3253
      %v3255 = vsel %vm952, %v3247, %v3254
      %v3256 = vshrl.u32 %v3072, 16
      %v3258 = vrot.slane %v3256, 3
      %v3259 = vshll.u32 %v3072, 16
      %v3261 = vrot.slane %v3259, 4
      %v3262 = vor.u32 %v3258, %v3261
      %v3263 = vshrl.u32 %v3074, 16
      %v3265 = vrot.slane %v3263, 3
      %v3266 = vshll.u32 %v3074, 16
      %v3268 = vrot.slane %v3266, 4
      %v3269 = vor.u32 %v3265, %v3268
      %v3270 = vsel %vm952, %v3262, %v3269
      %v3271 = vshrl.u32 %v3076, 16
      %v3273 = vrot.slane %v3271, 3
      %v3274 = vshll.u32 %v3076, 16
      %v3276 = vrot.slane %v3274, 4
      %v3277 = vor.u32 %v3273, %v3276
      %v3278 = vshrl.u32 %v3078, 16
      %v3280 = vrot.slane %v3278, 3
      %v3281 = vshll.u32 %v3078, 16
      %v3283 = vrot.slane %v3281, 4
      %v3284 = vor.u32 %v3280, %v3283
      %v3285 = vsel %vm952, %v3277, %v3284
      %v3286 = vshrl.u32 %v3080, 16
      %v3288 = vrot.slane %v3286, 3
      %v3289 = vshll.u32 %v3080, 16
      %v3291 = vrot.slane %v3289, 4
      %v3292 = vor.u32 %v3288, %v3291
      %v3293 = vshrl.u32 %v3082, 16
      %v3295 = vrot.slane %v3293, 3
      %v3296 = vshll.u32 %v3082, 16
      %v3298 = vrot.slane %v3296, 4
      %v3299 = vor.u32 %v3295, %v3298
      %v3300 = vsel %vm952, %v3292, %v3299
      %v3301 = vshrl.u32 %v3084, 16
      %v3303 = vrot.slane %v3301, 3
      %v3304 = vshll.u32 %v3084, 16
      %v3306 = vrot.slane %v3304, 4
      %v3307 = vor.u32 %v3303, %v3306
      %v3308 = vshrl.u32 %v3086, 16
      %v3310 = vrot.slane %v3308, 3
      %v3311 = vshll.u32 %v3086, 16
      %v3313 = vrot.slane %v3311, 4
      %v3314 = vor.u32 %v3310, %v3313
      %v3315 = vsel %vm952, %v3307, %v3314
      %v3316 = vshrl.u32 %v3088, 16
      %v3318 = vrot.slane %v3316, 3
      %v3319 = vshll.u32 %v3088, 16
      %v3321 = vrot.slane %v3319, 4
      %v3322 = vor.u32 %v3318, %v3321
      %v3323 = vshrl.u32 %v3090, 16
      %v3325 = vrot.slane %v3323, 3
      %v3326 = vshll.u32 %v3090, 16
      %v3328 = vrot.slane %v3326, 4
      %v3329 = vor.u32 %v3325, %v3328
      %v3330 = vsel %vm952, %v3322, %v3329
      %s3331 = scalar_lea.vmem %s1, 16
      %v3332 = vld [vmem:[%s3331] sm:$0xf]
      %v3333 = vld [vmem:[%s3331 + $0x4] sm:$0x3]
      %v3336 = vunpack.c.l.b16 %v3332
      %v3337 = vunpack.c.l.b16 %v3333
      %v3338 = vpack.c.b16 %v3337, %v3336
      %v3340 = vsel %vm2051, %v3105, 0
      %v3343 = vsel %vm2051, %v3120, 0
      %v3346 = vsel %vm2051, %v3135, 0
      %v3349 = vsel %vm2051, %v3150, 0
      %v3352 = vsel %vm2051, %v3165, 0
      %v3355 = vsel %vm2051, %v3180, 0
      %v3358 = vsel %vm2051, %v3195, 0
      %v3361 = vsel %vm2051, %v3210, 0
      %v3364 = vsel %vm2051, %v3225, 0
      %v3367 = vsel %vm2051, %v3240, 0
      %v3370 = vsel %vm2051, %v3255, 0
      %v3373 = vsel %vm2051, %v3270, 0
      %v3376 = vsel %vm2051, %v3285, 0
      %v3379 = vsel %vm2051, %v3300, 0
      %v3382 = vsel %vm2051, %v3315, 0
      %v3385 = vsel %vm2051, %v3330, 0
      %v3388 = vsel %vm2100, %v3338, 0
      %3390 = vmatprep.subr.bf16.mxu0 0
      %3391 = vmatpush1.bf16.msra.mxu0 %v3388
      %3392 = vmatprep.subr.bf16.mxu0 0
      %3393 = vmatpush1.bf16.msra.mxu0 0
      %3394 = vmatprep.subr.bf16.mxu0 0
      %3395 = vmatpush1.bf16.msra.mxu0 0
      %3396 = vmatprep.subr.bf16.mxu0 0
      %3397 = vmatpush1.bf16.msra.mxu0 0
      %3398 = vmatprep.subr.bf16.mxu0 0
      %3399 = vmatpush1.bf16.msra.mxu0 0
      %3400 = vmatprep.subr.bf16.mxu0 0
      %3401 = vmatpush1.bf16.msra.mxu0 0
      %3402 = vmatprep.subr.bf16.mxu0 0
      %3403 = vmatpush1.bf16.msra.mxu0 0
      %3404 = vmatprep.subr.bf16.mxu0 0
      %3405 = vmatpush1.bf16.msra.mxu0 0
      %3406 = vmatprep.subr.bf16.mxu0 0
      %3407 = vmatpush1.bf16.msra.mxu0 0
      %3408 = vmatprep.subr.bf16.mxu0 0
      %3409 = vmatpush1.bf16.msra.mxu0 0
      %3410 = vmatprep.subr.bf16.mxu0 0
      %3411 = vmatpush1.bf16.msra.mxu0 0
      %3412 = vmatprep.subr.bf16.mxu0 0
      %3413 = vmatpush1.bf16.msra.mxu0 0
      %3414 = vmatprep.subr.bf16.mxu0 0
      %3415 = vmatpush1.bf16.msra.mxu0 0
      %3416 = vmatprep.subr.bf16.mxu0 0
      %3417 = vmatpush1.bf16.msra.mxu0 0
      %3418 = vmatprep.subr.bf16.mxu0 0
      %3419 = vmatpush1.bf16.msra.mxu0 0
      %3420 = vmatprep.subr.bf16.mxu0 0
      %3421 = vmatpush1.bf16.msra.mxu0 0
      %3422 = vmatprep.mubr.bf16.mxu0 0
      %3423 = vmatmul.mubr.bf16.gmra.mrb[0].mxu0 %v3340
      %v3424 = vpop.f32.mrb[0].mxu0
      %v3425 = vadd.f32 0.0, %v3424
      %v3426 = vpop.f32.mrb[0].mxu0
      %v3427 = vpop.f32.mrb[0].mxu0
      %v3428 = vadd.f32 0.0, %v3427
      %v3429 = vpop.f32.mrb[0].mxu0
      %3430 = vmatprep.mubr.bf16.mxu0 0
      %3431 = vmatmul.mubr.bf16.gmra.mrb[0].mxu0 %v3343
      %v3432 = vpop.f32.mrb[0].mxu0
      %v3433 = vadd.f32 0.0, %v3432
      %v3434 = vpop.f32.mrb[0].mxu0
      %v3435 = vpop.f32.mrb[0].mxu0
      %v3436 = vadd.f32 0.0, %v3435
      %v3437 = vpop.f32.mrb[0].mxu0
      %3438 = vmatprep.mubr.bf16.mxu0 0
      %3439 = vmatmul.mubr.bf16.gmra.mrb[0].mxu0 %v3346
      %v3440 = vpop.f32.mrb[0].mxu0
      %v3441 = vadd.f32 0.0, %v3440
      %v3442 = vpop.f32.mrb[0].mxu0
      %v3443 = vpop.f32.mrb[0].mxu0
      %v3444 = vadd.f32 0.0, %v3443
      %v3445 = vpop.f32.mrb[0].mxu0
      %3446 = vmatprep.mubr.bf16.mxu0 0
      %3447 = vmatmul.mubr.bf16.gmra.mrb[0].mxu0 %v3349
      %v3448 = vpop.f32.mrb[0].mxu0
      %v3449 = vadd.f32 0.0, %v3448
      %v3450 = vpop.f32.mrb[0].mxu0
      %v3451 = vpop.f32.mrb[0].mxu0
      %v3452 = vadd.f32 0.0, %v3451
      %v3453 = vpop.f32.mrb[0].mxu0
      %3454 = vmatprep.mubr.bf16.mxu0 0
      %3455 = vmatmul.mubr.bf16.gmra.mrb[0].mxu0 %v3352
      %v3456 = vpop.f32.mrb[0].mxu0
      %v3457 = vadd.f32 0.0, %v3456
      %v3458 = vpop.f32.mrb[0].mxu0
      %v3459 = vpop.f32.mrb[0].mxu0
      %v3460 = vadd.f32 0.0, %v3459
      %v3461 = vpop.f32.mrb[0].mxu0
      %3462 = vmatprep.mubr.bf16.mxu0 0
      %3463 = vmatmul.mubr.bf16.gmra.mrb[0].mxu0 %v3355
      %v3464 = vpop.f32.mrb[0].mxu0
      %v3465 = vadd.f32 0.0, %v3464
      %v3466 = vpop.f32.mrb[0].mxu0
      %v3467 = vpop.f32.mrb[0].mxu0
      %v3468 = vadd.f32 0.0, %v3467
      %v3469 = vpop.f32.mrb[0].mxu0
      %3470 = vmatprep.mubr.bf16.mxu0 0
      %3471 = vmatmul.mubr.bf16.gmra.mrb[0].mxu0 %v3358
      %v3472 = vpop.f32.mrb[0].mxu0
      %v3473 = vadd.f32 0.0, %v3472
      %v3474 = vpop.f32.mrb[0].mxu0
      %v3475 = vpop.f32.mrb[0].mxu0
      %v3476 = vadd.f32 0.0, %v3475
      %v3477 = vpop.f32.mrb[0].mxu0
      %3478 = vmatprep.mubr.bf16.mxu0 0
      %3479 = vmatmul.mubr.bf16.gmra.mrb[0].mxu0 %v3361
      %v3480 = vpop.f32.mrb[0].mxu0
      %v3481 = vadd.f32 0.0, %v3480
      %v3482 = vpop.f32.mrb[0].mxu0
      %v3483 = vpop.f32.mrb[0].mxu0
      %v3484 = vadd.f32 0.0, %v3483
      %v3485 = vpop.f32.mrb[0].mxu0
      %3486 = vmatprep.mubr.bf16.mxu0 0
      %3487 = vmatmul.mubr.bf16.gmra.mrb[0].mxu0 %v3364
      %v3488 = vpop.f32.mrb[0].mxu0
      %v3489 = vadd.f32 0.0, %v3488
      %v3490 = vpop.f32.mrb[0].mxu0
      %v3491 = vpop.f32.mrb[0].mxu0
      %v3492 = vadd.f32 0.0, %v3491
      %v3493 = vpop.f32.mrb[0].mxu0
      %3494 = vmatprep.mubr.bf16.mxu0 0
      %3495 = vmatmul.mubr.bf16.gmra.mrb[0].mxu0 %v3367
      %v3496 = vpop.f32.mrb[0].mxu0
      %v3497 = vadd.f32 0.0, %v3496
      %v3498 = vpop.f32.mrb[0].mxu0
      %v3499 = vpop.f32.mrb[0].mxu0
      %v3500 = vadd.f32 0.0, %v3499
      %v3501 = vpop.f32.mrb[0].mxu0
      %3502 = vmatprep.mubr.bf16.mxu0 0
      %3503 = vmatmul.mubr.bf16.gmra.mrb[0].mxu0 %v3370
      %v3504 = vpop.f32.mrb[0].mxu0
      %v3505 = vadd.f32 0.0, %v3504
      %v3506 = vpop.f32.mrb[0].mxu0
      %v3507 = vpop.f32.mrb[0].mxu0
      %v3508 = vadd.f32 0.0, %v3507
      %v3509 = vpop.f32.mrb[0].mxu0
      %3510 = vmatprep.mubr.bf16.mxu0 0
      %3511 = vmatmul.mubr.bf16.gmra.mrb[0].mxu0 %v3373
      %v3512 = vpop.f32.mrb[0].mxu0
      %v3513 = vadd.f32 0.0, %v3512
      %v3514 = vpop.f32.mrb[0].mxu0
      %v3515 = vpop.f32.mrb[0].mxu0
      %v3516 = vadd.f32 0.0, %v3515
      %v3517 = vpop.f32.mrb[0].mxu0
      %3518 = vmatprep.mubr.bf16.mxu0 0
      %3519 = vmatmul.mubr.bf16.gmra.mrb[0].mxu0 %v3376
      %v3520 = vpop.f32.mrb[0].mxu0
      %v3521 = vadd.f32 0.0, %v3520
      %v3522 = vpop.f32.mrb[0].mxu0
      %v3523 = vpop.f32.mrb[0].mxu0
      %v3524 = vadd.f32 0.0, %v3523
      %v3525 = vpop.f32.mrb[0].mxu0
      %3526 = vmatprep.mubr.bf16.mxu0 0
      %3527 = vmatmul.mubr.bf16.gmra.mrb[0].mxu0 %v3379
      %v3528 = vpop.f32.mrb[0].mxu0
      %v3529 = vadd.f32 0.0, %v3528
      %v3530 = vpop.f32.mrb[0].mxu0
      %v3531 = vpop.f32.mrb[0].mxu0
      %v3532 = vadd.f32 0.0, %v3531
      %v3533 = vpop.f32.mrb[0].mxu0
      %3534 = vmatprep.mubr.bf16.mxu0 0
      %3535 = vmatmul.mubr.bf16.gmra.mrb[0].mxu0 %v3382
      %v3536 = vpop.f32.mrb[0].mxu0
      %v3537 = vadd.f32 0.0, %v3536
      %v3538 = vpop.f32.mrb[0].mxu0
      %v3539 = vpop.f32.mrb[0].mxu0
      %v3540 = vadd.f32 0.0, %v3539
      %v3541 = vpop.f32.mrb[0].mxu0
      %3542 = vmatprep.mubr.bf16.mxu0 0
      %3543 = vmatmul.mubr.bf16.gmra.mrb[0].mxu0 %v3385
      %v3544 = vpop.f32.mrb[0].mxu0
      %v3545 = vadd.f32 0.0, %v3544
      %v3546 = vpop.f32.mrb[0].mxu0
      %v3547 = vpop.f32.mrb[0].mxu0
      %v3548 = vadd.f32 0.0, %v3547
      %v3549 = vpop.f32.mrb[0].mxu0
      %3550 = vdwg.mxu0
      %v3551 = vadd.f32 %v2356, %v3425
      %v3552 = vadd.f32 %v2359, %v3428
      %v3553 = vadd.f32 %v2364, %v3433
      %v3554 = vadd.f32 %v2367, %v3436
      %v3555 = vadd.f32 %v2372, %v3441
      %v3556 = vadd.f32 %v2375, %v3444
      %v3557 = vadd.f32 %v2380, %v3449
      %v3558 = vadd.f32 %v2383, %v3452
      %v3559 = vadd.f32 %v2388, %v3457
      %v3560 = vadd.f32 %v2391, %v3460
      %v3561 = vadd.f32 %v2396, %v3465
      %v3562 = vadd.f32 %v2399, %v3468
      %v3563 = vadd.f32 %v2404, %v3473
      %v3564 = vadd.f32 %v2407, %v3476
      %v3565 = vadd.f32 %v2412, %v3481
      %v3566 = vadd.f32 %v2415, %v3484
      %v3567 = vadd.f32 %v2420, %v3489
      %v3568 = vadd.f32 %v2423, %v3492
      %v3569 = vadd.f32 %v2428, %v3497
      %v3570 = vadd.f32 %v2431, %v3500
      %v3571 = vadd.f32 %v2436, %v3505
      %v3572 = vadd.f32 %v2439, %v3508
      %v3573 = vadd.f32 %v2444, %v3513
      %v3574 = vadd.f32 %v2447, %v3516
      %v3575 = vadd.f32 %v2452, %v3521
      %v3576 = vadd.f32 %v2455, %v3524
      %v3577 = vadd.f32 %v2460, %v3529
      %v3578 = vadd.f32 %v2463, %v3532
      %v3579 = vadd.f32 %v2468, %v3537
      %v3580 = vadd.f32 %v2471, %v3540
      %v3581 = vadd.f32 %v2476, %v3545
      %v3582 = vadd.f32 %v2479, %v3548
      %v3583 = vld [vmem:[%s2] sm:$0x1]
      %v3585 = vlaneseq
      %v3586 = vshrl.u32 %v3585, 7
      %v3587 = vsub.s32 0, %v3586
      %v3588 = vrot.slane %v3583, %v3587
      %v3590 = vadd.f32 %v3551, %v3588
      %v3591 = vadd.f32 %v3552, %v3588
      %v3592 = vadd.f32 %v3553, %v3588
      %v3593 = vadd.f32 %v3554, %v3588
      %v3594 = vadd.f32 %v3555, %v3588
      %v3595 = vadd.f32 %v3556, %v3588
      %v3596 = vadd.f32 %v3557, %v3588
      %v3597 = vadd.f32 %v3558, %v3588
      %v3598 = vadd.f32 %v3559, %v3588
      %v3599 = vadd.f32 %v3560, %v3588
      %v3600 = vadd.f32 %v3561, %v3588
      %v3601 = vadd.f32 %v3562, %v3588
      %v3602 = vadd.f32 %v3563, %v3588
      %v3603 = vadd.f32 %v3564, %v3588
      %v3604 = vadd.f32 %v3565, %v3588
      %v3605 = vadd.f32 %v3566, %v3588
      %v3606 = vadd.f32 %v3567, %v3588
      %v3607 = vadd.f32 %v3568, %v3588
      %v3608 = vadd.f32 %v3569, %v3588
      %v3609 = vadd.f32 %v3570, %v3588
      %v3610 = vadd.f32 %v3571, %v3588
      %v3611 = vadd.f32 %v3572, %v3588
      %v3612 = vadd.f32 %v3573, %v3588
      %v3613 = vadd.f32 %v3574, %v3588
      %v3614 = vadd.f32 %v3575, %v3588
      %v3615 = vadd.f32 %v3576, %v3588
      %v3616 = vadd.f32 %v3577, %v3588
      %v3617 = vadd.f32 %v3578, %v3588
      %v3618 = vadd.f32 %v3579, %v3588
      %v3619 = vadd.f32 %v3580, %v3588
      %v3620 = vadd.f32 %v3581, %v3588
      %v3621 = vadd.f32 %v3582, %v3588
      %v3622 = vmax.f32 %v3590, 0.0
      %v3623 = vmax.f32 %v3591, 0.0
      %v3624 = vmax.f32 %v3592, 0.0
      %v3625 = vmax.f32 %v3593, 0.0
      %v3626 = vmax.f32 %v3594, 0.0
      %v3627 = vmax.f32 %v3595, 0.0
      %v3628 = vmax.f32 %v3596, 0.0
      %v3629 = vmax.f32 %v3597, 0.0
      %v3630 = vmax.f32 %v3598, 0.0
      %v3631 = vmax.f32 %v3599, 0.0
      %v3632 = vmax.f32 %v3600, 0.0
      %v3633 = vmax.f32 %v3601, 0.0
      %v3634 = vmax.f32 %v3602, 0.0
      %v3635 = vmax.f32 %v3603, 0.0
      %v3636 = vmax.f32 %v3604, 0.0
      %v3637 = vmax.f32 %v3605, 0.0
      %v3638 = vmax.f32 %v3606, 0.0
      %v3639 = vmax.f32 %v3607, 0.0
      %v3640 = vmax.f32 %v3608, 0.0
      %v3641 = vmax.f32 %v3609, 0.0
      %v3642 = vmax.f32 %v3610, 0.0
      %v3643 = vmax.f32 %v3611, 0.0
      %v3644 = vmax.f32 %v3612, 0.0
      %v3645 = vmax.f32 %v3613, 0.0
      %v3646 = vmax.f32 %v3614, 0.0
      %v3647 = vmax.f32 %v3615, 0.0
      %v3648 = vmax.f32 %v3616, 0.0
      %v3649 = vmax.f32 %v3617, 0.0
      %v3650 = vmax.f32 %v3618, 0.0
      %v3651 = vmax.f32 %v3619, 0.0
      %v3652 = vmax.f32 %v3620, 0.0
      %v3653 = vmax.f32 %v3621, 0.0
      %v3654 = vpack.c.bf16 %v3623, %v3622
      %v3655 = vpack.c.bf16 %v3625, %v3624
      %v3656 = vpack.c.bf16 %v3627, %v3626
      %v3657 = vpack.c.bf16 %v3629, %v3628
      %v3658 = vpack.c.bf16 %v3631, %v3630
      %v3659 = vpack.c.bf16 %v3633, %v3632
      %v3660 = vpack.c.bf16 %v3635, %v3634
      %v3661 = vpack.c.bf16 %v3637, %v3636
      %v3662 = vpack.c.bf16 %v3639, %v3638
      %v3663 = vpack.c.bf16 %v3641, %v3640
      %v3664 = vpack.c.bf16 %v3643, %v3642
      %v3665 = vpack.c.bf16 %v3645, %v3644
      %v3666 = vpack.c.bf16 %v3647, %v3646
      %v3667 = vpack.c.bf16 %v3649, %v3648
      %v3668 = vpack.c.bf16 %v3651, %v3650
      %v3669 = vpack.c.bf16 %v3653, %v3652
      %v3686 = vunpack.c.l.b16 %v3654
      %v3687 = vunpack.c.h.b16 %v3654
      %v3688 = vunpack.c.l.b16 %v3655
      %v3689 = vunpack.c.h.b16 %v3655
      %v3690 = vunpack.c.l.b16 %v3656
      %v3691 = vunpack.c.h.b16 %v3656
      %v3692 = vunpack.c.l.b16 %v3657
      %v3693 = vunpack.c.h.b16 %v3657
      %v3694 = vunpack.c.l.b16 %v3658
      %v3695 = vunpack.c.h.b16 %v3658
      %v3696 = vunpack.c.l.b16 %v3659
      %v3697 = vunpack.c.h.b16 %v3659
      %v3698 = vunpack.c.l.b16 %v3660
      %v3699 = vunpack.c.h.b16 %v3660
      %v3700 = vunpack.c.l.b16 %v3661
      %v3701 = vunpack.c.h.b16 %v3661
      %v3702 = vunpack.c.l.b16 %v3662
      %v3703 = vunpack.c.h.b16 %v3662
      %v3704 = vunpack.c.l.b16 %v3663
      %v3705 = vunpack.c.h.b16 %v3663
      %v3706 = vunpack.c.l.b16 %v3664
      %v3707 = vunpack.c.h.b16 %v3664
      %v3708 = vunpack.c.l.b16 %v3665
      %v3709 = vunpack.c.h.b16 %v3665
      %v3710 = vunpack.c.l.b16 %v3666
      %v3711 = vunpack.c.h.b16 %v3666
      %v3712 = vunpack.c.l.b16 %v3667
      %v3713 = vunpack.c.h.b16 %v3667
      %v3714 = vunpack.c.l.b16 %v3668
      %v3715 = vunpack.c.h.b16 %v3668
      %v3716 = vunpack.c.l.b16 %v3669
      %v3717 = vunpack.c.h.b16 %v3669
      %v3718 = vpack.c.b16 %v3686, %v3686
      %v3719 = vpack.c.b16 %v3687, %v3687
      %v3720 = vpack.c.b16 %v3688, %v3688
      %v3721 = vpack.c.b16 %v3689, %v3689
      %v3722 = vpack.c.b16 %v3690, %v3690
      %v3723 = vpack.c.b16 %v3691, %v3691
      %v3724 = vpack.c.b16 %v3692, %v3692
      %v3725 = vpack.c.b16 %v3693, %v3693
      %v3726 = vpack.c.b16 %v3694, %v3694
      %v3727 = vpack.c.b16 %v3695, %v3695
      %v3728 = vpack.c.b16 %v3696, %v3696
      %v3729 = vpack.c.b16 %v3697, %v3697
      %v3730 = vpack.c.b16 %v3698, %v3698
      %v3731 = vpack.c.b16 %v3699, %v3699
      %v3732 = vpack.c.b16 %v3700, %v3700
      %v3733 = vpack.c.b16 %v3701, %v3701
      %v3734 = vpack.c.b16 %v3702, %v3702
      %v3735 = vpack.c.b16 %v3703, %v3703
      %v3736 = vpack.c.b16 %v3704, %v3704
      %v3737 = vpack.c.b16 %v3705, %v3705
      %v3738 = vpack.c.b16 %v3706, %v3706
      %v3739 = vpack.c.b16 %v3707, %v3707
      %v3740 = vpack.c.b16 %v3708, %v3708
      %v3741 = vpack.c.b16 %v3709, %v3709
      %v3742 = vpack.c.b16 %v3710, %v3710
      %v3743 = vpack.c.b16 %v3711, %v3711
      %v3744 = vpack.c.b16 %v3712, %v3712
      %v3745 = vpack.c.b16 %v3713, %v3713
      %v3746 = vpack.c.b16 %v3714, %v3714
      %v3747 = vpack.c.b16 %v3715, %v3715
      %v3748 = vpack.c.b16 %v3716, %v3716
      %v3749 = vpack.c.b16 %v3717, %v3717
      %3782 = vst.msk [vmem:[%s170] sm:$0xf] %vm211, %v3718
      %3783 = vst.msk [vmem:[%s170 + $0x4] sm:$0xf] %vm211, %v3719
      %3784 = vst.msk [vmem:[%s170 + $0x8] sm:$0xf] %vm211, %v3720
      %3785 = vst.msk [vmem:[%s170 + $0xc] sm:$0xf] %vm211, %v3721
      %3786 = vst.msk [vmem:[%s170 + $0x10] sm:$0xf] %vm211, %v3722
      %3787 = vst.msk [vmem:[%s170 + $0x14] sm:$0xf] %vm211, %v3723
      %3788 = vst.msk [vmem:[%s170 + $0x18] sm:$0xf] %vm211, %v3724
      %3789 = vst.msk [vmem:[%s170 + $0x1c] sm:$0xf] %vm211, %v3725
      %3790 = vst.msk [vmem:[%s170 + $0x20] sm:$0xf] %vm211, %v3726
      %3791 = vst.msk [vmem:[%s170 + $0x24] sm:$0xf] %vm211, %v3727
      %3792 = vst.msk [vmem:[%s170 + $0x28] sm:$0xf] %vm211, %v3728
      %3793 = vst.msk [vmem:[%s170 + $0x2c] sm:$0xf] %vm211, %v3729
      %3794 = vst.msk [vmem:[%s170 + $0x30] sm:$0xf] %vm211, %v3730
      %3795 = vst.msk [vmem:[%s170 + $0x34] sm:$0xf] %vm211, %v3731
      %3796 = vst.msk [vmem:[%s170 + $0x38] sm:$0xf] %vm211, %v3732
      %3797 = vst.msk [vmem:[%s170 + $0x3c] sm:$0xf] %vm211, %v3733
      %3798 = vst.msk [vmem:[%s170 + $0x40] sm:$0xf] %vm211, %v3734
      %3799 = vst.msk [vmem:[%s170 + $0x44] sm:$0xf] %vm211, %v3735
      %3800 = vst.msk [vmem:[%s170 + $0x48] sm:$0xf] %vm211, %v3736
      %3801 = vst.msk [vmem:[%s170 + $0x4c] sm:$0xf] %vm211, %v3737
      %3802 = vst.msk [vmem:[%s170 + $0x50] sm:$0xf] %vm211, %v3738
      %3803 = vst.msk [vmem:[%s170 + $0x54] sm:$0xf] %vm211, %v3739
      %3804 = vst.msk [vmem:[%s170 + $0x58] sm:$0xf] %vm211, %v3740
      %3805 = vst.msk [vmem:[%s170 + $0x5c] sm:$0xf] %vm211, %v3741
      %3806 = vst.msk [vmem:[%s170 + $0x60] sm:$0xf] %vm211, %v3742
      %3807 = vst.msk [vmem:[%s170 + $0x64] sm:$0xf] %vm211, %v3743
      %3808 = vst.msk [vmem:[%s170 + $0x68] sm:$0xf] %vm211, %v3744
      %3809 = vst.msk [vmem:[%s170 + $0x6c] sm:$0xf] %vm211, %v3745
      %3810 = vst.msk [vmem:[%s170 + $0x70] sm:$0xf] %vm211, %v3746
      %3811 = vst.msk [vmem:[%s170 + $0x74] sm:$0xf] %vm211, %v3747
      %3812 = vst.msk [vmem:[%s170 + $0x78] sm:$0xf] %vm211, %v3748
      %3813 = vst.msk [vmem:[%s170 + $0x7c] sm:$0xf] %vm211, %v3749
      %p3814 = scmp.lt.s32.totalorder %s14, 1
      %s3815 = scalar_select %p3814, %s14, 1
      %s3816 = smul.addr %s3815, 32
      %s3817 = smul.addr %s3816, 4
      %s3818 = scalar_lea.vmem %s3, %s3817
      // Predicated region
      $region33: #{basic_block.2} parent=31 // pred_check
        %p3819 = pneg %p100
      $region34: #{basic_block.2} parent=31 // pred_check_branch
        %3821 = sbr.rel (%p3819) target = $region36
      $region35: #{basic_block.2} parent=31 // pred_region
        _
      $region36: #{basic_block.2} parent=31 // pred_fallthru
        _
    $region32: #{basic_block.2} parent=5 // pred_fallthru
      _
    %p3822 = scmp.le.s32.totalorder 2, %s9
    // Predicated region
    $region37: #{basic_block.2} parent=5 // pred_check
      %p3823 = pneg %p3822
    $region38: #{basic_block.2} parent=5 // pred_check_branch
      %3825 = sbr.rel (%p3823) target = $region40
    $region39: #{basic_block.2} parent=5 // pred_region
      %s3826 = ssub.s32 %s9, 2
      // Predicated region
      $region41: #{basic_block.2} parent=39 // pred_check
        %p3827 = pneg %p106
      $region42: #{basic_block.2} parent=39 // pred_check_branch
        %3829 = sbr.rel (%p3827) target = $region44
      $region43: #{basic_block.2} parent=39 // pred_region
        %p3830 = scmp.lt.s32.totalorder %s15, 1
        %s3831 = scalar_select %p3830, %s15, 1
        %s3832 = smul.addr %s3831, 32
        %s3833 = smul.addr %s3832, 4
        %s3834 = scalar_lea.vmem %s3, %s3833
      $region44: #{basic_block.2} parent=39 // pred_fallthru
        _
    $region40: #{basic_block.2} parent=5 // pred_fallthru
      _
  $region6: #{basic_block.2} parent=0 // loop_footer
    %s13 = sadd.s32 1, %s9
  $region7: #{basic_block.2} parent=0 // loop_footer_branch
    %8 = sbr.rel target = $region3
  $region8: #{basic_block.2} parent=0 // loop_exit
    _

// kernel: basic_block.3
$region0: #{basic_block.3}
  #allocation0 [shape = 'u32[]', space=smem, size = 0x4, offset = 0x4, fixed_abs, tag = 'smem constant byte address 0x4 - core index']
  #allocation1 [shape = 'u32[144,128]{1,0:T(1,128)}', space=vmem, size = 0x12000, scoped, tag = 'internal scratch']
  #allocation2 [shape = 'bf16[18,32,4]{2,1,0:T(16,128)(2,1)}', space=vmem, size = 0x24000, scoped, tag = 'scratch operand']
  %s0 = inlined_call_operand.vmem [shape: bf16[2,16,16,4], index: 0, kind: input, shape index: {}]
  %s1 = inlined_call_operand.vmem [shape: bf16[3,12,4], index: 1, kind: input, shape index: {}]
  %s2 = inlined_call_operand.vmem [shape: f32[1,4], index: 2, kind: input, shape index: {}]
  %s3 = inlined_call_operand.vmem [shape: f32[2,16,16,4], index: 3, kind: input, shape index: {}]
  %s4 = inlined_call_operand.vmem [shape: f32[2,16,16,4], index: 4, kind: output, shape index: {}]
  %s5 = sld [smem:[#allocation0]]
  $region49: #{basic_block.3} parent=0
    _
  %s7 = ssub.s32 1, %s5
  %s8 = scalar_select 0, %s7, %s5
  loop: start=0, step=1, limit=4
  $region2: #{basic_block.3} parent=0 // loop_pre_header
    _
  $region3: #{basic_block.3} parent=0 // loop_header
    %s10 = sphi 0, %s14
    %p11 = scmp.ge.s32.totalorder %s10, 4
    %s20 = sphi 0, %s22
    %s23 = sphi 0, %s20
    %s24 = sphi 0, %s23
    %s40 = sphi 0, %s24
    %s44 = sphi 0, %s44
    %s46 = sphi 0, %s44
    %s47 = sphi 0, %s46
    %s61 = sphi 0, %s47
    %s65 = sphi 0, %s65
    %s67 = sphi 0, %s65
    %s68 = sphi 0, %s67
    %s82 = sphi 0, %s68
    %s88 = sphi 0, %s90
    %s91 = sphi 0, %s88
    %s92 = sphi 0, %s91
    %s108 = sphi 0, %s92
    %s114 = sphi 0, %s116
    %s117 = sphi 0, %s114
    %s118 = sphi 0, %s117
    %s134 = sphi 0, %s118
  $region4: #{basic_block.3} parent=0 // loop_header_branch
    %13 = sbr.rel (%p11) target = $region8
  $region5: #{basic_block.3} parent=0 // loop_body
    %s15 = ssub.s32 %s10, 1
    %s16 = ssub.s32 %s10, 2
    %s17 = sadd.s32 %s10, 1
    %s18 = ssub.s32 %s10, %s17
    %p19 = scmp.eq.s32.totalorder %s18, 0
    %s21 = sadd.s32 %s20, 1
    %s22 = scalar_select %p19, %s20, %s21
    %p25 = pneg %p19
    %p26 = scmp.eq.s32.totalorder %s10, 1
    %p27 = por %p25, %p26
    %p28 = scmp.ne.s32.totalorder %s20, %s23
    %p29 = scmp.eq.s32.totalorder %s10, 0
    %p30 = por %p28, %p29
    %p31 = scmp.ne.s32.totalorder %s20, %s23
    %p32 = scmp.eq.s32.totalorder %s15, 1
    %p33 = por %p31, %p32
    %p34 = scmp.ne.s32.totalorder %s23, %s24
    %p35 = scmp.eq.s32.totalorder %s15, 0
    %p36 = por %p34, %p35
    %p37 = scmp.ne.s32.totalorder %s23, %s24
    %p38 = scmp.eq.s32.totalorder %s16, 1
    %p39 = por %p37, %p38
    %p41 = scmp.ne.s32.totalorder %s24, %s40
    %p42 = scmp.eq.s32.totalorder %s16, 0
    %p43 = por %p41, %p42
    %s45 = sadd.s32 %s44, 1
    %p48 = scmp.eq.s32.totalorder %s10, 1
    %p49 = scmp.ne.s32.totalorder %s44, %s46
    %p50 = scmp.eq.s32.totalorder %s10, 0
    %p51 = por %p49, %p50
    %p52 = scmp.ne.s32.totalorder %s44, %s46
    %p53 = scmp.eq.s32.totalorder %s15, 1
    %p54 = por %p52, %p53
    %p55 = scmp.ne.s32.totalorder %s46, %s47
    %p56 = scmp.eq.s32.totalorder %s15, 0
    %p57 = por %p55, %p56
    %p58 = scmp.ne.s32.totalorder %s46, %s47
    %p59 = scmp.eq.s32.totalorder %s16, 1
    %p60 = por %p58, %p59
    %p62 = scmp.ne.s32.totalorder %s47, %s61
    %p63 = scmp.eq.s32.totalorder %s16, 0
    %p64 = por %p62, %p63
    %s66 = sadd.s32 %s65, 1
    %p69 = scmp.eq.s32.totalorder %s10, 1
    %p70 = scmp.ne.s32.totalorder %s65, %s67
    %p71 = scmp.eq.s32.totalorder %s10, 0
    %p72 = por %p70, %p71
    %p73 = scmp.ne.s32.totalorder %s65, %s67
    %p74 = scmp.eq.s32.totalorder %s15, 1
    %p75 = por %p73, %p74
    %p76 = scmp.ne.s32.totalorder %s67, %s68
    %p77 = scmp.eq.s32.totalorder %s15, 0
    %p78 = por %p76, %p77
    %p79 = scmp.ne.s32.totalorder %s67, %s68
    %p80 = scmp.eq.s32.totalorder %s16, 1
    %p81 = por %p79, %p80
    %p83 = scmp.ne.s32.totalorder %s68, %s82
    %p84 = scmp.eq.s32.totalorder %s16, 0
    %p85 = por %p83, %p84
    %s86 = ssub.s32 %s10, %s17
    %p87 = scmp.eq.s32.totalorder %s86, 0
    %s89 = sadd.s32 %s88, 1
    %s90 = scalar_select %p87, %s88, %s89
    %p93 = pneg %p87
    %p94 = scmp.eq.s32.totalorder %s10, 1
    %p95 = por %p93, %p94
    %p96 = scmp.ne.s32.totalorder %s88, %s91
    %p97 = scmp.eq.s32.totalorder %s10, 0
    %p98 = por %p96, %p97
    %p99 = scmp.ne.s32.totalorder %s88, %s91
    %p100 = scmp.eq.s32.totalorder %s15, 1
    %p101 = por %p99, %p100
    %p102 = scmp.ne.s32.totalorder %s91, %s92
    %p103 = scmp.eq.s32.totalorder %s15, 0
    %p104 = por %p102, %p103
    %p105 = scmp.ne.s32.totalorder %s91, %s92
    %p106 = scmp.eq.s32.totalorder %s16, 1
    %p107 = por %p105, %p106
    %p109 = scmp.ne.s32.totalorder %s92, %s108
    %p110 = scmp.eq.s32.totalorder %s16, 0
    %p111 = por %p109, %p110
    %s112 = ssub.s32 %s10, %s17
    %p113 = scmp.eq.s32.totalorder %s112, 0
    %s115 = sadd.s32 %s114, 1
    %s116 = scalar_select %p113, %s114, %s115
    %p119 = pneg %p113
    %p120 = scmp.eq.s32.totalorder %s10, 1
    %p121 = por %p119, %p120
    %p122 = scmp.ne.s32.totalorder %s114, %s117
    %p123 = scmp.eq.s32.totalorder %s10, 0
    %p124 = por %p122, %p123
    %p125 = scmp.ne.s32.totalorder %s114, %s117
    %p126 = scmp.eq.s32.totalorder %s15, 1
    %p127 = por %p125, %p126
    %p128 = scmp.ne.s32.totalorder %s117, %s118
    %p129 = scmp.eq.s32.totalorder %s15, 0
    %p130 = por %p128, %p129
    %p131 = scmp.ne.s32.totalorder %s117, %s118
    %p132 = scmp.eq.s32.totalorder %s16, 1
    %p133 = por %p131, %p132
    %p135 = scmp.ne.s32.totalorder %s118, %s134
    %p136 = scmp.eq.s32.totalorder %s16, 0
    %p137 = por %p135, %p136
    %p138 = scmp.le.s32.totalorder 1, %s10
    %p139 = scmp.lt.s32.totalorder %s10, 3
    %p140 = pnand %p138, %p139
    %p141 = pneg %p140
    // Predicated region
    $region9: #{basic_block.3} parent=5 // pred_check
      _
    $region10: #{basic_block.3} parent=5 // pred_check_branch
      %143 = sbr.rel (%p140) target = $region12
    $region11: #{basic_block.3} parent=5 // pred_region
      %s144 = ssub.s32 %s10, 1
      // Predicated region
      $region13: #{basic_block.3} parent=11 // pred_check
        %p145 = pneg %p57
      $region14: #{basic_block.3} parent=11 // pred_check_branch
        %147 = sbr.rel (%p145) target = $region16
      $region15: #{basic_block.3} parent=11 // pred_region
        _
      $region16: #{basic_block.3} parent=11 // pred_fallthru
        _
      // Predicated region
      $region17: #{basic_block.3} parent=11 // pred_check
        %p148 = pneg %p78
      $region18: #{basic_block.3} parent=11 // pred_check_branch
        %150 = sbr.rel (%p148) target = $region20
      $region19: #{basic_block.3} parent=11 // pred_region
        _
      $region20: #{basic_block.3} parent=11 // pred_fallthru
        _
    $region12: #{basic_block.3} parent=5 // pred_fallthru
      _
    %p151 = scmp.lt.s32.totalorder %s10, 2
    // Predicated region
    $region21: #{basic_block.3} parent=5 // pred_check
      %p152 = pneg %p151
    $region22: #{basic_block.3} parent=5 // pred_check_branch
      %154 = sbr.rel (%p152) target = $region24
    $region23: #{basic_block.3} parent=5 // pred_region
      // Predicated region
      $region25: #{basic_block.3} parent=23 // pred_check
        %p155 = pneg %p30
      $region26: #{basic_block.3} parent=23 // pred_check_branch
        %157 = sbr.rel (%p155) target = $region28
      $region27: #{basic_block.3} parent=23 // pred_region
        %p158 = scmp.lt.s32.totalorder %s10, 1
        %s159 = scalar_select %p158, %s10, 1
        %s160 = smul.addr %s159, 32
        %s161 = smul.addr %s160, 4
        %s162 = scalar_lea.vmem %s0, %s161
      $region28: #{basic_block.3} parent=23 // pred_fallthru
        _
      // Predicated region
      $region29: #{basic_block.3} parent=23 // pred_check
        %p163 = pneg %p98
      $region30: #{basic_block.3} parent=23 // pred_check_branch
        %165 = sbr.rel (%p163) target = $region32
      $region31: #{basic_block.3} parent=23 // pred_region
        %p166 = scmp.lt.s32.totalorder %s10, 1
        %s167 = scalar_select %p166, %s10, 1
        %s168 = smul.addr %s167, 32
        %s169 = smul.addr %s168, 8
        %s170 = scalar_lea.vmem %s3, %s169
      $region32: #{basic_block.3} parent=23 // pred_fallthru
        _
    $region24: #{basic_block.3} parent=5 // pred_fallthru
      _
    %p171 = scmp.le.s32.totalorder 1, %s10
    %p172 = scmp.lt.s32.totalorder %s10, 3
    %p173 = pnand %p171, %p172
    %p174 = pneg %p173
    // Predicated region
    $region33: #{basic_block.3} parent=5 // pred_check
      _
    $region34: #{basic_block.3} parent=5 // pred_check_branch
      %176 = sbr.rel (%p173) target = $region36
    $region35: #{basic_block.3} parent=5 // pred_region
      %s177 = ssub.s32 %s10, 1
      %p178 = scmp.lt.s32.totalorder %s15, 1
      %s179 = scalar_select %p178, %s15, 1
      %s180 = smul.addr %s179, 32
      %s181 = smul.addr %s180, 4
      %s182 = scalar_lea.vmem %s0, %s181
      %p183 = pneg %p36
      %p184 = pneg %p33
      %p185 = pneg %p57
      %p186 = pneg %p54
      %p187 = pneg %p78
      %p188 = pneg %p75
      %p189 = scmp.lt.s32.totalorder %s15, 1
      %s190 = scalar_select %p189, %s15, 1
      %s191 = smul.addr %s190, 32
      %s192 = smul.addr %s191, 8
      %s193 = scalar_lea.vmem %s3, %s192
      %p194 = pneg %p104
      %p195 = pneg %p101
      %p196 = pneg %p130
      %p197 = pneg %p127
      %p198 = scmp.lt.s32.totalorder %s15, 1
      %s199 = scalar_select %p198, %s15, 1
      %s200 = smul.addr %s199, 32
      %s201 = smul.addr %s200, 8
      %s202 = scalar_lea.vmem %s4, %s201
      %p203 = scmp.lt.s32.totalorder %s15, 1
      %s204 = scalar_select %p203, %s15, 1
      %s205 = smul.addr %s204, 32
      %s206 = smul.addr %s205, 4
      %s207 = scalar_lea.vmem %s0, %s206
      %p208 = scmp.lt.s32.totalorder %s15, 1
      %s209 = scalar_select %p208, %s15, 1
      %s210 = smul.addr %s209, 32
      %s211 = smul.addr %s210, 8
      %s212 = scalar_lea.vmem %s3, %s211
      %p213 = scmp.lt.s32.totalorder %s15, 1
      %s214 = scalar_select %p213, %s15, 1
      %s215 = smul.addr %s214, 32
      %s216 = smul.addr %s215, 8
      %s217 = scalar_lea.vmem %s4, %s216
      %v219 = vld [vmem:[%s207] sm:$0xf]
      %v220 = vld [vmem:[%s207 + $0x4] sm:$0xf]
      %v221 = vld [vmem:[%s207 + $0x8] sm:$0xf]
      %v222 = vld [vmem:[%s207 + $0xc] sm:$0xf]
      %v223 = vld [vmem:[%s207 + $0x10] sm:$0xf]
      %v224 = vld [vmem:[%s207 + $0x14] sm:$0xf]
      %v225 = vld [vmem:[%s207 + $0x18] sm:$0xf]
      %v226 = vld [vmem:[%s207 + $0x1c] sm:$0xf]
      %v227 = vld [vmem:[%s207 + $0x20] sm:$0xf]
      %v228 = vld [vmem:[%s207 + $0x24] sm:$0xf]
      %v229 = vld [vmem:[%s207 + $0x28] sm:$0xf]
      %v230 = vld [vmem:[%s207 + $0x2c] sm:$0xf]
      %v231 = vld [vmem:[%s207 + $0x30] sm:$0xf]
      %v232 = vld [vmem:[%s207 + $0x34] sm:$0xf]
      %v233 = vld [vmem:[%s207 + $0x38] sm:$0xf]
      %v234 = vld [vmem:[%s207 + $0x3c] sm:$0xf]
      %v235 = vld [vmem:[%s207 + $0x40] sm:$0xf]
      %v236 = vld [vmem:[%s207 + $0x44] sm:$0xf]
      %v237 = vld [vmem:[%s207 + $0x48] sm:$0xf]
      %v238 = vld [vmem:[%s207 + $0x4c] sm:$0xf]
      %v239 = vld [vmem:[%s207 + $0x50] sm:$0xf]
      %v240 = vld [vmem:[%s207 + $0x54] sm:$0xf]
      %v241 = vld [vmem:[%s207 + $0x58] sm:$0xf]
      %v242 = vld [vmem:[%s207 + $0x5c] sm:$0xf]
      %v243 = vld [vmem:[%s207 + $0x60] sm:$0xf]
      %v244 = vld [vmem:[%s207 + $0x64] sm:$0xf]
      %v245 = vld [vmem:[%s207 + $0x68] sm:$0xf]
      %v246 = vld [vmem:[%s207 + $0x6c] sm:$0xf]
      %v247 = vld [vmem:[%s207 + $0x70] sm:$0xf]
      %v248 = vld [vmem:[%s207 + $0x74] sm:$0xf]
      %v249 = vld [vmem:[%s207 + $0x78] sm:$0xf]
      %v250 = vld [vmem:[%s207 + $0x7c] sm:$0xf]
      %vm251 = vcmask 31744
      %252 = vst.msk [vmem:[#allocation2] sm:$0xff] %vm251, 0
      %253 = vst.msk [vmem:[#allocation2 + $0x8] sm:$0xff] %vm251, 0
      %s254 = scalar_lea.vmem [#allocation2], 272
      %255 = vst.msk [vmem:[%s254] sm:$0xff] %vm251, 0
      %256 = vst.msk [vmem:[%s254 + $0x8] sm:$0xff] %vm251, 0
      %s257 = scalar_lea.vmem [#allocation2], 16
      %vm258 = vcmask 27648
      %259 = vst.msk [vmem:[%s257] sm:$0xf] %vm258, 0
      %260 = vst.msk [vmem:[%s257 + $0x10] sm:$0xf] %vm258, 0
      %261 = vst.msk [vmem:[%s257 + $0x20] sm:$0xf] %vm258, 0
      %262 = vst.msk [vmem:[%s257 + $0x30] sm:$0xf] %vm258, 0
      %263 = vst.msk [vmem:[%s257 + $0x40] sm:$0xf] %vm258, 0
      %264 = vst.msk [vmem:[%s257 + $0x50] sm:$0xf] %vm258, 0
      %265 = vst.msk [vmem:[%s257 + $0x60] sm:$0xf] %vm258, 0
      %266 = vst.msk [vmem:[%s257 + $0x70] sm:$0xf] %vm258, 0
      %267 = vst.msk [vmem:[%s257 + $0x80] sm:$0xf] %vm258, 0
      %268 = vst.msk [vmem:[%s257 + $0x90] sm:$0xf] %vm258, 0
      %269 = vst.msk [vmem:[%s257 + $0xa0] sm:$0xf] %vm258, 0
      %270 = vst.msk [vmem:[%s257 + $0xb0] sm:$0xf] %vm258, 0
      %271 = vst.msk [vmem:[%s257 + $0xc0] sm:$0xf] %vm258, 0
      %272 = vst.msk [vmem:[%s257 + $0xd0] sm:$0xf] %vm258, 0
      %273 = vst.msk [vmem:[%s257 + $0xe0] sm:$0xf] %vm258, 0
      %274 = vst.msk [vmem:[%s257 + $0xf0] sm:$0xf] %vm258, 0
      %vm275 = vcmask 31748
      %276 = vst.msk [vmem:[%s257 + $0x8] sm:$0xf0] %vm275, 0
      %277 = vst.msk [vmem:[%s257 + $0x18] sm:$0xf0] %vm275, 0
      %278 = vst.msk [vmem:[%s257 + $0x28] sm:$0xf0] %vm275, 0
      %279 = vst.msk [vmem:[%s257 + $0x38] sm:$0xf0] %vm275, 0
      %280 = vst.msk [vmem:[%s257 + $0x48] sm:$0xf0] %vm275, 0
      %281 = vst.msk [vmem:[%s257 + $0x58] sm:$0xf0] %vm275, 0
      %282 = vst.msk [vmem:[%s257 + $0x68] sm:$0xf0] %vm275, 0
      %283 = vst.msk [vmem:[%s257 + $0x78] sm:$0xf0] %vm275, 0
      %284 = vst.msk [vmem:[%s257 + $0x88] sm:$0xf0] %vm275, 0
      %285 = vst.msk [vmem:[%s257 + $0x98] sm:$0xf0] %vm275, 0
      %286 = vst.msk [vmem:[%s257 + $0xa8] sm:$0xf0] %vm275, 0
      %287 = vst.msk [vmem:[%s257 + $0xb8] sm:$0xf0] %vm275, 0
      %288 = vst.msk [vmem:[%s257 + $0xc8] sm:$0xf0] %vm275, 0
      %289 = vst.msk [vmem:[%s257 + $0xd8] sm:$0xf0] %vm275, 0
      %290 = vst.msk [vmem:[%s257 + $0xe8] sm:$0xf0] %vm275, 0
      %291 = vst.msk [vmem:[%s257 + $0xf8] sm:$0xf0] %vm275, 0
      %v324 = vunpack.c.l.b16 %v219
      %v325 = vunpack.c.l.b16 %v220
      %v326 = vunpack.c.l.b16 %v221
      %v327 = vunpack.c.l.b16 %v222
      %v328 = vunpack.c.l.b16 %v223
      %v329 = vunpack.c.l.b16 %v224
      %v330 = vunpack.c.l.b16 %v225
      %v331 = vunpack.c.l.b16 %v226
      %v332 = vunpack.c.l.b16 %v227
      %v333 = vunpack.c.l.b16 %v228
      %v334 = vunpack.c.l.b16 %v229
      %v335 = vunpack.c.l.b16 %v230
      %v336 = vunpack.c.l.b16 %v231
      %v337 = vunpack.c.l.b16 %v232
      %v338 = vunpack.c.l.b16 %v233
      %v339 = vunpack.c.l.b16 %v234
      %v340 = vunpack.c.l.b16 %v235
      %v341 = vunpack.c.l.b16 %v236
      %v342 = vunpack.c.l.b16 %v237
      %v343 = vunpack.c.l.b16 %v238
      %v344 = vunpack.c.l.b16 %v239
      %v345 = vunpack.c.l.b16 %v240
      %v346 = vunpack.c.l.b16 %v241
      %v347 = vunpack.c.l.b16 %v242
      %v348 = vunpack.c.l.b16 %v243
      %v349 = vunpack.c.l.b16 %v244
      %v350 = vunpack.c.l.b16 %v245
      %v351 = vunpack.c.l.b16 %v246
      %v352 = vunpack.c.l.b16 %v247
      %v353 = vunpack.c.l.b16 %v248
      %v354 = vunpack.c.l.b16 %v249
      %v355 = vunpack.c.l.b16 %v250
      %v356 = vpack.c.b16 %v324, %v324
      %v357 = vpack.c.b16 %v325, %v325
      %v358 = vpack.c.b16 %v326, %v326
      %v359 = vpack.c.b16 %v327, %v327
      %v360 = vpack.c.b16 %v328, %v328
      %v361 = vpack.c.b16 %v329, %v329
      %v362 = vpack.c.b16 %v330, %v330
      %v363 = vpack.c.b16 %v331, %v331
      %v364 = vpack.c.b16 %v332, %v332
      %v365 = vpack.c.b16 %v333, %v333
      %v366 = vpack.c.b16 %v334, %v334
      %v367 = vpack.c.b16 %v335, %v335
      %v368 = vpack.c.b16 %v336, %v336
      %v369 = vpack.c.b16 %v337, %v337
      %v370 = vpack.c.b16 %v338, %v338
      %v371 = vpack.c.b16 %v339, %v339
      %v372 = vpack.c.b16 %v340, %v340
      %v373 = vpack.c.b16 %v341, %v341
      %v374 = vpack.c.b16 %v342, %v342
      %v375 = vpack.c.b16 %v343, %v343
      %v376 = vpack.c.b16 %v344, %v344
      %v377 = vpack.c.b16 %v345, %v345
      %v378 = vpack.c.b16 %v346, %v346
      %v379 = vpack.c.b16 %v347, %v347
      %v380 = vpack.c.b16 %v348, %v348
      %v381 = vpack.c.b16 %v349, %v349
      %v382 = vpack.c.b16 %v350, %v350
      %v383 = vpack.c.b16 %v351, %v351
      %v384 = vpack.c.b16 %v352, %v352
      %v385 = vpack.c.b16 %v353, %v353
      %v386 = vpack.c.b16 %v354, %v354
      %v387 = vpack.c.b16 %v355, %v355
      %420 = vst.msk [vmem:[%s257] sm:$0xf0] %vm275, %v356
      %421 = vst.msk [vmem:[%s257 + $0x8] sm:$0xf] %vm258, %v357
      %422 = vst.msk [vmem:[%s257 + $0x10] sm:$0xf0] %vm275, %v358
      %423 = vst.msk [vmem:[%s257 + $0x18] sm:$0xf] %vm258, %v359
      %424 = vst.msk [vmem:[%s257 + $0x20] sm:$0xf0] %vm275, %v360
      %425 = vst.msk [vmem:[%s257 + $0x28] sm:$0xf] %vm258, %v361
      %426 = vst.msk [vmem:[%s257 + $0x30] sm:$0xf0] %vm275, %v362
      %427 = vst.msk [vmem:[%s257 + $0x38] sm:$0xf] %vm258, %v363
      %428 = vst.msk [vmem:[%s257 + $0x40] sm:$0xf0] %vm275, %v364
      %429 = vst.msk [vmem:[%s257 + $0x48] sm:$0xf] %vm258, %v365
      %430 = vst.msk [vmem:[%s257 + $0x50] sm:$0xf0] %vm275, %v366
      %431 = vst.msk [vmem:[%s257 + $0x58] sm:$0xf] %vm258, %v367
      %432 = vst.msk [vmem:[%s257 + $0x60] sm:$0xf0] %vm275, %v368
      %433 = vst.msk [vmem:[%s257 + $0x68] sm:$0xf] %vm258, %v369
      %434 = vst.msk [vmem:[%s257 + $0x70] sm:$0xf0] %vm275, %v370
      %435 = vst.msk [vmem:[%s257 + $0x78] sm:$0xf] %vm258, %v371
      %436 = vst.msk [vmem:[%s257 + $0x80] sm:$0xf0] %vm275, %v372
      %437 = vst.msk [vmem:[%s257 + $0x88] sm:$0xf] %vm258, %v373
      %438 = vst.msk [vmem:[%s257 + $0x90] sm:$0xf0] %vm275, %v374
      %439 = vst.msk [vmem:[%s257 + $0x98] sm:$0xf] %vm258, %v375
      %440 = vst.msk [vmem:[%s257 + $0xa0] sm:$0xf0] %vm275, %v376
      %441 = vst.msk [vmem:[%s257 + $0xa8] sm:$0xf] %vm258, %v377
      %442 = vst.msk [vmem:[%s257 + $0xb0] sm:$0xf0] %vm275, %v378
      %443 = vst.msk [vmem:[%s257 + $0xb8] sm:$0xf] %vm258, %v379
      %444 = vst.msk [vmem:[%s257 + $0xc0] sm:$0xf0] %vm275, %v380
      %445 = vst.msk [vmem:[%s257 + $0xc8] sm:$0xf] %vm258, %v381
      %446 = vst.msk [vmem:[%s257 + $0xd0] sm:$0xf0] %vm275, %v382
      %447 = vst.msk [vmem:[%s257 + $0xd8] sm:$0xf] %vm258, %v383
      %448 = vst.msk [vmem:[%s257 + $0xe0] sm:$0xf0] %vm275, %v384
      %449 = vst.msk [vmem:[%s257 + $0xe8] sm:$0xf] %vm258, %v385
      %450 = vst.msk [vmem:[%s257 + $0xf0] sm:$0xf0] %vm275, %v386
      %451 = vst.msk [vmem:[%s257 + $0xf8] sm:$0xf] %vm258, %v387
      %v452 = vld [vmem:[#allocation2] sm:$0xff]
      %v453 = vld [vmem:[#allocation2 + $0x8] sm:$0xff]
      %v454 = vld [vmem:[#allocation2 + $0x10] sm:$0xff]
      %v455 = vld [vmem:[#allocation2 + $0x18] sm:$0xff]
      %v456 = vld [vmem:[#allocation2 + $0x20] sm:$0xff]
      %v457 = vld [vmem:[#allocation2 + $0x28] sm:$0xff]
      %v458 = vld [vmem:[#allocation2 + $0x30] sm:$0xff]
      %v459 = vld [vmem:[#allocation2 + $0x38] sm:$0xff]
      %v460 = vld [vmem:[#allocation2 + $0x40] sm:$0xff]
      %v461 = vld [vmem:[#allocation2 + $0x48] sm:$0xff]
      %v462 = vld [vmem:[#allocation2 + $0x50] sm:$0xff]
      %v463 = vld [vmem:[#allocation2 + $0x58] sm:$0xff]
      %v464 = vld [vmem:[#allocation2 + $0x60] sm:$0xff]
      %v465 = vld [vmem:[#allocation2 + $0x68] sm:$0xff]
      %v466 = vld [vmem:[#allocation2 + $0x70] sm:$0xff]
      %v467 = vld [vmem:[#allocation2 + $0x78] sm:$0xff]
      %v468 = vld [vmem:[#allocation2 + $0x80] sm:$0xff]
      %v469 = vld [vmem:[#allocation2 + $0x88] sm:$0xff]
      %v470 = vld [vmem:[#allocation2 + $0x90] sm:$0xff]
      %v471 = vld [vmem:[#allocation2 + $0x98] sm:$0xff]
      %v472 = vld [vmem:[#allocation2 + $0xa0] sm:$0xff]
      %v473 = vld [vmem:[#allocation2 + $0xa8] sm:$0xff]
      %v474 = vld [vmem:[#allocation2 + $0xb0] sm:$0xff]
      %v475 = vld [vmem:[#allocation2 + $0xb8] sm:$0xff]
      %v476 = vld [vmem:[#allocation2 + $0xc0] sm:$0xff]
      %v477 = vld [vmem:[#allocation2 + $0xc8] sm:$0xff]
      %v478 = vld [vmem:[#allocation2 + $0xd0] sm:$0xff]
      %v479 = vld [vmem:[#allocation2 + $0xd8] sm:$0xff]
      %v480 = vld [vmem:[#allocation2 + $0xe0] sm:$0xff]
      %v481 = vld [vmem:[#allocation2 + $0xe8] sm:$0xff]
      %v482 = vld [vmem:[#allocation2 + $0xf0] sm:$0xff]
      %v483 = vld [vmem:[#allocation2 + $0xf8] sm:$0xff]
      %vm484 = vsmask.f32 7424
      %v486 = vshrl.u32 %v452, 16
      %v488 = vshll.u32 %v452, 16
      %v490 = vrot.slane %v488, 1
      %v491 = vor.u32 %v486, %v490
      %v493 = vshll.u32 %v453, 16
      %v495 = vrot.slane %v493, 1
      %v496 = vsel %vm484, %v491, %v495
      %v497 = vshrl.u32 %v453, 16
      %v499 = vor.u32 %v497, %v495
      %v501 = vshrl.u32 %v454, 16
      %v503 = vshll.u32 %v454, 16
      %v505 = vrot.slane %v503, 1
      %v506 = vor.u32 %v501, %v505
      %v508 = vshll.u32 %v455, 16
      %v510 = vrot.slane %v508, 1
      %v511 = vsel %vm484, %v506, %v510
      %v512 = vshrl.u32 %v455, 16
      %v514 = vor.u32 %v512, %v510
      %v516 = vshrl.u32 %v456, 16
      %v518 = vshll.u32 %v456, 16
      %v520 = vrot.slane %v518, 1
      %v521 = vor.u32 %v516, %v520
      %v523 = vshll.u32 %v457, 16
      %v525 = vrot.slane %v523, 1
      %v526 = vsel %vm484, %v521, %v525
      %v527 = vshrl.u32 %v457, 16
      %v529 = vor.u32 %v527, %v525
      %v531 = vshrl.u32 %v458, 16
      %v533 = vshll.u32 %v458, 16
      %v535 = vrot.slane %v533, 1
      %v536 = vor.u32 %v531, %v535
      %v538 = vshll.u32 %v459, 16
      %v540 = vrot.slane %v538, 1
      %v541 = vsel %vm484, %v536, %v540
      %v542 = vshrl.u32 %v459, 16
      %v544 = vor.u32 %v542, %v540
      %v546 = vshrl.u32 %v460, 16
      %v548 = vshll.u32 %v460, 16
      %v550 = vrot.slane %v548, 1
      %v551 = vor.u32 %v546, %v550
      %v553 = vshll.u32 %v461, 16
      %v555 = vrot.slane %v553, 1
      %v556 = vsel %vm484, %v551, %v555
      %v557 = vshrl.u32 %v461, 16
      %v559 = vor.u32 %v557, %v555
      %v561 = vshrl.u32 %v462, 16
      %v563 = vshll.u32 %v462, 16
      %v565 = vrot.slane %v563, 1
      %v566 = vor.u32 %v561, %v565
      %v568 = vshll.u32 %v463, 16
      %v570 = vrot.slane %v568, 1
      %v571 = vsel %vm484, %v566, %v570
      %v572 = vshrl.u32 %v463, 16
      %v574 = vor.u32 %v572, %v570
      %v576 = vshrl.u32 %v464, 16
      %v578 = vshll.u32 %v464, 16
      %v580 = vrot.slane %v578, 1
      %v581 = vor.u32 %v576, %v580
      %v583 = vshll.u32 %v465, 16
      %v585 = vrot.slane %v583, 1
      %v586 = vsel %vm484, %v581, %v585
      %v587 = vshrl.u32 %v465, 16
      %v589 = vor.u32 %v587, %v585
      %v591 = vshrl.u32 %v466, 16
      %v593 = vshll.u32 %v466, 16
      %v595 = vrot.slane %v593, 1
      %v596 = vor.u32 %v591, %v595
      %v598 = vshll.u32 %v467, 16
      %v600 = vrot.slane %v598, 1
      %v601 = vsel %vm484, %v596, %v600
      %v602 = vshrl.u32 %v467, 16
      %v604 = vor.u32 %v602, %v600
      %v606 = vshrl.u32 %v468, 16
      %v608 = vshll.u32 %v468, 16
      %v610 = vrot.slane %v608, 1
      %v611 = vor.u32 %v606, %v610
      %v613 = vshll.u32 %v469, 16
      %v615 = vrot.slane %v613, 1
      %v616 = vsel %vm484, %v611, %v615
      %v617 = vshrl.u32 %v469, 16
      %v619 = vor.u32 %v617, %v615
      %v621 = vshrl.u32 %v470, 16
      %v623 = vshll.u32 %v470, 16
      %v625 = vrot.slane %v623, 1
      %v626 = vor.u32 %v621, %v625
      %v628 = vshll.u32 %v471, 16
      %v630 = vrot.slane %v628, 1
      %v631 = vsel %vm484, %v626, %v630
      %v632 = vshrl.u32 %v471, 16
      %v634 = vor.u32 %v632, %v630
      %v636 = vshrl.u32 %v472, 16
      %v638 = vshll.u32 %v472, 16
      %v640 = vrot.slane %v638, 1
      %v641 = vor.u32 %v636, %v640
      %v643 = vshll.u32 %v473, 16
      %v645 = vrot.slane %v643, 1
      %v646 = vsel %vm484, %v641, %v645
      %v647 = vshrl.u32 %v473, 16
      %v649 = vor.u32 %v647, %v645
      %v651 = vshrl.u32 %v474, 16
      %v653 = vshll.u32 %v474, 16
      %v655 = vrot.slane %v653, 1
      %v656 = vor.u32 %v651, %v655
      %v658 = vshll.u32 %v475, 16
      %v660 = vrot.slane %v658, 1
      %v661 = vsel %vm484, %v656, %v660
      %v662 = vshrl.u32 %v475, 16
      %v664 = vor.u32 %v662, %v660
      %v666 = vshrl.u32 %v476, 16
      %v668 = vshll.u32 %v476, 16
      %v670 = vrot.slane %v668, 1
      %v671 = vor.u32 %v666, %v670
      %v673 = vshll.u32 %v477, 16
      %v675 = vrot.slane %v673, 1
      %v676 = vsel %vm484, %v671, %v675
      %v677 = vshrl.u32 %v477, 16
      %v679 = vor.u32 %v677, %v675
      %v681 = vshrl.u32 %v478, 16
      %v683 = vshll.u32 %v478, 16
      %v685 = vrot.slane %v683, 1
      %v686 = vor.u32 %v681, %v685
      %v688 = vshll.u32 %v479, 16
      %v690 = vrot.slane %v688, 1
      %v691 = vsel %vm484, %v686, %v690
      %v692 = vshrl.u32 %v479, 16
      %v694 = vor.u32 %v692, %v690
      %v696 = vshrl.u32 %v480, 16
      %v698 = vshll.u32 %v480, 16
      %v700 = vrot.slane %v698, 1
      %v701 = vor.u32 %v696, %v700
      %v703 = vshll.u32 %v481, 16
      %v705 = vrot.slane %v703, 1
      %v706 = vsel %vm484, %v701, %v705
      %v707 = vshrl.u32 %v481, 16
      %v709 = vor.u32 %v707, %v705
      %v711 = vshrl.u32 %v482, 16
      %v713 = vshll.u32 %v482, 16
      %v715 = vrot.slane %v713, 1
      %v716 = vor.u32 %v711, %v715
      %v718 = vshll.u32 %v483, 16
      %v720 = vrot.slane %v718, 1
      %v721 = vsel %vm484, %v716, %v720
      %v722 = vshrl.u32 %v483, 16
      %v724 = vor.u32 %v722, %v720
      %725 = vrot.lane.b32.xlu0 %v496, 4
      %v726 = vpop.permute.xlu0 %725
      %727 = vrot.lane.b32.xlu0 %v499, 4
      %v728 = vpop.permute.xlu0 %727
      %729 = vrot.lane.b32.xlu0 %v511, 4
      %v730 = vpop.permute.xlu0 %729
      %731 = vrot.lane.b32.xlu0 %v514, 4
      %v732 = vpop.permute.xlu0 %731
      %733 = vrot.lane.b32.xlu0 %v526, 4
      %v734 = vpop.permute.xlu0 %733
      %735 = vrot.lane.b32.xlu0 %v529, 4
      %v736 = vpop.permute.xlu0 %735
      %737 = vrot.lane.b32.xlu0 %v541, 4
      %v738 = vpop.permute.xlu0 %737
      %739 = vrot.lane.b32.xlu0 %v544, 4
      %v740 = vpop.permute.xlu0 %739
      %741 = vrot.lane.b32.xlu0 %v556, 4
      %v742 = vpop.permute.xlu0 %741
      %743 = vrot.lane.b32.xlu0 %v559, 4
      %v744 = vpop.permute.xlu0 %743
      %745 = vrot.lane.b32.xlu0 %v571, 4
      %v746 = vpop.permute.xlu0 %745
      %747 = vrot.lane.b32.xlu0 %v574, 4
      %v748 = vpop.permute.xlu0 %747
      %749 = vrot.lane.b32.xlu0 %v586, 4
      %v750 = vpop.permute.xlu0 %749
      %751 = vrot.lane.b32.xlu0 %v589, 4
      %v752 = vpop.permute.xlu0 %751
      %753 = vrot.lane.b32.xlu0 %v601, 4
      %v754 = vpop.permute.xlu0 %753
      %755 = vrot.lane.b32.xlu0 %v604, 4
      %v756 = vpop.permute.xlu0 %755
      %757 = vrot.lane.b32.xlu0 %v616, 4
      %v758 = vpop.permute.xlu0 %757
      %759 = vrot.lane.b32.xlu0 %v619, 4
      %v760 = vpop.permute.xlu0 %759
      %761 = vrot.lane.b32.xlu0 %v631, 4
      %v762 = vpop.permute.xlu0 %761
      %763 = vrot.lane.b32.xlu0 %v634, 4
      %v764 = vpop.permute.xlu0 %763
      %765 = vrot.lane.b32.xlu0 %v646, 4
      %v766 = vpop.permute.xlu0 %765
      %767 = vrot.lane.b32.xlu0 %v649, 4
      %v768 = vpop.permute.xlu0 %767
      %769 = vrot.lane.b32.xlu0 %v661, 4
      %v770 = vpop.permute.xlu0 %769
      %771 = vrot.lane.b32.xlu0 %v664, 4
      %v772 = vpop.permute.xlu0 %771
      %773 = vrot.lane.b32.xlu0 %v676, 4
      %v774 = vpop.permute.xlu0 %773
      %775 = vrot.lane.b32.xlu0 %v679, 4
      %v776 = vpop.permute.xlu0 %775
      %777 = vrot.lane.b32.xlu0 %v691, 4
      %v778 = vpop.permute.xlu0 %777
      %779 = vrot.lane.b32.xlu0 %v694, 4
      %v780 = vpop.permute.xlu0 %779
      %781 = vrot.lane.b32.xlu0 %v706, 4
      %v782 = vpop.permute.xlu0 %781
      %783 = vrot.lane.b32.xlu0 %v709, 4
      %v784 = vpop.permute.xlu0 %783
      %785 = vrot.lane.b32.xlu0 %v721, 4
      %v786 = vpop.permute.xlu0 %785
      %787 = vrot.lane.b32.xlu0 %v724, 4
      %v788 = vpop.permute.xlu0 %787
      %vm821 = vcmask 1046528
      %v822 = vrot.slane %v452, 1
      %v823 = vrot.slane %v453, 1
      %v824 = vsel %vm821, %v822, %v823
      %v825 = vrot.slane %v454, 1
      %v826 = vrot.slane %v455, 1
      %v827 = vsel %vm821, %v825, %v826
      %v828 = vrot.slane %v456, 1
      %v829 = vrot.slane %v457, 1
      %v830 = vsel %vm821, %v828, %v829
      %v831 = vrot.slane %v458, 1
      %v832 = vrot.slane %v459, 1
      %v833 = vsel %vm821, %v831, %v832
      %v834 = vrot.slane %v460, 1
      %v835 = vrot.slane %v461, 1
      %v836 = vsel %vm821, %v834, %v835
      %v837 = vrot.slane %v462, 1
      %v838 = vrot.slane %v463, 1
      %v839 = vsel %vm821, %v837, %v838
      %v840 = vrot.slane %v464, 1
      %v841 = vrot.slane %v465, 1
      %v842 = vsel %vm821, %v840, %v841
      %v843 = vrot.slane %v466, 1
      %v844 = vrot.slane %v467, 1
      %v845 = vsel %vm821, %v843, %v844
      %v846 = vrot.slane %v468, 1
      %v847 = vrot.slane %v469, 1
      %v848 = vsel %vm821, %v846, %v847
      %v849 = vrot.slane %v470, 1
      %v850 = vrot.slane %v471, 1
      %v851 = vsel %vm821, %v849, %v850
      %v852 = vrot.slane %v472, 1
      %v853 = vrot.slane %v473, 1
      %v854 = vsel %vm821, %v852, %v853
      %v855 = vrot.slane %v474, 1
      %v856 = vrot.slane %v475, 1
      %v857 = vsel %vm821, %v855, %v856
      %v858 = vrot.slane %v476, 1
      %v859 = vrot.slane %v477, 1
      %v860 = vsel %vm821, %v858, %v859
      %v861 = vrot.slane %v478, 1
      %v862 = vrot.slane %v479, 1
      %v863 = vsel %vm821, %v861, %v862
      %v864 = vrot.slane %v480, 1
      %v865 = vrot.slane %v481, 1
      %v866 = vsel %vm821, %v864, %v865
      %v867 = vrot.slane %v482, 1
      %v868 = vrot.slane %v483, 1
      %v869 = vsel %vm821, %v867, %v868
      %870 = vrot.lane.b32.xlu0 %v824, 8
      %v871 = vpop.permute.xlu0 %870
      %872 = vrot.lane.b32.xlu0 %v823, 8
      %v873 = vpop.permute.xlu0 %872
      %874 = vrot.lane.b32.xlu0 %v827, 8
      %v875 = vpop.permute.xlu0 %874
      %876 = vrot.lane.b32.xlu0 %v826, 8
      %v877 = vpop.permute.xlu0 %876
      %878 = vrot.lane.b32.xlu0 %v830, 8
      %v879 = vpop.permute.xlu0 %878
      %880 = vrot.lane.b32.xlu0 %v829, 8
      %v881 = vpop.permute.xlu0 %880
      %882 = vrot.lane.b32.xlu0 %v833, 8
      %v883 = vpop.permute.xlu0 %882
      %884 = vrot.lane.b32.xlu0 %v832, 8
      %v885 = vpop.permute.xlu0 %884
      %886 = vrot.lane.b32.xlu0 %v836, 8
      %v887 = vpop.permute.xlu0 %886
      %888 = vrot.lane.b32.xlu0 %v835, 8
      %v889 = vpop.permute.xlu0 %888
      %890 = vrot.lane.b32.xlu0 %v839, 8
      %v891 = vpop.permute.xlu0 %890
      %892 = vrot.lane.b32.xlu0 %v838, 8
      %v893 = vpop.permute.xlu0 %892
      %894 = vrot.lane.b32.xlu0 %v842, 8
      %v895 = vpop.permute.xlu0 %894
      %896 = vrot.lane.b32.xlu0 %v841, 8
      %v897 = vpop.permute.xlu0 %896
      %898 = vrot.lane.b32.xlu0 %v845, 8
      %v899 = vpop.permute.xlu0 %898
      %900 = vrot.lane.b32.xlu0 %v844, 8
      %v901 = vpop.permute.xlu0 %900
      %902 = vrot.lane.b32.xlu0 %v848, 8
      %v903 = vpop.permute.xlu0 %902
      %904 = vrot.lane.b32.xlu0 %v847, 8
      %v905 = vpop.permute.xlu0 %904
      %906 = vrot.lane.b32.xlu0 %v851, 8
      %v907 = vpop.permute.xlu0 %906
      %908 = vrot.lane.b32.xlu0 %v850, 8
      %v909 = vpop.permute.xlu0 %908
      %910 = vrot.lane.b32.xlu0 %v854, 8
      %v911 = vpop.permute.xlu0 %910
      %912 = vrot.lane.b32.xlu0 %v853, 8
      %v913 = vpop.permute.xlu0 %912
      %914 = vrot.lane.b32.xlu0 %v857, 8
      %v915 = vpop.permute.xlu0 %914
      %916 = vrot.lane.b32.xlu0 %v856, 8
      %v917 = vpop.permute.xlu0 %916
      %918 = vrot.lane.b32.xlu0 %v860, 8
      %v919 = vpop.permute.xlu0 %918
      %920 = vrot.lane.b32.xlu0 %v859, 8
      %v921 = vpop.permute.xlu0 %920
      %922 = vrot.lane.b32.xlu0 %v863, 8
      %v923 = vpop.permute.xlu0 %922
      %924 = vrot.lane.b32.xlu0 %v862, 8
      %v925 = vpop.permute.xlu0 %924
      %926 = vrot.lane.b32.xlu0 %v866, 8
      %v927 = vpop.permute.xlu0 %926
      %928 = vrot.lane.b32.xlu0 %v865, 8
      %v929 = vpop.permute.xlu0 %928
      %930 = vrot.lane.b32.xlu0 %v869, 8
      %v931 = vpop.permute.xlu0 %930
      %932 = vrot.lane.b32.xlu0 %v868, 8
      %v933 = vpop.permute.xlu0 %932
      %v935 = vsel %vm251, %v452, %v726
      %v937 = vsel %vm251, %v453, %v728
      %v939 = vsel %vm251, %v454, %v730
      %v941 = vsel %vm251, %v455, %v732
      %v943 = vsel %vm251, %v456, %v734
      %v945 = vsel %vm251, %v457, %v736
      %v947 = vsel %vm251, %v458, %v738
      %v949 = vsel %vm251, %v459, %v740
      %v951 = vsel %vm251, %v460, %v742
      %v953 = vsel %vm251, %v461, %v744
      %v955 = vsel %vm251, %v462, %v746
      %v957 = vsel %vm251, %v463, %v748
      %v959 = vsel %vm251, %v464, %v750
      %v961 = vsel %vm251, %v465, %v752
      %v963 = vsel %vm251, %v466, %v754
      %v965 = vsel %vm251, %v467, %v756
      %v967 = vsel %vm251, %v468, %v758
      %v969 = vsel %vm251, %v469, %v760
      %v971 = vsel %vm251, %v470, %v762
      %v973 = vsel %vm251, %v471, %v764
      %v975 = vsel %vm251, %v472, %v766
      %v977 = vsel %vm251, %v473, %v768
      %v979 = vsel %vm251, %v474, %v770
      %v981 = vsel %vm251, %v475, %v772
      %v983 = vsel %vm251, %v476, %v774
      %v985 = vsel %vm251, %v477, %v776
      %v987 = vsel %vm251, %v478, %v778
      %v989 = vsel %vm251, %v479, %v780
      %v991 = vsel %vm251, %v480, %v782
      %v993 = vsel %vm251, %v481, %v784
      %v995 = vsel %vm251, %v482, %v786
      %v997 = vsel %vm251, %v483, %v788
      %vm998 = vcmask 64512
      %v1000 = vsel %vm998, %v935, %v871
      %v1002 = vsel %vm998, %v937, %v873
      %v1004 = vsel %vm998, %v939, %v875
      %v1006 = vsel %vm998, %v941, %v877
      %v1008 = vsel %vm998, %v943, %v879
      %v1010 = vsel %vm998, %v945, %v881
      %v1012 = vsel %vm998, %v947, %v883
      %v1014 = vsel %vm998, %v949, %v885
      %v1016 = vsel %vm998, %v951, %v887
      %v1018 = vsel %vm998, %v953, %v889
      %v1020 = vsel %vm998, %v955, %v891
      %v1022 = vsel %vm998, %v957, %v893
      %v1024 = vsel %vm998, %v959, %v895
      %v1026 = vsel %vm998, %v961, %v897
      %v1028 = vsel %vm998, %v963, %v899
      %v1030 = vsel %vm998, %v965, %v901
      %v1032 = vsel %vm998, %v967, %v903
      %v1034 = vsel %vm998, %v969, %v905
      %v1036 = vsel %vm998, %v971, %v907
      %v1038 = vsel %vm998, %v973, %v909
      %v1040 = vsel %vm998, %v975, %v911
      %v1042 = vsel %vm998, %v977, %v913
      %v1044 = vsel %vm998, %v979, %v915
      %v1046 = vsel %vm998, %v981, %v917
      %v1048 = vsel %vm998, %v983, %v919
      %v1050 = vsel %vm998, %v985, %v921
      %v1052 = vsel %vm998, %v987, %v923
      %v1054 = vsel %vm998, %v989, %v925
      %v1056 = vsel %vm998, %v991, %v927
      %v1058 = vsel %vm998, %v993, %v929
      %v1060 = vsel %vm998, %v995, %v931
      %v1062 = vsel %vm998, %v997, %v933
      %vm1063 = vsmask.f32 4352
      %v1064 = vshrl.u32 %v1000, 16
      %v1066 = vrot.slane %v1064, 3
      %v1067 = vshll.u32 %v1000, 16
      %v1069 = vrot.slane %v1067, 4
      %v1070 = vor.u32 %v1066, %v1069
      %v1071 = vshrl.u32 %v1002, 16
      %v1073 = vrot.slane %v1071, 3
      %v1074 = vshll.u32 %v1002, 16
      %v1076 = vrot.slane %v1074, 4
      %v1077 = vor.u32 %v1073, %v1076
      %v1078 = vsel %vm1063, %v1070, %v1077
      %v1079 = vshrl.u32 %v1004, 16
      %v1081 = vrot.slane %v1079, 3
      %v1082 = vshll.u32 %v1004, 16
      %v1084 = vrot.slane %v1082, 4
      %v1085 = vor.u32 %v1081, %v1084
      %v1086 = vshrl.u32 %v1006, 16
      %v1088 = vrot.slane %v1086, 3
      %v1089 = vshll.u32 %v1006, 16
      %v1091 = vrot.slane %v1089, 4
      %v1092 = vor.u32 %v1088, %v1091
      %v1093 = vsel %vm1063, %v1085, %v1092
      %v1094 = vshrl.u32 %v1008, 16
      %v1096 = vrot.slane %v1094, 3
      %v1097 = vshll.u32 %v1008, 16
      %v1099 = vrot.slane %v1097, 4
      %v1100 = vor.u32 %v1096, %v1099
      %v1101 = vshrl.u32 %v1010, 16
      %v1103 = vrot.slane %v1101, 3
      %v1104 = vshll.u32 %v1010, 16
      %v1106 = vrot.slane %v1104, 4
      %v1107 = vor.u32 %v1103, %v1106
      %v1108 = vsel %vm1063, %v1100, %v1107
      %v1109 = vshrl.u32 %v1012, 16
      %v1111 = vrot.slane %v1109, 3
      %v1112 = vshll.u32 %v1012, 16
      %v1114 = vrot.slane %v1112, 4
      %v1115 = vor.u32 %v1111, %v1114
      %v1116 = vshrl.u32 %v1014, 16
      %v1118 = vrot.slane %v1116, 3
      %v1119 = vshll.u32 %v1014, 16
      %v1121 = vrot.slane %v1119, 4
      %v1122 = vor.u32 %v1118, %v1121
      %v1123 = vsel %vm1063, %v1115, %v1122
      %v1124 = vshrl.u32 %v1016, 16
      %v1126 = vrot.slane %v1124, 3
      %v1127 = vshll.u32 %v1016, 16
      %v1129 = vrot.slane %v1127, 4
      %v1130 = vor.u32 %v1126, %v1129
      %v1131 = vshrl.u32 %v1018, 16
      %v1133 = vrot.slane %v1131, 3
      %v1134 = vshll.u32 %v1018, 16
      %v1136 = vrot.slane %v1134, 4
      %v1137 = vor.u32 %v1133, %v1136
      %v1138 = vsel %vm1063, %v1130, %v1137
      %v1139 = vshrl.u32 %v1020, 16
      %v1141 = vrot.slane %v1139, 3
      %v1142 = vshll.u32 %v1020, 16
      %v1144 = vrot.slane %v1142, 4
      %v1145 = vor.u32 %v1141, %v1144
      %v1146 = vshrl.u32 %v1022, 16
      %v1148 = vrot.slane %v1146, 3
      %v1149 = vshll.u32 %v1022, 16
      %v1151 = vrot.slane %v1149, 4
      %v1152 = vor.u32 %v1148, %v1151
      %v1153 = vsel %vm1063, %v1145, %v1152
      %v1154 = vshrl.u32 %v1024, 16
      %v1156 = vrot.slane %v1154, 3
      %v1157 = vshll.u32 %v1024, 16
      %v1159 = vrot.slane %v1157, 4
      %v1160 = vor.u32 %v1156, %v1159
      %v1161 = vshrl.u32 %v1026, 16
      %v1163 = vrot.slane %v1161, 3
      %v1164 = vshll.u32 %v1026, 16
      %v1166 = vrot.slane %v1164, 4
      %v1167 = vor.u32 %v1163, %v1166
      %v1168 = vsel %vm1063, %v1160, %v1167
      %v1169 = vshrl.u32 %v1028, 16
      %v1171 = vrot.slane %v1169, 3
      %v1172 = vshll.u32 %v1028, 16
      %v1174 = vrot.slane %v1172, 4
      %v1175 = vor.u32 %v1171, %v1174
      %v1176 = vshrl.u32 %v1030, 16
      %v1178 = vrot.slane %v1176, 3
      %v1179 = vshll.u32 %v1030, 16
      %v1181 = vrot.slane %v1179, 4
      %v1182 = vor.u32 %v1178, %v1181
      %v1183 = vsel %vm1063, %v1175, %v1182
      %v1184 = vshrl.u32 %v1032, 16
      %v1186 = vrot.slane %v1184, 3
      %v1187 = vshll.u32 %v1032, 16
      %v1189 = vrot.slane %v1187, 4
      %v1190 = vor.u32 %v1186, %v1189
      %v1191 = vshrl.u32 %v1034, 16
      %v1193 = vrot.slane %v1191, 3
      %v1194 = vshll.u32 %v1034, 16
      %v1196 = vrot.slane %v1194, 4
      %v1197 = vor.u32 %v1193, %v1196
      %v1198 = vsel %vm1063, %v1190, %v1197
      %v1199 = vshrl.u32 %v1036, 16
      %v1201 = vrot.slane %v1199, 3
      %v1202 = vshll.u32 %v1036, 16
      %v1204 = vrot.slane %v1202, 4
      %v1205 = vor.u32 %v1201, %v1204
      %v1206 = vshrl.u32 %v1038, 16
      %v1208 = vrot.slane %v1206, 3
      %v1209 = vshll.u32 %v1038, 16
      %v1211 = vrot.slane %v1209, 4
      %v1212 = vor.u32 %v1208, %v1211
      %v1213 = vsel %vm1063, %v1205, %v1212
      %v1214 = vshrl.u32 %v1040, 16
      %v1216 = vrot.slane %v1214, 3
      %v1217 = vshll.u32 %v1040, 16
      %v1219 = vrot.slane %v1217, 4
      %v1220 = vor.u32 %v1216, %v1219
      %v1221 = vshrl.u32 %v1042, 16
      %v1223 = vrot.slane %v1221, 3
      %v1224 = vshll.u32 %v1042, 16
      %v1226 = vrot.slane %v1224, 4
      %v1227 = vor.u32 %v1223, %v1226
      %v1228 = vsel %vm1063, %v1220, %v1227
      %v1229 = vshrl.u32 %v1044, 16
      %v1231 = vrot.slane %v1229, 3
      %v1232 = vshll.u32 %v1044, 16
      %v1234 = vrot.slane %v1232, 4
      %v1235 = vor.u32 %v1231, %v1234
      %v1236 = vshrl.u32 %v1046, 16
      %v1238 = vrot.slane %v1236, 3
      %v1239 = vshll.u32 %v1046, 16
      %v1241 = vrot.slane %v1239, 4
      %v1242 = vor.u32 %v1238, %v1241
      %v1243 = vsel %vm1063, %v1235, %v1242
      %v1244 = vshrl.u32 %v1048, 16
      %v1246 = vrot.slane %v1244, 3
      %v1247 = vshll.u32 %v1048, 16
      %v1249 = vrot.slane %v1247, 4
      %v1250 = vor.u32 %v1246, %v1249
      %v1251 = vshrl.u32 %v1050, 16
      %v1253 = vrot.slane %v1251, 3
      %v1254 = vshll.u32 %v1050, 16
      %v1256 = vrot.slane %v1254, 4
      %v1257 = vor.u32 %v1253, %v1256
      %v1258 = vsel %vm1063, %v1250, %v1257
      %v1259 = vshrl.u32 %v1052, 16
      %v1261 = vrot.slane %v1259, 3
      %v1262 = vshll.u32 %v1052, 16
      %v1264 = vrot.slane %v1262, 4
      %v1265 = vor.u32 %v1261, %v1264
      %v1266 = vshrl.u32 %v1054, 16
      %v1268 = vrot.slane %v1266, 3
      %v1269 = vshll.u32 %v1054, 16
      %v1271 = vrot.slane %v1269, 4
      %v1272 = vor.u32 %v1268, %v1271
      %v1273 = vsel %vm1063, %v1265, %v1272
      %v1274 = vshrl.u32 %v1056, 16
      %v1276 = vrot.slane %v1274, 3
      %v1277 = vshll.u32 %v1056, 16
      %v1279 = vrot.slane %v1277, 4
      %v1280 = vor.u32 %v1276, %v1279
      %v1281 = vshrl.u32 %v1058, 16
      %v1283 = vrot.slane %v1281, 3
      %v1284 = vshll.u32 %v1058, 16
      %v1286 = vrot.slane %v1284, 4
      %v1287 = vor.u32 %v1283, %v1286
      %v1288 = vsel %vm1063, %v1280, %v1287
      %v1289 = vshrl.u32 %v1060, 16
      %v1291 = vrot.slane %v1289, 3
      %v1292 = vshll.u32 %v1060, 16
      %v1294 = vrot.slane %v1292, 4
      %v1295 = vor.u32 %v1291, %v1294
      %v1296 = vshrl.u32 %v1062, 16
      %v1298 = vrot.slane %v1296, 3
      %v1299 = vshll.u32 %v1062, 16
      %v1301 = vrot.slane %v1299, 4
      %v1302 = vor.u32 %v1298, %v1301
      %v1303 = vsel %vm1063, %v1295, %v1302
      %v1304 = vld [vmem:[%s1] sm:$0xf]
      %v1305 = vld [vmem:[%s1 + $0x4] sm:$0x3]
      %v1306 = vld [vmem:[%s257] sm:$0xff]
      %v1307 = vld [vmem:[%s257 + $0x8] sm:$0xff]
      %v1308 = vld [vmem:[%s257 + $0x10] sm:$0xff]
      %v1309 = vld [vmem:[%s257 + $0x18] sm:$0xff]
      %v1310 = vld [vmem:[%s257 + $0x20] sm:$0xff]
      %v1311 = vld [vmem:[%s257 + $0x28] sm:$0xff]
      %v1312 = vld [vmem:[%s257 + $0x30] sm:$0xff]
      %v1313 = vld [vmem:[%s257 + $0x38] sm:$0xff]
      %v1314 = vld [vmem:[%s257 + $0x40] sm:$0xff]
      %v1315 = vld [vmem:[%s257 + $0x48] sm:$0xff]
      %v1316 = vld [vmem:[%s257 + $0x50] sm:$0xff]
      %v1317 = vld [vmem:[%s257 + $0x58] sm:$0xff]
      %v1318 = vld [vmem:[%s257 + $0x60] sm:$0xff]
      %v1319 = vld [vmem:[%s257 + $0x68] sm:$0xff]
      %v1320 = vld [vmem:[%s257 + $0x70] sm:$0xff]
      %v1321 = vld [vmem:[%s257 + $0x78] sm:$0xff]
      %v1322 = vld [vmem:[%s257 + $0x80] sm:$0xff]
      %v1323 = vld [vmem:[%s257 + $0x88] sm:$0xff]
      %v1324 = vld [vmem:[%s257 + $0x90] sm:$0xff]
      %v1325 = vld [vmem:[%s257 + $0x98] sm:$0xff]
      %v1326 = vld [vmem:[%s257 + $0xa0] sm:$0xff]
      %v1327 = vld [vmem:[%s257 + $0xa8] sm:$0xff]
      %v1328 = vld [vmem:[%s257 + $0xb0] sm:$0xff]
      %v1329 = vld [vmem:[%s257 + $0xb8] sm:$0xff]
      %v1330 = vld [vmem:[%s257 + $0xc0] sm:$0xff]
      %v1331 = vld [vmem:[%s257 + $0xc8] sm:$0xff]
      %v1332 = vld [vmem:[%s257 + $0xd0] sm:$0xff]
      %v1333 = vld [vmem:[%s257 + $0xd8] sm:$0xff]
      %v1334 = vld [vmem:[%s257 + $0xe0] sm:$0xff]
      %v1335 = vld [vmem:[%s257 + $0xe8] sm:$0xff]
      %v1336 = vld [vmem:[%s257 + $0xf0] sm:$0xff]
      %v1337 = vld [vmem:[%s257 + $0xf8] sm:$0xff]
      %v1339 = vshrl.u32 %v1306, 16
      %v1341 = vshll.u32 %v1306, 16
      %v1343 = vrot.slane %v1341, 1
      %v1344 = vor.u32 %v1339, %v1343
      %v1346 = vshll.u32 %v1307, 16
      %v1348 = vrot.slane %v1346, 1
      %v1349 = vsel %vm484, %v1344, %v1348
      %v1350 = vshrl.u32 %v1307, 16
      %v1352 = vor.u32 %v1350, %v1348
      %v1354 = vshrl.u32 %v1308, 16
      %v1356 = vshll.u32 %v1308, 16
      %v1358 = vrot.slane %v1356, 1
      %v1359 = vor.u32 %v1354, %v1358
      %v1361 = vshll.u32 %v1309, 16
      %v1363 = vrot.slane %v1361, 1
      %v1364 = vsel %vm484, %v1359, %v1363
      %v1365 = vshrl.u32 %v1309, 16
      %v1367 = vor.u32 %v1365, %v1363
      %v1369 = vshrl.u32 %v1310, 16
      %v1371 = vshll.u32 %v1310, 16
      %v1373 = vrot.slane %v1371, 1
      %v1374 = vor.u32 %v1369, %v1373
      %v1376 = vshll.u32 %v1311, 16
      %v1378 = vrot.slane %v1376, 1
      %v1379 = vsel %vm484, %v1374, %v1378
      %v1380 = vshrl.u32 %v1311, 16
      %v1382 = vor.u32 %v1380, %v1378
      %v1384 = vshrl.u32 %v1312, 16
      %v1386 = vshll.u32 %v1312, 16
      %v1388 = vrot.slane %v1386, 1
      %v1389 = vor.u32 %v1384, %v1388
      %v1391 = vshll.u32 %v1313, 16
      %v1393 = vrot.slane %v1391, 1
      %v1394 = vsel %vm484, %v1389, %v1393
      %v1395 = vshrl.u32 %v1313, 16
      %v1397 = vor.u32 %v1395, %v1393
      %v1399 = vshrl.u32 %v1314, 16
      %v1401 = vshll.u32 %v1314, 16
      %v1403 = vrot.slane %v1401, 1
      %v1404 = vor.u32 %v1399, %v1403
      %v1406 = vshll.u32 %v1315, 16
      %v1408 = vrot.slane %v1406, 1
      %v1409 = vsel %vm484, %v1404, %v1408
      %v1410 = vshrl.u32 %v1315, 16
      %v1412 = vor.u32 %v1410, %v1408
      %v1414 = vshrl.u32 %v1316, 16
      %v1416 = vshll.u32 %v1316, 16
      %v1418 = vrot.slane %v1416, 1
      %v1419 = vor.u32 %v1414, %v1418
      %v1421 = vshll.u32 %v1317, 16
      %v1423 = vrot.slane %v1421, 1
      %v1424 = vsel %vm484, %v1419, %v1423
      %v1425 = vshrl.u32 %v1317, 16
      %v1427 = vor.u32 %v1425, %v1423
      %v1429 = vshrl.u32 %v1318, 16
      %v1431 = vshll.u32 %v1318, 16
      %v1433 = vrot.slane %v1431, 1
      %v1434 = vor.u32 %v1429, %v1433
      %v1436 = vshll.u32 %v1319, 16
      %v1438 = vrot.slane %v1436, 1
      %v1439 = vsel %vm484, %v1434, %v1438
      %v1440 = vshrl.u32 %v1319, 16
      %v1442 = vor.u32 %v1440, %v1438
      %v1444 = vshrl.u32 %v1320, 16
      %v1446 = vshll.u32 %v1320, 16
      %v1448 = vrot.slane %v1446, 1
      %v1449 = vor.u32 %v1444, %v1448
      %v1451 = vshll.u32 %v1321, 16
      %v1453 = vrot.slane %v1451, 1
      %v1454 = vsel %vm484, %v1449, %v1453
      %v1455 = vshrl.u32 %v1321, 16
      %v1457 = vor.u32 %v1455, %v1453
      %v1459 = vshrl.u32 %v1322, 16
      %v1461 = vshll.u32 %v1322, 16
      %v1463 = vrot.slane %v1461, 1
      %v1464 = vor.u32 %v1459, %v1463
      %v1466 = vshll.u32 %v1323, 16
      %v1468 = vrot.slane %v1466, 1
      %v1469 = vsel %vm484, %v1464, %v1468
      %v1470 = vshrl.u32 %v1323, 16
      %v1472 = vor.u32 %v1470, %v1468
      %v1474 = vshrl.u32 %v1324, 16
      %v1476 = vshll.u32 %v1324, 16
      %v1478 = vrot.slane %v1476, 1
      %v1479 = vor.u32 %v1474, %v1478
      %v1481 = vshll.u32 %v1325, 16
      %v1483 = vrot.slane %v1481, 1
      %v1484 = vsel %vm484, %v1479, %v1483
      %v1485 = vshrl.u32 %v1325, 16
      %v1487 = vor.u32 %v1485, %v1483
      %v1489 = vshrl.u32 %v1326, 16
      %v1491 = vshll.u32 %v1326, 16
      %v1493 = vrot.slane %v1491, 1
      %v1494 = vor.u32 %v1489, %v1493
      %v1496 = vshll.u32 %v1327, 16
      %v1498 = vrot.slane %v1496, 1
      %v1499 = vsel %vm484, %v1494, %v1498
      %v1500 = vshrl.u32 %v1327, 16
      %v1502 = vor.u32 %v1500, %v1498
      %v1504 = vshrl.u32 %v1328, 16
      %v1506 = vshll.u32 %v1328, 16
      %v1508 = vrot.slane %v1506, 1
      %v1509 = vor.u32 %v1504, %v1508
      %v1511 = vshll.u32 %v1329, 16
      %v1513 = vrot.slane %v1511, 1
      %v1514 = vsel %vm484, %v1509, %v1513
      %v1515 = vshrl.u32 %v1329, 16
      %v1517 = vor.u32 %v1515, %v1513
      %v1519 = vshrl.u32 %v1330, 16
      %v1521 = vshll.u32 %v1330, 16
      %v1523 = vrot.slane %v1521, 1
      %v1524 = vor.u32 %v1519, %v1523
      %v1526 = vshll.u32 %v1331, 16
      %v1528 = vrot.slane %v1526, 1
      %v1529 = vsel %vm484, %v1524, %v1528
      %v1530 = vshrl.u32 %v1331, 16
      %v1532 = vor.u32 %v1530, %v1528
      %v1534 = vshrl.u32 %v1332, 16
      %v1536 = vshll.u32 %v1332, 16
      %v1538 = vrot.slane %v1536, 1
      %v1539 = vor.u32 %v1534, %v1538
      %v1541 = vshll.u32 %v1333, 16
      %v1543 = vrot.slane %v1541, 1
      %v1544 = vsel %vm484, %v1539, %v1543
      %v1545 = vshrl.u32 %v1333, 16
      %v1547 = vor.u32 %v1545, %v1543
      %v1549 = vshrl.u32 %v1334, 16
      %v1551 = vshll.u32 %v1334, 16
      %v1553 = vrot.slane %v1551, 1
      %v1554 = vor.u32 %v1549, %v1553
      %v1556 = vshll.u32 %v1335, 16
      %v1558 = vrot.slane %v1556, 1
      %v1559 = vsel %vm484, %v1554, %v1558
      %v1560 = vshrl.u32 %v1335, 16
      %v1562 = vor.u32 %v1560, %v1558
      %v1564 = vshrl.u32 %v1336, 16
      %v1566 = vshll.u32 %v1336, 16
      %v1568 = vrot.slane %v1566, 1
      %v1569 = vor.u32 %v1564, %v1568
      %v1571 = vshll.u32 %v1337, 16
      %v1573 = vrot.slane %v1571, 1
      %v1574 = vsel %vm484, %v1569, %v1573
      %v1575 = vshrl.u32 %v1337, 16
      %v1577 = vor.u32 %v1575, %v1573
      %1578 = vrot.lane.b32.xlu0 %v1349, 4
      %v1579 = vpop.permute.xlu0 %1578
      %1580 = vrot.lane.b32.xlu0 %v1352, 4
      %v1581 = vpop.permute.xlu0 %1580
      %1582 = vrot.lane.b32.xlu0 %v1364, 4
      %v1583 = vpop.permute.xlu0 %1582
      %1584 = vrot.lane.b32.xlu0 %v1367, 4
      %v1585 = vpop.permute.xlu0 %1584
      %1586 = vrot.lane.b32.xlu0 %v1379, 4
      %v1587 = vpop.permute.xlu0 %1586
      %1588 = vrot.lane.b32.xlu0 %v1382, 4
      %v1589 = vpop.permute.xlu0 %1588
      %1590 = vrot.lane.b32.xlu0 %v1394, 4
      %v1591 = vpop.permute.xlu0 %1590
      %1592 = vrot.lane.b32.xlu0 %v1397, 4
      %v1593 = vpop.permute.xlu0 %1592
      %1594 = vrot.lane.b32.xlu0 %v1409, 4
      %v1595 = vpop.permute.xlu0 %1594
      %1596 = vrot.lane.b32.xlu0 %v1412, 4
      %v1597 = vpop.permute.xlu0 %1596
      %1598 = vrot.lane.b32.xlu0 %v1424, 4
      %v1599 = vpop.permute.xlu0 %1598
      %1600 = vrot.lane.b32.xlu0 %v1427, 4
      %v1601 = vpop.permute.xlu0 %1600
      %1602 = vrot.lane.b32.xlu0 %v1439, 4
      %v1603 = vpop.permute.xlu0 %1602
      %1604 = vrot.lane.b32.xlu0 %v1442, 4
      %v1605 = vpop.permute.xlu0 %1604
      %1606 = vrot.lane.b32.xlu0 %v1454, 4
      %v1607 = vpop.permute.xlu0 %1606
      %1608 = vrot.lane.b32.xlu0 %v1457, 4
      %v1609 = vpop.permute.xlu0 %1608
      %1610 = vrot.lane.b32.xlu0 %v1469, 4
      %v1611 = vpop.permute.xlu0 %1610
      %1612 = vrot.lane.b32.xlu0 %v1472, 4
      %v1613 = vpop.permute.xlu0 %1612
      %1614 = vrot.lane.b32.xlu0 %v1484, 4
      %v1615 = vpop.permute.xlu0 %1614
      %1616 = vrot.lane.b32.xlu0 %v1487, 4
      %v1617 = vpop.permute.xlu0 %1616
      %1618 = vrot.lane.b32.xlu0 %v1499, 4
      %v1619 = vpop.permute.xlu0 %1618
      %1620 = vrot.lane.b32.xlu0 %v1502, 4
      %v1621 = vpop.permute.xlu0 %1620
      %1622 = vrot.lane.b32.xlu0 %v1514, 4
      %v1623 = vpop.permute.xlu0 %1622
      %1624 = vrot.lane.b32.xlu0 %v1517, 4
      %v1625 = vpop.permute.xlu0 %1624
      %1626 = vrot.lane.b32.xlu0 %v1529, 4
      %v1627 = vpop.permute.xlu0 %1626
      %1628 = vrot.lane.b32.xlu0 %v1532, 4
      %v1629 = vpop.permute.xlu0 %1628
      %1630 = vrot.lane.b32.xlu0 %v1544, 4
      %v1631 = vpop.permute.xlu0 %1630
      %1632 = vrot.lane.b32.xlu0 %v1547, 4
      %v1633 = vpop.permute.xlu0 %1632
      %1634 = vrot.lane.b32.xlu0 %v1559, 4
      %v1635 = vpop.permute.xlu0 %1634
      %1636 = vrot.lane.b32.xlu0 %v1562, 4
      %v1637 = vpop.permute.xlu0 %1636
      %1638 = vrot.lane.b32.xlu0 %v1574, 4
      %v1639 = vpop.permute.xlu0 %1638
      %1640 = vrot.lane.b32.xlu0 %v1577, 4
      %v1641 = vpop.permute.xlu0 %1640
      %v1674 = vrot.slane %v1306, 1
      %v1675 = vrot.slane %v1307, 1
      %v1676 = vsel %vm821, %v1674, %v1675
      %v1677 = vrot.slane %v1308, 1
      %v1678 = vrot.slane %v1309, 1
      %v1679 = vsel %vm821, %v1677, %v1678
      %v1680 = vrot.slane %v1310, 1
      %v1681 = vrot.slane %v1311, 1
      %v1682 = vsel %vm821, %v1680, %v1681
      %v1683 = vrot.slane %v1312, 1
      %v1684 = vrot.slane %v1313, 1
      %v1685 = vsel %vm821, %v1683, %v1684
      %v1686 = vrot.slane %v1314, 1
      %v1687 = vrot.slane %v1315, 1
      %v1688 = vsel %vm821, %v1686, %v1687
      %v1689 = vrot.slane %v1316, 1
      %v1690 = vrot.slane %v1317, 1
      %v1691 = vsel %vm821, %v1689, %v1690
      %v1692 = vrot.slane %v1318, 1
      %v1693 = vrot.slane %v1319, 1
      %v1694 = vsel %vm821, %v1692, %v1693
      %v1695 = vrot.slane %v1320, 1
      %v1696 = vrot.slane %v1321, 1
      %v1697 = vsel %vm821, %v1695, %v1696
      %v1698 = vrot.slane %v1322, 1
      %v1699 = vrot.slane %v1323, 1
      %v1700 = vsel %vm821, %v1698, %v1699
      %v1701 = vrot.slane %v1324, 1
      %v1702 = vrot.slane %v1325, 1
      %v1703 = vsel %vm821, %v1701, %v1702
      %v1704 = vrot.slane %v1326, 1
      %v1705 = vrot.slane %v1327, 1
      %v1706 = vsel %vm821, %v1704, %v1705
      %v1707 = vrot.slane %v1328, 1
      %v1708 = vrot.slane %v1329, 1
      %v1709 = vsel %vm821, %v1707, %v1708
      %v1710 = vrot.slane %v1330, 1
      %v1711 = vrot.slane %v1331, 1
      %v1712 = vsel %vm821, %v1710, %v1711
      %v1713 = vrot.slane %v1332, 1
      %v1714 = vrot.slane %v1333, 1
      %v1715 = vsel %vm821, %v1713, %v1714
      %v1716 = vrot.slane %v1334, 1
      %v1717 = vrot.slane %v1335, 1
      %v1718 = vsel %vm821, %v1716, %v1717
      %v1719 = vrot.slane %v1336, 1
      %v1720 = vrot.slane %v1337, 1
      %v1721 = vsel %vm821, %v1719, %v1720
      %1722 = vrot.lane.b32.xlu0 %v1676, 8
      %v1723 = vpop.permute.xlu0 %1722
      %1724 = vrot.lane.b32.xlu0 %v1675, 8
      %v1725 = vpop.permute.xlu0 %1724
      %1726 = vrot.lane.b32.xlu0 %v1679, 8
      %v1727 = vpop.permute.xlu0 %1726
      %1728 = vrot.lane.b32.xlu0 %v1678, 8
      %v1729 = vpop.permute.xlu0 %1728
      %1730 = vrot.lane.b32.xlu0 %v1682, 8
      %v1731 = vpop.permute.xlu0 %1730
      %1732 = vrot.lane.b32.xlu0 %v1681, 8
      %v1733 = vpop.permute.xlu0 %1732
      %1734 = vrot.lane.b32.xlu0 %v1685, 8
      %v1735 = vpop.permute.xlu0 %1734
      %1736 = vrot.lane.b32.xlu0 %v1684, 8
      %v1737 = vpop.permute.xlu0 %1736
      %1738 = vrot.lane.b32.xlu0 %v1688, 8
      %v1739 = vpop.permute.xlu0 %1738
      %1740 = vrot.lane.b32.xlu0 %v1687, 8
      %v1741 = vpop.permute.xlu0 %1740
      %1742 = vrot.lane.b32.xlu0 %v1691, 8
      %v1743 = vpop.permute.xlu0 %1742
      %1744 = vrot.lane.b32.xlu0 %v1690, 8
      %v1745 = vpop.permute.xlu0 %1744
      %1746 = vrot.lane.b32.xlu0 %v1694, 8
      %v1747 = vpop.permute.xlu0 %1746
      %1748 = vrot.lane.b32.xlu0 %v1693, 8
      %v1749 = vpop.permute.xlu0 %1748
      %1750 = vrot.lane.b32.xlu0 %v1697, 8
      %v1751 = vpop.permute.xlu0 %1750
      %1752 = vrot.lane.b32.xlu0 %v1696, 8
      %v1753 = vpop.permute.xlu0 %1752
      %1754 = vrot.lane.b32.xlu0 %v1700, 8
      %v1755 = vpop.permute.xlu0 %1754
      %1756 = vrot.lane.b32.xlu0 %v1699, 8
      %v1757 = vpop.permute.xlu0 %1756
      %1758 = vrot.lane.b32.xlu0 %v1703, 8
      %v1759 = vpop.permute.xlu0 %1758
      %1760 = vrot.lane.b32.xlu0 %v1702, 8
      %v1761 = vpop.permute.xlu0 %1760
      %1762 = vrot.lane.b32.xlu0 %v1706, 8
      %v1763 = vpop.permute.xlu0 %1762
      %1764 = vrot.lane.b32.xlu0 %v1705, 8
      %v1765 = vpop.permute.xlu0 %1764
      %1766 = vrot.lane.b32.xlu0 %v1709, 8
      %v1767 = vpop.permute.xlu0 %1766
      %1768 = vrot.lane.b32.xlu0 %v1708, 8
      %v1769 = vpop.permute.xlu0 %1768
      %1770 = vrot.lane.b32.xlu0 %v1712, 8
      %v1771 = vpop.permute.xlu0 %1770
      %1772 = vrot.lane.b32.xlu0 %v1711, 8
      %v1773 = vpop.permute.xlu0 %1772
      %1774 = vrot.lane.b32.xlu0 %v1715, 8
      %v1775 = vpop.permute.xlu0 %1774
      %1776 = vrot.lane.b32.xlu0 %v1714, 8
      %v1777 = vpop.permute.xlu0 %1776
      %1778 = vrot.lane.b32.xlu0 %v1718, 8
      %v1779 = vpop.permute.xlu0 %1778
      %1780 = vrot.lane.b32.xlu0 %v1717, 8
      %v1781 = vpop.permute.xlu0 %1780
      %1782 = vrot.lane.b32.xlu0 %v1721, 8
      %v1783 = vpop.permute.xlu0 %1782
      %1784 = vrot.lane.b32.xlu0 %v1720, 8
      %v1785 = vpop.permute.xlu0 %1784
      %v1787 = vsel %vm251, %v1306, %v1579
      %v1789 = vsel %vm251, %v1307, %v1581
      %v1791 = vsel %vm251, %v1308, %v1583
      %v1793 = vsel %vm251, %v1309, %v1585
      %v1795 = vsel %vm251, %v1310, %v1587
      %v1797 = vsel %vm251, %v1311, %v1589
      %v1799 = vsel %vm251, %v1312, %v1591
      %v1801 = vsel %vm251, %v1313, %v1593
      %v1803 = vsel %vm251, %v1314, %v1595
      %v1805 = vsel %vm251, %v1315, %v1597
      %v1807 = vsel %vm251, %v1316, %v1599
      %v1809 = vsel %vm251, %v1317, %v1601
      %v1811 = vsel %vm251, %v1318, %v1603
      %v1813 = vsel %vm251, %v1319, %v1605
      %v1815 = vsel %vm251, %v1320, %v1607
      %v1817 = vsel %vm251, %v1321, %v1609
      %v1819 = vsel %vm251, %v1322, %v1611
      %v1821 = vsel %vm251, %v1323, %v1613
      %v1823 = vsel %vm251, %v1324, %v1615
      %v1825 = vsel %vm251, %v1325, %v1617
      %v1827 = vsel %vm251, %v1326, %v1619
      %v1829 = vsel %vm251, %v1327, %v1621
      %v1831 = vsel %vm251, %v1328, %v1623
      %v1833 = vsel %vm251, %v1329, %v1625
      %v1835 = vsel %vm251, %v1330, %v1627
      %v1837 = vsel %vm251, %v1331, %v1629
      %v1839 = vsel %vm251, %v1332, %v1631
      %v1841 = vsel %vm251, %v1333, %v1633
      %v1843 = vsel %vm251, %v1334, %v1635
      %v1845 = vsel %vm251, %v1335, %v1637
      %v1847 = vsel %vm251, %v1336, %v1639
      %v1849 = vsel %vm251, %v1337, %v1641
      %v1851 = vsel %vm998, %v1787, %v1723
      %v1853 = vsel %vm998, %v1789, %v1725
      %v1855 = vsel %vm998, %v1791, %v1727
      %v1857 = vsel %vm998, %v1793, %v1729
      %v1859 = vsel %vm998, %v1795, %v1731
      %v1861 = vsel %vm998, %v1797, %v1733
      %v1863 = vsel %vm998, %v1799, %v1735
      %v1865 = vsel %vm998, %v1801, %v1737
      %v1867 = vsel %vm998, %v1803, %v1739
      %v1869 = vsel %vm998, %v1805, %v1741
      %v1871 = vsel %vm998, %v1807, %v1743
      %v1873 = vsel %vm998, %v1809, %v1745
      %v1875 = vsel %vm998, %v1811, %v1747
      %v1877 = vsel %vm998, %v1813, %v1749
      %v1879 = vsel %vm998, %v1815, %v1751
      %v1881 = vsel %vm998, %v1817, %v1753
      %v1883 = vsel %vm998, %v1819, %v1755
      %v1885 = vsel %vm998, %v1821, %v1757
      %v1887 = vsel %vm998, %v1823, %v1759
      %v1889 = vsel %vm998, %v1825, %v1761
      %v1891 = vsel %vm998, %v1827, %v1763
      %v1893 = vsel %vm998, %v1829, %v1765
      %v1895 = vsel %vm998, %v1831, %v1767
      %v1897 = vsel %vm998, %v1833, %v1769
      %v1899 = vsel %vm998, %v1835, %v1771
      %v1901 = vsel %vm998, %v1837, %v1773
      %v1903 = vsel %vm998, %v1839, %v1775
      %v1905 = vsel %vm998, %v1841, %v1777
      %v1907 = vsel %vm998, %v1843, %v1779
      %v1909 = vsel %vm998, %v1845, %v1781
      %v1911 = vsel %vm998, %v1847, %v1783
      %v1913 = vsel %vm998, %v1849, %v1785
      %v1914 = vshrl.u32 %v1851, 16
      %v1916 = vrot.slane %v1914, 3
      %v1917 = vshll.u32 %v1851, 16
      %v1919 = vrot.slane %v1917, 4
      %v1920 = vor.u32 %v1916, %v1919
      %v1921 = vshrl.u32 %v1853, 16
      %v1923 = vrot.slane %v1921, 3
      %v1924 = vshll.u32 %v1853, 16
      %v1926 = vrot.slane %v1924, 4
      %v1927 = vor.u32 %v1923, %v1926
      %v1928 = vsel %vm1063, %v1920, %v1927
      %v1929 = vshrl.u32 %v1855, 16
      %v1931 = vrot.slane %v1929, 3
      %v1932 = vshll.u32 %v1855, 16
      %v1934 = vrot.slane %v1932, 4
      %v1935 = vor.u32 %v1931, %v1934
      %v1936 = vshrl.u32 %v1857, 16
      %v1938 = vrot.slane %v1936, 3
      %v1939 = vshll.u32 %v1857, 16
      %v1941 = vrot.slane %v1939, 4
      %v1942 = vor.u32 %v1938, %v1941
      %v1943 = vsel %vm1063, %v1935, %v1942
      %v1944 = vshrl.u32 %v1859, 16
      %v1946 = vrot.slane %v1944, 3
      %v1947 = vshll.u32 %v1859, 16
      %v1949 = vrot.slane %v1947, 4
      %v1950 = vor.u32 %v1946, %v1949
      %v1951 = vshrl.u32 %v1861, 16
      %v1953 = vrot.slane %v1951, 3
      %v1954 = vshll.u32 %v1861, 16
      %v1956 = vrot.slane %v1954, 4
      %v1957 = vor.u32 %v1953, %v1956
      %v1958 = vsel %vm1063, %v1950, %v1957
      %v1959 = vshrl.u32 %v1863, 16
      %v1961 = vrot.slane %v1959, 3
      %v1962 = vshll.u32 %v1863, 16
      %v1964 = vrot.slane %v1962, 4
      %v1965 = vor.u32 %v1961, %v1964
      %v1966 = vshrl.u32 %v1865, 16
      %v1968 = vrot.slane %v1966, 3
      %v1969 = vshll.u32 %v1865, 16
      %v1971 = vrot.slane %v1969, 4
      %v1972 = vor.u32 %v1968, %v1971
      %v1973 = vsel %vm1063, %v1965, %v1972
      %v1974 = vshrl.u32 %v1867, 16
      %v1976 = vrot.slane %v1974, 3
      %v1977 = vshll.u32 %v1867, 16
      %v1979 = vrot.slane %v1977, 4
      %v1980 = vor.u32 %v1976, %v1979
      %v1981 = vshrl.u32 %v1869, 16
      %v1983 = vrot.slane %v1981, 3
      %v1984 = vshll.u32 %v1869, 16
      %v1986 = vrot.slane %v1984, 4
      %v1987 = vor.u32 %v1983, %v1986
      %v1988 = vsel %vm1063, %v1980, %v1987
      %v1989 = vshrl.u32 %v1871, 16
      %v1991 = vrot.slane %v1989, 3
      %v1992 = vshll.u32 %v1871, 16
      %v1994 = vrot.slane %v1992, 4
      %v1995 = vor.u32 %v1991, %v1994
      %v1996 = vshrl.u32 %v1873, 16
      %v1998 = vrot.slane %v1996, 3
      %v1999 = vshll.u32 %v1873, 16
      %v2001 = vrot.slane %v1999, 4
      %v2002 = vor.u32 %v1998, %v2001
      %v2003 = vsel %vm1063, %v1995, %v2002
      %v2004 = vshrl.u32 %v1875, 16
      %v2006 = vrot.slane %v2004, 3
      %v2007 = vshll.u32 %v1875, 16
      %v2009 = vrot.slane %v2007, 4
      %v2010 = vor.u32 %v2006, %v2009
      %v2011 = vshrl.u32 %v1877, 16
      %v2013 = vrot.slane %v2011, 3
      %v2014 = vshll.u32 %v1877, 16
      %v2016 = vrot.slane %v2014, 4
      %v2017 = vor.u32 %v2013, %v2016
      %v2018 = vsel %vm1063, %v2010, %v2017
      %v2019 = vshrl.u32 %v1879, 16
      %v2021 = vrot.slane %v2019, 3
      %v2022 = vshll.u32 %v1879, 16
      %v2024 = vrot.slane %v2022, 4
      %v2025 = vor.u32 %v2021, %v2024
      %v2026 = vshrl.u32 %v1881, 16
      %v2028 = vrot.slane %v2026, 3
      %v2029 = vshll.u32 %v1881, 16
      %v2031 = vrot.slane %v2029, 4
      %v2032 = vor.u32 %v2028, %v2031
      %v2033 = vsel %vm1063, %v2025, %v2032
      %v2034 = vshrl.u32 %v1883, 16
      %v2036 = vrot.slane %v2034, 3
      %v2037 = vshll.u32 %v1883, 16
      %v2039 = vrot.slane %v2037, 4
      %v2040 = vor.u32 %v2036, %v2039
      %v2041 = vshrl.u32 %v1885, 16
      %v2043 = vrot.slane %v2041, 3
      %v2044 = vshll.u32 %v1885, 16
      %v2046 = vrot.slane %v2044, 4
      %v2047 = vor.u32 %v2043, %v2046
      %v2048 = vsel %vm1063, %v2040, %v2047
      %v2049 = vshrl.u32 %v1887, 16
      %v2051 = vrot.slane %v2049, 3
      %v2052 = vshll.u32 %v1887, 16
      %v2054 = vrot.slane %v2052, 4
      %v2055 = vor.u32 %v2051, %v2054
      %v2056 = vshrl.u32 %v1889, 16
      %v2058 = vrot.slane %v2056, 3
      %v2059 = vshll.u32 %v1889, 16
      %v2061 = vrot.slane %v2059, 4
      %v2062 = vor.u32 %v2058, %v2061
      %v2063 = vsel %vm1063, %v2055, %v2062
      %v2064 = vshrl.u32 %v1891, 16
      %v2066 = vrot.slane %v2064, 3
      %v2067 = vshll.u32 %v1891, 16
      %v2069 = vrot.slane %v2067, 4
      %v2070 = vor.u32 %v2066, %v2069
      %v2071 = vshrl.u32 %v1893, 16
      %v2073 = vrot.slane %v2071, 3
      %v2074 = vshll.u32 %v1893, 16
      %v2076 = vrot.slane %v2074, 4
      %v2077 = vor.u32 %v2073, %v2076
      %v2078 = vsel %vm1063, %v2070, %v2077
      %v2079 = vshrl.u32 %v1895, 16
      %v2081 = vrot.slane %v2079, 3
      %v2082 = vshll.u32 %v1895, 16
      %v2084 = vrot.slane %v2082, 4
      %v2085 = vor.u32 %v2081, %v2084
      %v2086 = vshrl.u32 %v1897, 16
      %v2088 = vrot.slane %v2086, 3
      %v2089 = vshll.u32 %v1897, 16
      %v2091 = vrot.slane %v2089, 4
      %v2092 = vor.u32 %v2088, %v2091
      %v2093 = vsel %vm1063, %v2085, %v2092
      %v2094 = vshrl.u32 %v1899, 16
      %v2096 = vrot.slane %v2094, 3
      %v2097 = vshll.u32 %v1899, 16
      %v2099 = vrot.slane %v2097, 4
      %v2100 = vor.u32 %v2096, %v2099
      %v2101 = vshrl.u32 %v1901, 16
      %v2103 = vrot.slane %v2101, 3
      %v2104 = vshll.u32 %v1901, 16
      %v2106 = vrot.slane %v2104, 4
      %v2107 = vor.u32 %v2103, %v2106
      %v2108 = vsel %vm1063, %v2100, %v2107
      %v2109 = vshrl.u32 %v1903, 16
      %v2111 = vrot.slane %v2109, 3
      %v2112 = vshll.u32 %v1903, 16
      %v2114 = vrot.slane %v2112, 4
      %v2115 = vor.u32 %v2111, %v2114
      %v2116 = vshrl.u32 %v1905, 16
      %v2118 = vrot.slane %v2116, 3
      %v2119 = vshll.u32 %v1905, 16
      %v2121 = vrot.slane %v2119, 4
      %v2122 = vor.u32 %v2118, %v2121
      %v2123 = vsel %vm1063, %v2115, %v2122
      %v2124 = vshrl.u32 %v1907, 16
      %v2126 = vrot.slane %v2124, 3
      %v2127 = vshll.u32 %v1907, 16
      %v2129 = vrot.slane %v2127, 4
      %v2130 = vor.u32 %v2126, %v2129
      %v2131 = vshrl.u32 %v1909, 16
      %v2133 = vrot.slane %v2131, 3
      %v2134 = vshll.u32 %v1909, 16
      %v2136 = vrot.slane %v2134, 4
      %v2137 = vor.u32 %v2133, %v2136
      %v2138 = vsel %vm1063, %v2130, %v2137
      %v2139 = vshrl.u32 %v1911, 16
      %v2141 = vrot.slane %v2139, 3
      %v2142 = vshll.u32 %v1911, 16
      %v2144 = vrot.slane %v2142, 4
      %v2145 = vor.u32 %v2141, %v2144
      %v2146 = vshrl.u32 %v1913, 16
      %v2148 = vrot.slane %v2146, 3
      %v2149 = vshll.u32 %v1913, 16
      %v2151 = vrot.slane %v2149, 4
      %v2152 = vor.u32 %v2148, %v2151
      %v2153 = vsel %vm1063, %v2145, %v2152
      %s2154 = scalar_lea.vmem %s1, 8
      %v2155 = vld [vmem:[%s2154] sm:$0xf]
      %v2156 = vld [vmem:[%s2154 + $0x4] sm:$0x3]
      %v2159 = vunpack.c.l.b16 %v2155
      %v2160 = vunpack.c.l.b16 %v2156
      %v2161 = vpack.c.b16 %v2160, %v2159
      %vm2162 = vcmask 97280
      %v2164 = vsel %vm2162, %v1928, 0
      %v2167 = vsel %vm2162, %v1943, 0
      %v2170 = vsel %vm2162, %v1958, 0
      %v2173 = vsel %vm2162, %v1973, 0
      %v2176 = vsel %vm2162, %v1988, 0
      %v2179 = vsel %vm2162, %v2003, 0
      %v2182 = vsel %vm2162, %v2018, 0
      %v2185 = vsel %vm2162, %v2033, 0
      %v2188 = vsel %vm2162, %v2048, 0
      %v2191 = vsel %vm2162, %v2063, 0
      %v2194 = vsel %vm2162, %v2078, 0
      %v2197 = vsel %vm2162, %v2093, 0
      %v2200 = vsel %vm2162, %v2108, 0
      %v2203 = vsel %vm2162, %v2123, 0
      %v2206 = vsel %vm2162, %v2138, 0
      %v2209 = vsel %vm2162, %v2153, 0
      %vm2211 = vcmask 1045504
      %v2213 = vsel %vm2211, %v2161, 0
      %2215 = vmatprep.subr.bf16.mxu0 0
      %2216 = vmatpush1.bf16.msra.mxu0 %v2213
      %2217 = vmatprep.subr.bf16.mxu0 0
      %2218 = vmatpush1.bf16.msra.mxu0 0
      %2219 = vmatprep.subr.bf16.mxu0 0
      %2220 = vmatpush1.bf16.msra.mxu0 0
      %2221 = vmatprep.subr.bf16.mxu0 0
      %2222 = vmatpush1.bf16.msra.mxu0 0
      %2223 = vmatprep.subr.bf16.mxu0 0
      %2224 = vmatpush1.bf16.msra.mxu0 0
      %2225 = vmatprep.subr.bf16.mxu0 0
      %2226 = vmatpush1.bf16.msra.mxu0 0
      %2227 = vmatprep.subr.bf16.mxu0 0
      %2228 = vmatpush1.bf16.msra.mxu0 0
      %2229 = vmatprep.subr.bf16.mxu0 0
      %2230 = vmatpush1.bf16.msra.mxu0 0
      %2231 = vmatprep.subr.bf16.mxu0 0
      %2232 = vmatpush1.bf16.msra.mxu0 0
      %2233 = vmatprep.subr.bf16.mxu0 0
      %2234 = vmatpush1.bf16.msra.mxu0 0
      %2235 = vmatprep.subr.bf16.mxu0 0
      %2236 = vmatpush1.bf16.msra.mxu0 0
      %2237 = vmatprep.subr.bf16.mxu0 0
      %2238 = vmatpush1.bf16.msra.mxu0 0
      %2239 = vmatprep.subr.bf16.mxu0 0
      %2240 = vmatpush1.bf16.msra.mxu0 0
      %2241 = vmatprep.subr.bf16.mxu0 0
      %2242 = vmatpush1.bf16.msra.mxu0 0
      %2243 = vmatprep.subr.bf16.mxu0 0
      %2244 = vmatpush1.bf16.msra.mxu0 0
      %2245 = vmatprep.subr.bf16.mxu0 0
      %2246 = vmatpush1.bf16.msra.mxu0 0
      %2247 = vmatprep.mubr.bf16.mxu0 0
      %2248 = vmatmul.mubr.bf16.gmra.mrb[0].mxu0 %v2164
      %v2249 = vpop.f32.mrb[0].mxu0
      %v2250 = vadd.f32 0.0, %v2249
      %v2251 = vpop.f32.mrb[0].mxu0
      %v2252 = vpop.f32.mrb[0].mxu0
      %v2253 = vadd.f32 0.0, %v2252
      %v2254 = vpop.f32.mrb[0].mxu0
      %2255 = vmatprep.mubr.bf16.mxu0 0
      %2256 = vmatmul.mubr.bf16.gmra.mrb[0].mxu0 %v2167
      %v2257 = vpop.f32.mrb[0].mxu0
      %v2258 = vadd.f32 0.0, %v2257
      %v2259 = vpop.f32.mrb[0].mxu0
      %v2260 = vpop.f32.mrb[0].mxu0
      %v2261 = vadd.f32 0.0, %v2260
      %v2262 = vpop.f32.mrb[0].mxu0
      %2263 = vmatprep.mubr.bf16.mxu0 0
      %2264 = vmatmul.mubr.bf16.gmra.mrb[0].mxu0 %v2170
      %v2265 = vpop.f32.mrb[0].mxu0
      %v2266 = vadd.f32 0.0, %v2265
      %v2267 = vpop.f32.mrb[0].mxu0
      %v2268 = vpop.f32.mrb[0].mxu0
      %v2269 = vadd.f32 0.0, %v2268
      %v2270 = vpop.f32.mrb[0].mxu0
      %2271 = vmatprep.mubr.bf16.mxu0 0
      %2272 = vmatmul.mubr.bf16.gmra.mrb[0].mxu0 %v2173
      %v2273 = vpop.f32.mrb[0].mxu0
      %v2274 = vadd.f32 0.0, %v2273
      %v2275 = vpop.f32.mrb[0].mxu0
      %v2276 = vpop.f32.mrb[0].mxu0
      %v2277 = vadd.f32 0.0, %v2276
      %v2278 = vpop.f32.mrb[0].mxu0
      %2279 = vmatprep.mubr.bf16.mxu0 0
      %2280 = vmatmul.mubr.bf16.gmra.mrb[0].mxu0 %v2176
      %v2281 = vpop.f32.mrb[0].mxu0
      %v2282 = vadd.f32 0.0, %v2281
      %v2283 = vpop.f32.mrb[0].mxu0
      %v2284 = vpop.f32.mrb[0].mxu0
      %v2285 = vadd.f32 0.0, %v2284
      %v2286 = vpop.f32.mrb[0].mxu0
      %2287 = vmatprep.mubr.bf16.mxu0 0
      %2288 = vmatmul.mubr.bf16.gmra.mrb[0].mxu0 %v2179
      %v2289 = vpop.f32.mrb[0].mxu0
      %v2290 = vadd.f32 0.0, %v2289
      %v2291 = vpop.f32.mrb[0].mxu0
      %v2292 = vpop.f32.mrb[0].mxu0
      %v2293 = vadd.f32 0.0, %v2292
      %v2294 = vpop.f32.mrb[0].mxu0
      %2295 = vmatprep.mubr.bf16.mxu0 0
      %2296 = vmatmul.mubr.bf16.gmra.mrb[0].mxu0 %v2182
      %v2297 = vpop.f32.mrb[0].mxu0
      %v2298 = vadd.f32 0.0, %v2297
      %v2299 = vpop.f32.mrb[0].mxu0
      %v2300 = vpop.f32.mrb[0].mxu0
      %v2301 = vadd.f32 0.0, %v2300
      %v2302 = vpop.f32.mrb[0].mxu0
      %2303 = vmatprep.mubr.bf16.mxu0 0
      %2304 = vmatmul.mubr.bf16.gmra.mrb[0].mxu0 %v2185
      %v2305 = vpop.f32.mrb[0].mxu0
      %v2306 = vadd.f32 0.0, %v2305
      %v2307 = vpop.f32.mrb[0].mxu0
      %v2308 = vpop.f32.mrb[0].mxu0
      %v2309 = vadd.f32 0.0, %v2308
      %v2310 = vpop.f32.mrb[0].mxu0
      %2311 = vmatprep.mubr.bf16.mxu0 0
      %2312 = vmatmul.mubr.bf16.gmra.mrb[0].mxu0 %v2188
      %v2313 = vpop.f32.mrb[0].mxu0
      %v2314 = vadd.f32 0.0, %v2313
      %v2315 = vpop.f32.mrb[0].mxu0
      %v2316 = vpop.f32.mrb[0].mxu0
      %v2317 = vadd.f32 0.0, %v2316
      %v2318 = vpop.f32.mrb[0].mxu0
      %2319 = vmatprep.mubr.bf16.mxu0 0
      %2320 = vmatmul.mubr.bf16.gmra.mrb[0].mxu0 %v2191
      %v2321 = vpop.f32.mrb[0].mxu0
      %v2322 = vadd.f32 0.0, %v2321
      %v2323 = vpop.f32.mrb[0].mxu0
      %v2324 = vpop.f32.mrb[0].mxu0
      %v2325 = vadd.f32 0.0, %v2324
      %v2326 = vpop.f32.mrb[0].mxu0
      %2327 = vmatprep.mubr.bf16.mxu0 0
      %2328 = vmatmul.mubr.bf16.gmra.mrb[0].mxu0 %v2194
      %v2329 = vpop.f32.mrb[0].mxu0
      %v2330 = vadd.f32 0.0, %v2329
      %v2331 = vpop.f32.mrb[0].mxu0
      %v2332 = vpop.f32.mrb[0].mxu0
      %v2333 = vadd.f32 0.0, %v2332
      %v2334 = vpop.f32.mrb[0].mxu0
      %2335 = vmatprep.mubr.bf16.mxu0 0
      %2336 = vmatmul.mubr.bf16.gmra.mrb[0].mxu0 %v2197
      %v2337 = vpop.f32.mrb[0].mxu0
      %v2338 = vadd.f32 0.0, %v2337
      %v2339 = vpop.f32.mrb[0].mxu0
      %v2340 = vpop.f32.mrb[0].mxu0
      %v2341 = vadd.f32 0.0, %v2340
      %v2342 = vpop.f32.mrb[0].mxu0
      %2343 = vmatprep.mubr.bf16.mxu0 0
      %2344 = vmatmul.mubr.bf16.gmra.mrb[0].mxu0 %v2200
      %v2345 = vpop.f32.mrb[0].mxu0
      %v2346 = vadd.f32 0.0, %v2345
      %v2347 = vpop.f32.mrb[0].mxu0
      %v2348 = vpop.f32.mrb[0].mxu0
      %v2349 = vadd.f32 0.0, %v2348
      %v2350 = vpop.f32.mrb[0].mxu0
      %2351 = vmatprep.mubr.bf16.mxu0 0
      %2352 = vmatmul.mubr.bf16.gmra.mrb[0].mxu0 %v2203
      %v2353 = vpop.f32.mrb[0].mxu0
      %v2354 = vadd.f32 0.0, %v2353
      %v2355 = vpop.f32.mrb[0].mxu0
      %v2356 = vpop.f32.mrb[0].mxu0
      %v2357 = vadd.f32 0.0, %v2356
      %v2358 = vpop.f32.mrb[0].mxu0
      %2359 = vmatprep.mubr.bf16.mxu0 0
      %2360 = vmatmul.mubr.bf16.gmra.mrb[0].mxu0 %v2206
      %v2361 = vpop.f32.mrb[0].mxu0
      %v2362 = vadd.f32 0.0, %v2361
      %v2363 = vpop.f32.mrb[0].mxu0
      %v2364 = vpop.f32.mrb[0].mxu0
      %v2365 = vadd.f32 0.0, %v2364
      %v2366 = vpop.f32.mrb[0].mxu0
      %2367 = vmatprep.mubr.bf16.mxu0 0
      %2368 = vmatmul.mubr.bf16.gmra.mrb[0].mxu0 %v2209
      %v2369 = vpop.f32.mrb[0].mxu0
      %v2370 = vadd.f32 0.0, %v2369
      %v2371 = vpop.f32.mrb[0].mxu0
      %v2372 = vpop.f32.mrb[0].mxu0
      %v2373 = vadd.f32 0.0, %v2372
      %v2374 = vpop.f32.mrb[0].mxu0
      %2375 = vdwg.mxu0
      %v2378 = vunpack.c.l.b16 %v1304
      %v2379 = vunpack.c.l.b16 %v1305
      %v2380 = vpack.c.b16 %v2379, %v2378
      %v2382 = vsel %vm2162, %v1078, 0
      %v2385 = vsel %vm2162, %v1093, 0
      %v2388 = vsel %vm2162, %v1108, 0
      %v2391 = vsel %vm2162, %v1123, 0
      %v2394 = vsel %vm2162, %v1138, 0
      %v2397 = vsel %vm2162, %v1153, 0
      %v2400 = vsel %vm2162, %v1168, 0
      %v2403 = vsel %vm2162, %v1183, 0
      %v2406 = vsel %vm2162, %v1198, 0
      %v2409 = vsel %vm2162, %v1213, 0
      %v2412 = vsel %vm2162, %v1228, 0
      %v2415 = vsel %vm2162, %v1243, 0
      %v2418 = vsel %vm2162, %v1258, 0
      %v2421 = vsel %vm2162, %v1273, 0
      %v2424 = vsel %vm2162, %v1288, 0
      %v2427 = vsel %vm2162, %v1303, 0
      %v2430 = vsel %vm2211, %v2380, 0
      %2432 = vmatprep.subr.bf16.mxu0 0
      %2433 = vmatpush1.bf16.msra.mxu0 %v2430
      %2434 = vmatprep.subr.bf16.mxu0 0
      %2435 = vmatpush1.bf16.msra.mxu0 0
      %2436 = vmatprep.subr.bf16.mxu0 0
      %2437 = vmatpush1.bf16.msra.mxu0 0
      %2438 = vmatprep.subr.bf16.mxu0 0
      %2439 = vmatpush1.bf16.msra.mxu0 0
      %2440 = vmatprep.subr.bf16.mxu0 0
      %2441 = vmatpush1.bf16.msra.mxu0 0
      %2442 = vmatprep.subr.bf16.mxu0 0
      %2443 = vmatpush1.bf16.msra.mxu0 0
      %2444 = vmatprep.subr.bf16.mxu0 0
      %2445 = vmatpush1.bf16.msra.mxu0 0
      %2446 = vmatprep.subr.bf16.mxu0 0
      %2447 = vmatpush1.bf16.msra.mxu0 0
      %2448 = vmatprep.subr.bf16.mxu0 0
      %2449 = vmatpush1.bf16.msra.mxu0 0
      %2450 = vmatprep.subr.bf16.mxu0 0
      %2451 = vmatpush1.bf16.msra.mxu0 0
      %2452 = vmatprep.subr.bf16.mxu0 0
      %2453 = vmatpush1.bf16.msra.mxu0 0
      %2454 = vmatprep.subr.bf16.mxu0 0
      %2455 = vmatpush1.bf16.msra.mxu0 0
      %2456 = vmatprep.subr.bf16.mxu0 0
      %2457 = vmatpush1.bf16.msra.mxu0 0
      %2458 = vmatprep.subr.bf16.mxu0 0
      %2459 = vmatpush1.bf16.msra.mxu0 0
      %2460 = vmatprep.subr.bf16.mxu0 0
      %2461 = vmatpush1.bf16.msra.mxu0 0
      %2462 = vmatprep.subr.bf16.mxu0 0
      %2463 = vmatpush1.bf16.msra.mxu0 0
      %2464 = vmatprep.mubr.bf16.mxu0 0
      %2465 = vmatmul.mubr.bf16.gmra.mrb[0].mxu0 %v2382
      %v2466 = vpop.f32.mrb[0].mxu0
      %v2467 = vadd.f32 %v2250, %v2466
      %v2468 = vpop.f32.mrb[0].mxu0
      %v2469 = vpop.f32.mrb[0].mxu0
      %v2470 = vadd.f32 %v2253, %v2469
      %v2471 = vpop.f32.mrb[0].mxu0
      %2472 = vmatprep.mubr.bf16.mxu0 0
      %2473 = vmatmul.mubr.bf16.gmra.mrb[0].mxu0 %v2385
      %v2474 = vpop.f32.mrb[0].mxu0
      %v2475 = vadd.f32 %v2258, %v2474
      %v2476 = vpop.f32.mrb[0].mxu0
      %v2477 = vpop.f32.mrb[0].mxu0
      %v2478 = vadd.f32 %v2261, %v2477
      %v2479 = vpop.f32.mrb[0].mxu0
      %2480 = vmatprep.mubr.bf16.mxu0 0
      %2481 = vmatmul.mubr.bf16.gmra.mrb[0].mxu0 %v2388
      %v2482 = vpop.f32.mrb[0].mxu0
      %v2483 = vadd.f32 %v2266, %v2482
      %v2484 = vpop.f32.mrb[0].mxu0
      %v2485 = vpop.f32.mrb[0].mxu0
      %v2486 = vadd.f32 %v2269, %v2485
      %v2487 = vpop.f32.mrb[0].mxu0
      %2488 = vmatprep.mubr.bf16.mxu0 0
      %2489 = vmatmul.mubr.bf16.gmra.mrb[0].mxu0 %v2391
      %v2490 = vpop.f32.mrb[0].mxu0
      %v2491 = vadd.f32 %v2274, %v2490
      %v2492 = vpop.f32.mrb[0].mxu0
      %v2493 = vpop.f32.mrb[0].mxu0
      %v2494 = vadd.f32 %v2277, %v2493
      %v2495 = vpop.f32.mrb[0].mxu0
      %2496 = vmatprep.mubr.bf16.mxu0 0
      %2497 = vmatmul.mubr.bf16.gmra.mrb[0].mxu0 %v2394
      %v2498 = vpop.f32.mrb[0].mxu0
      %v2499 = vadd.f32 %v2282, %v2498
      %v2500 = vpop.f32.mrb[0].mxu0
      %v2501 = vpop.f32.mrb[0].mxu0
      %v2502 = vadd.f32 %v2285, %v2501
      %v2503 = vpop.f32.mrb[0].mxu0
      %2504 = vmatprep.mubr.bf16.mxu0 0
      %2505 = vmatmul.mubr.bf16.gmra.mrb[0].mxu0 %v2397
      %v2506 = vpop.f32.mrb[0].mxu0
      %v2507 = vadd.f32 %v2290, %v2506
      %v2508 = vpop.f32.mrb[0].mxu0
      %v2509 = vpop.f32.mrb[0].mxu0
      %v2510 = vadd.f32 %v2293, %v2509
      %v2511 = vpop.f32.mrb[0].mxu0
      %2512 = vmatprep.mubr.bf16.mxu0 0
      %2513 = vmatmul.mubr.bf16.gmra.mrb[0].mxu0 %v2400
      %v2514 = vpop.f32.mrb[0].mxu0
      %v2515 = vadd.f32 %v2298, %v2514
      %v2516 = vpop.f32.mrb[0].mxu0
      %v2517 = vpop.f32.mrb[0].mxu0
      %v2518 = vadd.f32 %v2301, %v2517
      %v2519 = vpop.f32.mrb[0].mxu0
      %2520 = vmatprep.mubr.bf16.mxu0 0
      %2521 = vmatmul.mubr.bf16.gmra.mrb[0].mxu0 %v2403
      %v2522 = vpop.f32.mrb[0].mxu0
      %v2523 = vadd.f32 %v2306, %v2522
      %v2524 = vpop.f32.mrb[0].mxu0
      %v2525 = vpop.f32.mrb[0].mxu0
      %v2526 = vadd.f32 %v2309, %v2525
      %v2527 = vpop.f32.mrb[0].mxu0
      %2528 = vmatprep.mubr.bf16.mxu0 0
      %2529 = vmatmul.mubr.bf16.gmra.mrb[0].mxu0 %v2406
      %v2530 = vpop.f32.mrb[0].mxu0
      %v2531 = vadd.f32 %v2314, %v2530
      %v2532 = vpop.f32.mrb[0].mxu0
      %v2533 = vpop.f32.mrb[0].mxu0
      %v2534 = vadd.f32 %v2317, %v2533
      %v2535 = vpop.f32.mrb[0].mxu0
      %2536 = vmatprep.mubr.bf16.mxu0 0
      %2537 = vmatmul.mubr.bf16.gmra.mrb[0].mxu0 %v2409
      %v2538 = vpop.f32.mrb[0].mxu0
      %v2539 = vadd.f32 %v2322, %v2538
      %v2540 = vpop.f32.mrb[0].mxu0
      %v2541 = vpop.f32.mrb[0].mxu0
      %v2542 = vadd.f32 %v2325, %v2541
      %v2543 = vpop.f32.mrb[0].mxu0
      %2544 = vmatprep.mubr.bf16.mxu0 0
      %2545 = vmatmul.mubr.bf16.gmra.mrb[0].mxu0 %v2412
      %v2546 = vpop.f32.mrb[0].mxu0
      %v2547 = vadd.f32 %v2330, %v2546
      %v2548 = vpop.f32.mrb[0].mxu0
      %v2549 = vpop.f32.mrb[0].mxu0
      %v2550 = vadd.f32 %v2333, %v2549
      %v2551 = vpop.f32.mrb[0].mxu0
      %2552 = vmatprep.mubr.bf16.mxu0 0
      %2553 = vmatmul.mubr.bf16.gmra.mrb[0].mxu0 %v2415
      %v2554 = vpop.f32.mrb[0].mxu0
      %v2555 = vadd.f32 %v2338, %v2554
      %v2556 = vpop.f32.mrb[0].mxu0
      %v2557 = vpop.f32.mrb[0].mxu0
      %v2558 = vadd.f32 %v2341, %v2557
      %v2559 = vpop.f32.mrb[0].mxu0
      %2560 = vmatprep.mubr.bf16.mxu0 0
      %2561 = vmatmul.mubr.bf16.gmra.mrb[0].mxu0 %v2418
      %v2562 = vpop.f32.mrb[0].mxu0
      %v2563 = vadd.f32 %v2346, %v2562
      %v2564 = vpop.f32.mrb[0].mxu0
      %v2565 = vpop.f32.mrb[0].mxu0
      %v2566 = vadd.f32 %v2349, %v2565
      %v2567 = vpop.f32.mrb[0].mxu0
      %2568 = vmatprep.mubr.bf16.mxu0 0
      %2569 = vmatmul.mubr.bf16.gmra.mrb[0].mxu0 %v2421
      %v2570 = vpop.f32.mrb[0].mxu0
      %v2571 = vadd.f32 %v2354, %v2570
      %v2572 = vpop.f32.mrb[0].mxu0
      %v2573 = vpop.f32.mrb[0].mxu0
      %v2574 = vadd.f32 %v2357, %v2573
      %v2575 = vpop.f32.mrb[0].mxu0
      %2576 = vmatprep.mubr.bf16.mxu0 0
      %2577 = vmatmul.mubr.bf16.gmra.mrb[0].mxu0 %v2424
      %v2578 = vpop.f32.mrb[0].mxu0
      %v2579 = vadd.f32 %v2362, %v2578
      %v2580 = vpop.f32.mrb[0].mxu0
      %v2581 = vpop.f32.mrb[0].mxu0
      %v2582 = vadd.f32 %v2365, %v2581
      %v2583 = vpop.f32.mrb[0].mxu0
      %2584 = vmatprep.mubr.bf16.mxu0 0
      %2585 = vmatmul.mubr.bf16.gmra.mrb[0].mxu0 %v2427
      %v2586 = vpop.f32.mrb[0].mxu0
      %v2587 = vadd.f32 %v2370, %v2586
      %v2588 = vpop.f32.mrb[0].mxu0
      %v2589 = vpop.f32.mrb[0].mxu0
      %v2590 = vadd.f32 %v2373, %v2589
      %v2591 = vpop.f32.mrb[0].mxu0
      %2592 = vdwg.mxu0
      %s2593 = scalar_lea.vmem [#allocation2], 32
      %v2594 = vld [vmem:[%s2593] sm:$0xff]
      %v2595 = vld [vmem:[%s2593 + $0x8] sm:$0xff]
      %v2596 = vld [vmem:[%s2593 + $0x10] sm:$0xff]
      %v2597 = vld [vmem:[%s2593 + $0x18] sm:$0xff]
      %v2598 = vld [vmem:[%s2593 + $0x20] sm:$0xff]
      %v2599 = vld [vmem:[%s2593 + $0x28] sm:$0xff]
      %v2600 = vld [vmem:[%s2593 + $0x30] sm:$0xff]
      %v2601 = vld [vmem:[%s2593 + $0x38] sm:$0xff]
      %v2602 = vld [vmem:[%s2593 + $0x40] sm:$0xff]
      %v2603 = vld [vmem:[%s2593 + $0x48] sm:$0xff]
      %v2604 = vld [vmem:[%s2593 + $0x50] sm:$0xff]
      %v2605 = vld [vmem:[%s2593 + $0x58] sm:$0xff]
      %v2606 = vld [vmem:[%s2593 + $0x60] sm:$0xff]
      %v2607 = vld [vmem:[%s2593 + $0x68] sm:$0xff]
      %v2608 = vld [vmem:[%s2593 + $0x70] sm:$0xff]
      %v2609 = vld [vmem:[%s2593 + $0x78] sm:$0xff]
      %v2610 = vld [vmem:[%s2593 + $0x80] sm:$0xff]
      %v2611 = vld [vmem:[%s2593 + $0x88] sm:$0xff]
      %v2612 = vld [vmem:[%s2593 + $0x90] sm:$0xff]
      %v2613 = vld [vmem:[%s2593 + $0x98] sm:$0xff]
      %v2614 = vld [vmem:[%s2593 + $0xa0] sm:$0xff]
      %v2615 = vld [vmem:[%s2593 + $0xa8] sm:$0xff]
      %v2616 = vld [vmem:[%s2593 + $0xb0] sm:$0xff]
      %v2617 = vld [vmem:[%s2593 + $0xb8] sm:$0xff]
      %v2618 = vld [vmem:[%s2593 + $0xc0] sm:$0xff]
      %v2619 = vld [vmem:[%s2593 + $0xc8] sm:$0xff]
      %v2620 = vld [vmem:[%s2593 + $0xd0] sm:$0xff]
      %v2621 = vld [vmem:[%s2593 + $0xd8] sm:$0xff]
      %v2622 = vld [vmem:[%s2593 + $0xe0] sm:$0xff]
      %v2623 = vld [vmem:[%s2593 + $0xe8] sm:$0xff]
      %v2624 = vld [vmem:[%s2593 + $0xf0] sm:$0xff]
      %v2625 = vld [vmem:[%s2593 + $0xf8] sm:$0xff]
      %v2627 = vshrl.u32 %v2594, 16
      %v2629 = vshll.u32 %v2594, 16
      %v2631 = vrot.slane %v2629, 1
      %v2632 = vor.u32 %v2627, %v2631
      %v2634 = vshll.u32 %v2595, 16
      %v2636 = vrot.slane %v2634, 1
      %v2637 = vsel %vm484, %v2632, %v2636
      %v2638 = vshrl.u32 %v2595, 16
      %v2640 = vor.u32 %v2638, %v2636
      %v2642 = vshrl.u32 %v2596, 16
      %v2644 = vshll.u32 %v2596, 16
      %v2646 = vrot.slane %v2644, 1
      %v2647 = vor.u32 %v2642, %v2646
      %v2649 = vshll.u32 %v2597, 16
      %v2651 = vrot.slane %v2649, 1
      %v2652 = vsel %vm484, %v2647, %v2651
      %v2653 = vshrl.u32 %v2597, 16
      %v2655 = vor.u32 %v2653, %v2651
      %v2657 = vshrl.u32 %v2598, 16
      %v2659 = vshll.u32 %v2598, 16
      %v2661 = vrot.slane %v2659, 1
      %v2662 = vor.u32 %v2657, %v2661
      %v2664 = vshll.u32 %v2599, 16
      %v2666 = vrot.slane %v2664, 1
      %v2667 = vsel %vm484, %v2662, %v2666
      %v2668 = vshrl.u32 %v2599, 16
      %v2670 = vor.u32 %v2668, %v2666
      %v2672 = vshrl.u32 %v2600, 16
      %v2674 = vshll.u32 %v2600, 16
      %v2676 = vrot.slane %v2674, 1
      %v2677 = vor.u32 %v2672, %v2676
      %v2679 = vshll.u32 %v2601, 16
      %v2681 = vrot.slane %v2679, 1
      %v2682 = vsel %vm484, %v2677, %v2681
      %v2683 = vshrl.u32 %v2601, 16
      %v2685 = vor.u32 %v2683, %v2681
      %v2687 = vshrl.u32 %v2602, 16
      %v2689 = vshll.u32 %v2602, 16
      %v2691 = vrot.slane %v2689, 1
      %v2692 = vor.u32 %v2687, %v2691
      %v2694 = vshll.u32 %v2603, 16
      %v2696 = vrot.slane %v2694, 1
      %v2697 = vsel %vm484, %v2692, %v2696
      %v2698 = vshrl.u32 %v2603, 16
      %v2700 = vor.u32 %v2698, %v2696
      %v2702 = vshrl.u32 %v2604, 16
      %v2704 = vshll.u32 %v2604, 16
      %v2706 = vrot.slane %v2704, 1
      %v2707 = vor.u32 %v2702, %v2706
      %v2709 = vshll.u32 %v2605, 16
      %v2711 = vrot.slane %v2709, 1
      %v2712 = vsel %vm484, %v2707, %v2711
      %v2713 = vshrl.u32 %v2605, 16
      %v2715 = vor.u32 %v2713, %v2711
      %v2717 = vshrl.u32 %v2606, 16
      %v2719 = vshll.u32 %v2606, 16
      %v2721 = vrot.slane %v2719, 1
      %v2722 = vor.u32 %v2717, %v2721
      %v2724 = vshll.u32 %v2607, 16
      %v2726 = vrot.slane %v2724, 1
      %v2727 = vsel %vm484, %v2722, %v2726
      %v2728 = vshrl.u32 %v2607, 16
      %v2730 = vor.u32 %v2728, %v2726
      %v2732 = vshrl.u32 %v2608, 16
      %v2734 = vshll.u32 %v2608, 16
      %v2736 = vrot.slane %v2734, 1
      %v2737 = vor.u32 %v2732, %v2736
      %v2739 = vshll.u32 %v2609, 16
      %v2741 = vrot.slane %v2739, 1
      %v2742 = vsel %vm484, %v2737, %v2741
      %v2743 = vshrl.u32 %v2609, 16
      %v2745 = vor.u32 %v2743, %v2741
      %v2747 = vshrl.u32 %v2610, 16
      %v2749 = vshll.u32 %v2610, 16
      %v2751 = vrot.slane %v2749, 1
      %v2752 = vor.u32 %v2747, %v2751
      %v2754 = vshll.u32 %v2611, 16
      %v2756 = vrot.slane %v2754, 1
      %v2757 = vsel %vm484, %v2752, %v2756
      %v2758 = vshrl.u32 %v2611, 16
      %v2760 = vor.u32 %v2758, %v2756
      %v2762 = vshrl.u32 %v2612, 16
      %v2764 = vshll.u32 %v2612, 16
      %v2766 = vrot.slane %v2764, 1
      %v2767 = vor.u32 %v2762, %v2766
      %v2769 = vshll.u32 %v2613, 16
      %v2771 = vrot.slane %v2769, 1
      %v2772 = vsel %vm484, %v2767, %v2771
      %v2773 = vshrl.u32 %v2613, 16
      %v2775 = vor.u32 %v2773, %v2771
      %v2777 = vshrl.u32 %v2614, 16
      %v2779 = vshll.u32 %v2614, 16
      %v2781 = vrot.slane %v2779, 1
      %v2782 = vor.u32 %v2777, %v2781
      %v2784 = vshll.u32 %v2615, 16
      %v2786 = vrot.slane %v2784, 1
      %v2787 = vsel %vm484, %v2782, %v2786
      %v2788 = vshrl.u32 %v2615, 16
      %v2790 = vor.u32 %v2788, %v2786
      %v2792 = vshrl.u32 %v2616, 16
      %v2794 = vshll.u32 %v2616, 16
      %v2796 = vrot.slane %v2794, 1
      %v2797 = vor.u32 %v2792, %v2796
      %v2799 = vshll.u32 %v2617, 16
      %v2801 = vrot.slane %v2799, 1
      %v2802 = vsel %vm484, %v2797, %v2801
      %v2803 = vshrl.u32 %v2617, 16
      %v2805 = vor.u32 %v2803, %v2801
      %v2807 = vshrl.u32 %v2618, 16
      %v2809 = vshll.u32 %v2618, 16
      %v2811 = vrot.slane %v2809, 1
      %v2812 = vor.u32 %v2807, %v2811
      %v2814 = vshll.u32 %v2619, 16
      %v2816 = vrot.slane %v2814, 1
      %v2817 = vsel %vm484, %v2812, %v2816
      %v2818 = vshrl.u32 %v2619, 16
      %v2820 = vor.u32 %v2818, %v2816
      %v2822 = vshrl.u32 %v2620, 16
      %v2824 = vshll.u32 %v2620, 16
      %v2826 = vrot.slane %v2824, 1
      %v2827 = vor.u32 %v2822, %v2826
      %v2829 = vshll.u32 %v2621, 16
      %v2831 = vrot.slane %v2829, 1
      %v2832 = vsel %vm484, %v2827, %v2831
      %v2833 = vshrl.u32 %v2621, 16
      %v2835 = vor.u32 %v2833, %v2831
      %v2837 = vshrl.u32 %v2622, 16
      %v2839 = vshll.u32 %v2622, 16
      %v2841 = vrot.slane %v2839, 1
      %v2842 = vor.u32 %v2837, %v2841
      %v2844 = vshll.u32 %v2623, 16
      %v2846 = vrot.slane %v2844, 1
      %v2847 = vsel %vm484, %v2842, %v2846
      %v2848 = vshrl.u32 %v2623, 16
      %v2850 = vor.u32 %v2848, %v2846
      %v2852 = vshrl.u32 %v2624, 16
      %v2854 = vshll.u32 %v2624, 16
      %v2856 = vrot.slane %v2854, 1
      %v2857 = vor.u32 %v2852, %v2856
      %v2859 = vshll.u32 %v2625, 16
      %v2861 = vrot.slane %v2859, 1
      %v2862 = vsel %vm484, %v2857, %v2861
      %v2863 = vshrl.u32 %v2625, 16
      %v2865 = vor.u32 %v2863, %v2861
      %2866 = vrot.lane.b32.xlu0 %v2637, 4
      %v2867 = vpop.permute.xlu0 %2866
      %2868 = vrot.lane.b32.xlu0 %v2640, 4
      %v2869 = vpop.permute.xlu0 %2868
      %2870 = vrot.lane.b32.xlu0 %v2652, 4
      %v2871 = vpop.permute.xlu0 %2870
      %2872 = vrot.lane.b32.xlu0 %v2655, 4
      %v2873 = vpop.permute.xlu0 %2872
      %2874 = vrot.lane.b32.xlu0 %v2667, 4
      %v2875 = vpop.permute.xlu0 %2874
      %2876 = vrot.lane.b32.xlu0 %v2670, 4
      %v2877 = vpop.permute.xlu0 %2876
      %2878 = vrot.lane.b32.xlu0 %v2682, 4
      %v2879 = vpop.permute.xlu0 %2878
      %2880 = vrot.lane.b32.xlu0 %v2685, 4
      %v2881 = vpop.permute.xlu0 %2880
      %2882 = vrot.lane.b32.xlu0 %v2697, 4
      %v2883 = vpop.permute.xlu0 %2882
      %2884 = vrot.lane.b32.xlu0 %v2700, 4
      %v2885 = vpop.permute.xlu0 %2884
      %2886 = vrot.lane.b32.xlu0 %v2712, 4
      %v2887 = vpop.permute.xlu0 %2886
      %2888 = vrot.lane.b32.xlu0 %v2715, 4
      %v2889 = vpop.permute.xlu0 %2888
      %2890 = vrot.lane.b32.xlu0 %v2727, 4
      %v2891 = vpop.permute.xlu0 %2890
      %2892 = vrot.lane.b32.xlu0 %v2730, 4
      %v2893 = vpop.permute.xlu0 %2892
      %2894 = vrot.lane.b32.xlu0 %v2742, 4
      %v2895 = vpop.permute.xlu0 %2894
      %2896 = vrot.lane.b32.xlu0 %v2745, 4
      %v2897 = vpop.permute.xlu0 %2896
      %2898 = vrot.lane.b32.xlu0 %v2757, 4
      %v2899 = vpop.permute.xlu0 %2898
      %2900 = vrot.lane.b32.xlu0 %v2760, 4
      %v2901 = vpop.permute.xlu0 %2900
      %2902 = vrot.lane.b32.xlu0 %v2772, 4
      %v2903 = vpop.permute.xlu0 %2902
      %2904 = vrot.lane.b32.xlu0 %v2775, 4
      %v2905 = vpop.permute.xlu0 %2904
      %2906 = vrot.lane.b32.xlu0 %v2787, 4
      %v2907 = vpop.permute.xlu0 %2906
      %2908 = vrot.lane.b32.xlu0 %v2790, 4
      %v2909 = vpop.permute.xlu0 %2908
      %2910 = vrot.lane.b32.xlu0 %v2802, 4
      %v2911 = vpop.permute.xlu0 %2910
      %2912 = vrot.lane.b32.xlu0 %v2805, 4
      %v2913 = vpop.permute.xlu0 %2912
      %2914 = vrot.lane.b32.xlu0 %v2817, 4
      %v2915 = vpop.permute.xlu0 %2914
      %2916 = vrot.lane.b32.xlu0 %v2820, 4
      %v2917 = vpop.permute.xlu0 %2916
      %2918 = vrot.lane.b32.xlu0 %v2832, 4
      %v2919 = vpop.permute.xlu0 %2918
      %2920 = vrot.lane.b32.xlu0 %v2835, 4
      %v2921 = vpop.permute.xlu0 %2920
      %2922 = vrot.lane.b32.xlu0 %v2847, 4
      %v2923 = vpop.permute.xlu0 %2922
      %2924 = vrot.lane.b32.xlu0 %v2850, 4
      %v2925 = vpop.permute.xlu0 %2924
      %2926 = vrot.lane.b32.xlu0 %v2862, 4
      %v2927 = vpop.permute.xlu0 %2926
      %2928 = vrot.lane.b32.xlu0 %v2865, 4
      %v2929 = vpop.permute.xlu0 %2928
      %v2962 = vrot.slane %v2594, 1
      %v2963 = vrot.slane %v2595, 1
      %v2964 = vsel %vm821, %v2962, %v2963
      %v2965 = vrot.slane %v2596, 1
      %v2966 = vrot.slane %v2597, 1
      %v2967 = vsel %vm821, %v2965, %v2966
      %v2968 = vrot.slane %v2598, 1
      %v2969 = vrot.slane %v2599, 1
      %v2970 = vsel %vm821, %v2968, %v2969
      %v2971 = vrot.slane %v2600, 1
      %v2972 = vrot.slane %v2601, 1
      %v2973 = vsel %vm821, %v2971, %v2972
      %v2974 = vrot.slane %v2602, 1
      %v2975 = vrot.slane %v2603, 1
      %v2976 = vsel %vm821, %v2974, %v2975
      %v2977 = vrot.slane %v2604, 1
      %v2978 = vrot.slane %v2605, 1
      %v2979 = vsel %vm821, %v2977, %v2978
      %v2980 = vrot.slane %v2606, 1
      %v2981 = vrot.slane %v2607, 1
      %v2982 = vsel %vm821, %v2980, %v2981
      %v2983 = vrot.slane %v2608, 1
      %v2984 = vrot.slane %v2609, 1
      %v2985 = vsel %vm821, %v2983, %v2984
      %v2986 = vrot.slane %v2610, 1
      %v2987 = vrot.slane %v2611, 1
      %v2988 = vsel %vm821, %v2986, %v2987
      %v2989 = vrot.slane %v2612, 1
      %v2990 = vrot.slane %v2613, 1
      %v2991 = vsel %vm821, %v2989, %v2990
      %v2992 = vrot.slane %v2614, 1
      %v2993 = vrot.slane %v2615, 1
      %v2994 = vsel %vm821, %v2992, %v2993
      %v2995 = vrot.slane %v2616, 1
      %v2996 = vrot.slane %v2617, 1
      %v2997 = vsel %vm821, %v2995, %v2996
      %v2998 = vrot.slane %v2618, 1
      %v2999 = vrot.slane %v2619, 1
      %v3000 = vsel %vm821, %v2998, %v2999
      %v3001 = vrot.slane %v2620, 1
      %v3002 = vrot.slane %v2621, 1
      %v3003 = vsel %vm821, %v3001, %v3002
      %v3004 = vrot.slane %v2622, 1
      %v3005 = vrot.slane %v2623, 1
      %v3006 = vsel %vm821, %v3004, %v3005
      %v3007 = vrot.slane %v2624, 1
      %v3008 = vrot.slane %v2625, 1
      %v3009 = vsel %vm821, %v3007, %v3008
      %3010 = vrot.lane.b32.xlu0 %v2964, 8
      %v3011 = vpop.permute.xlu0 %3010
      %3012 = vrot.lane.b32.xlu0 %v2963, 8
      %v3013 = vpop.permute.xlu0 %3012
      %3014 = vrot.lane.b32.xlu0 %v2967, 8
      %v3015 = vpop.permute.xlu0 %3014
      %3016 = vrot.lane.b32.xlu0 %v2966, 8
      %v3017 = vpop.permute.xlu0 %3016
      %3018 = vrot.lane.b32.xlu0 %v2970, 8
      %v3019 = vpop.permute.xlu0 %3018
      %3020 = vrot.lane.b32.xlu0 %v2969, 8
      %v3021 = vpop.permute.xlu0 %3020
      %3022 = vrot.lane.b32.xlu0 %v2973, 8
      %v3023 = vpop.permute.xlu0 %3022
      %3024 = vrot.lane.b32.xlu0 %v2972, 8
      %v3025 = vpop.permute.xlu0 %3024
      %3026 = vrot.lane.b32.xlu0 %v2976, 8
      %v3027 = vpop.permute.xlu0 %3026
      %3028 = vrot.lane.b32.xlu0 %v2975, 8
      %v3029 = vpop.permute.xlu0 %3028
      %3030 = vrot.lane.b32.xlu0 %v2979, 8
      %v3031 = vpop.permute.xlu0 %3030
      %3032 = vrot.lane.b32.xlu0 %v2978, 8
      %v3033 = vpop.permute.xlu0 %3032
      %3034 = vrot.lane.b32.xlu0 %v2982, 8
      %v3035 = vpop.permute.xlu0 %3034
      %3036 = vrot.lane.b32.xlu0 %v2981, 8
      %v3037 = vpop.permute.xlu0 %3036
      %3038 = vrot.lane.b32.xlu0 %v2985, 8
      %v3039 = vpop.permute.xlu0 %3038
      %3040 = vrot.lane.b32.xlu0 %v2984, 8
      %v3041 = vpop.permute.xlu0 %3040
      %3042 = vrot.lane.b32.xlu0 %v2988, 8
      %v3043 = vpop.permute.xlu0 %3042
      %3044 = vrot.lane.b32.xlu0 %v2987, 8
      %v3045 = vpop.permute.xlu0 %3044
      %3046 = vrot.lane.b32.xlu0 %v2991, 8
      %v3047 = vpop.permute.xlu0 %3046
      %3048 = vrot.lane.b32.xlu0 %v2990, 8
      %v3049 = vpop.permute.xlu0 %3048
      %3050 = vrot.lane.b32.xlu0 %v2994, 8
      %v3051 = vpop.permute.xlu0 %3050
      %3052 = vrot.lane.b32.xlu0 %v2993, 8
      %v3053 = vpop.permute.xlu0 %3052
      %3054 = vrot.lane.b32.xlu0 %v2997, 8
      %v3055 = vpop.permute.xlu0 %3054
      %3056 = vrot.lane.b32.xlu0 %v2996, 8
      %v3057 = vpop.permute.xlu0 %3056
      %3058 = vrot.lane.b32.xlu0 %v3000, 8
      %v3059 = vpop.permute.xlu0 %3058
      %3060 = vrot.lane.b32.xlu0 %v2999, 8
      %v3061 = vpop.permute.xlu0 %3060
      %3062 = vrot.lane.b32.xlu0 %v3003, 8
      %v3063 = vpop.permute.xlu0 %3062
      %3064 = vrot.lane.b32.xlu0 %v3002, 8
      %v3065 = vpop.permute.xlu0 %3064
      %3066 = vrot.lane.b32.xlu0 %v3006, 8
      %v3067 = vpop.permute.xlu0 %3066
      %3068 = vrot.lane.b32.xlu0 %v3005, 8
      %v3069 = vpop.permute.xlu0 %3068
      %3070 = vrot.lane.b32.xlu0 %v3009, 8
      %v3071 = vpop.permute.xlu0 %3070
      %3072 = vrot.lane.b32.xlu0 %v3008, 8
      %v3073 = vpop.permute.xlu0 %3072
      %v3075 = vsel %vm251, %v2594, %v2867
      %v3077 = vsel %vm251, %v2595, %v2869
      %v3079 = vsel %vm251, %v2596, %v2871
      %v3081 = vsel %vm251, %v2597, %v2873
      %v3083 = vsel %vm251, %v2598, %v2875
      %v3085 = vsel %vm251, %v2599, %v2877
      %v3087 = vsel %vm251, %v2600, %v2879
      %v3089 = vsel %vm251, %v2601, %v2881
      %v3091 = vsel %vm251, %v2602, %v2883
      %v3093 = vsel %vm251, %v2603, %v2885
      %v3095 = vsel %vm251, %v2604, %v2887
      %v3097 = vsel %vm251, %v2605, %v2889
      %v3099 = vsel %vm251, %v2606, %v2891
      %v3101 = vsel %vm251, %v2607, %v2893
      %v3103 = vsel %vm251, %v2608, %v2895
      %v3105 = vsel %vm251, %v2609, %v2897
      %v3107 = vsel %vm251, %v2610, %v2899
      %v3109 = vsel %vm251, %v2611, %v2901
      %v3111 = vsel %vm251, %v2612, %v2903
      %v3113 = vsel %vm251, %v2613, %v2905
      %v3115 = vsel %vm251, %v2614, %v2907
      %v3117 = vsel %vm251, %v2615, %v2909
      %v3119 = vsel %vm251, %v2616, %v2911
      %v3121 = vsel %vm251, %v2617, %v2913
      %v3123 = vsel %vm251, %v2618, %v2915
      %v3125 = vsel %vm251, %v2619, %v2917
      %v3127 = vsel %vm251, %v2620, %v2919
      %v3129 = vsel %vm251, %v2621, %v2921
      %v3131 = vsel %vm251, %v2622, %v2923
      %v3133 = vsel %vm251, %v2623, %v2925
      %v3135 = vsel %vm251, %v2624, %v2927
      %v3137 = vsel %vm251, %v2625, %v2929
      %v3139 = vsel %vm998, %v3075, %v3011
      %v3141 = vsel %vm998, %v3077, %v3013
      %v3143 = vsel %vm998, %v3079, %v3015
      %v3145 = vsel %vm998, %v3081, %v3017
      %v3147 = vsel %vm998, %v3083, %v3019
      %v3149 = vsel %vm998, %v3085, %v3021
      %v3151 = vsel %vm998, %v3087, %v3023
      %v3153 = vsel %vm998, %v3089, %v3025
      %v3155 = vsel %vm998, %v3091, %v3027
      %v3157 = vsel %vm998, %v3093, %v3029
      %v3159 = vsel %vm998, %v3095, %v3031
      %v3161 = vsel %vm998, %v3097, %v3033
      %v3163 = vsel %vm998, %v3099, %v3035
      %v3165 = vsel %vm998, %v3101, %v3037
      %v3167 = vsel %vm998, %v3103, %v3039
      %v3169 = vsel %vm998, %v3105, %v3041
      %v3171 = vsel %vm998, %v3107, %v3043
      %v3173 = vsel %vm998, %v3109, %v3045
      %v3175 = vsel %vm998, %v3111, %v3047
      %v3177 = vsel %vm998, %v3113, %v3049
      %v3179 = vsel %vm998, %v3115, %v3051
      %v3181 = vsel %vm998, %v3117, %v3053
      %v3183 = vsel %vm998, %v3119, %v3055
      %v3185 = vsel %vm998, %v3121, %v3057
      %v3187 = vsel %vm998, %v3123, %v3059
      %v3189 = vsel %vm998, %v3125, %v3061
      %v3191 = vsel %vm998, %v3127, %v3063
      %v3193 = vsel %vm998, %v3129, %v3065
      %v3195 = vsel %vm998, %v3131, %v3067
      %v3197 = vsel %vm998, %v3133, %v3069
      %v3199 = vsel %vm998, %v3135, %v3071
      %v3201 = vsel %vm998, %v3137, %v3073
      %v3202 = vshrl.u32 %v3139, 16
      %v3204 = vrot.slane %v3202, 3
      %v3205 = vshll.u32 %v3139, 16
      %v3207 = vrot.slane %v3205, 4
      %v3208 = vor.u32 %v3204, %v3207
      %v3209 = vshrl.u32 %v3141, 16
      %v3211 = vrot.slane %v3209, 3
      %v3212 = vshll.u32 %v3141, 16
      %v3214 = vrot.slane %v3212, 4
      %v3215 = vor.u32 %v3211, %v3214
      %v3216 = vsel %vm1063, %v3208, %v3215
      %v3217 = vshrl.u32 %v3143, 16
      %v3219 = vrot.slane %v3217, 3
      %v3220 = vshll.u32 %v3143, 16
      %v3222 = vrot.slane %v3220, 4
      %v3223 = vor.u32 %v3219, %v3222
      %v3224 = vshrl.u32 %v3145, 16
      %v3226 = vrot.slane %v3224, 3
      %v3227 = vshll.u32 %v3145, 16
      %v3229 = vrot.slane %v3227, 4
      %v3230 = vor.u32 %v3226, %v3229
      %v3231 = vsel %vm1063, %v3223, %v3230
      %v3232 = vshrl.u32 %v3147, 16
      %v3234 = vrot.slane %v3232, 3
      %v3235 = vshll.u32 %v3147, 16
      %v3237 = vrot.slane %v3235, 4
      %v3238 = vor.u32 %v3234, %v3237
      %v3239 = vshrl.u32 %v3149, 16
      %v3241 = vrot.slane %v3239, 3
      %v3242 = vshll.u32 %v3149, 16
      %v3244 = vrot.slane %v3242, 4
      %v3245 = vor.u32 %v3241, %v3244
      %v3246 = vsel %vm1063, %v3238, %v3245
      %v3247 = vshrl.u32 %v3151, 16
      %v3249 = vrot.slane %v3247, 3
      %v3250 = vshll.u32 %v3151, 16
      %v3252 = vrot.slane %v3250, 4
      %v3253 = vor.u32 %v3249, %v3252
      %v3254 = vshrl.u32 %v3153, 16
      %v3256 = vrot.slane %v3254, 3
      %v3257 = vshll.u32 %v3153, 16
      %v3259 = vrot.slane %v3257, 4
      %v3260 = vor.u32 %v3256, %v3259
      %v3261 = vsel %vm1063, %v3253, %v3260
      %v3262 = vshrl.u32 %v3155, 16
      %v3264 = vrot.slane %v3262, 3
      %v3265 = vshll.u32 %v3155, 16
      %v3267 = vrot.slane %v3265, 4
      %v3268 = vor.u32 %v3264, %v3267
      %v3269 = vshrl.u32 %v3157, 16
      %v3271 = vrot.slane %v3269, 3
      %v3272 = vshll.u32 %v3157, 16
      %v3274 = vrot.slane %v3272, 4
      %v3275 = vor.u32 %v3271, %v3274
      %v3276 = vsel %vm1063, %v3268, %v3275
      %v3277 = vshrl.u32 %v3159, 16
      %v3279 = vrot.slane %v3277, 3
      %v3280 = vshll.u32 %v3159, 16
      %v3282 = vrot.slane %v3280, 4
      %v3283 = vor.u32 %v3279, %v3282
      %v3284 = vshrl.u32 %v3161, 16
      %v3286 = vrot.slane %v3284, 3
      %v3287 = vshll.u32 %v3161, 16
      %v3289 = vrot.slane %v3287, 4
      %v3290 = vor.u32 %v3286, %v3289
      %v3291 = vsel %vm1063, %v3283, %v3290
      %v3292 = vshrl.u32 %v3163, 16
      %v3294 = vrot.slane %v3292, 3
      %v3295 = vshll.u32 %v3163, 16
      %v3297 = vrot.slane %v3295, 4
      %v3298 = vor.u32 %v3294, %v3297
      %v3299 = vshrl.u32 %v3165, 16
      %v3301 = vrot.slane %v3299, 3
      %v3302 = vshll.u32 %v3165, 16
      %v3304 = vrot.slane %v3302, 4
      %v3305 = vor.u32 %v3301, %v3304
      %v3306 = vsel %vm1063, %v3298, %v3305
      %v3307 = vshrl.u32 %v3167, 16
      %v3309 = vrot.slane %v3307, 3
      %v3310 = vshll.u32 %v3167, 16
      %v3312 = vrot.slane %v3310, 4
      %v3313 = vor.u32 %v3309, %v3312
      %v3314 = vshrl.u32 %v3169, 16
      %v3316 = vrot.slane %v3314, 3
      %v3317 = vshll.u32 %v3169, 16
      %v3319 = vrot.slane %v3317, 4
      %v3320 = vor.u32 %v3316, %v3319
      %v3321 = vsel %vm1063, %v3313, %v3320
      %v3322 = vshrl.u32 %v3171, 16
      %v3324 = vrot.slane %v3322, 3
      %v3325 = vshll.u32 %v3171, 16
      %v3327 = vrot.slane %v3325, 4
      %v3328 = vor.u32 %v3324, %v3327
      %v3329 = vshrl.u32 %v3173, 16
      %v3331 = vrot.slane %v3329, 3
      %v3332 = vshll.u32 %v3173, 16
      %v3334 = vrot.slane %v3332, 4
      %v3335 = vor.u32 %v3331, %v3334
      %v3336 = vsel %vm1063, %v3328, %v3335
      %v3337 = vshrl.u32 %v3175, 16
      %v3339 = vrot.slane %v3337, 3
      %v3340 = vshll.u32 %v3175, 16
      %v3342 = vrot.slane %v3340, 4
      %v3343 = vor.u32 %v3339, %v3342
      %v3344 = vshrl.u32 %v3177, 16
      %v3346 = vrot.slane %v3344, 3
      %v3347 = vshll.u32 %v3177, 16
      %v3349 = vrot.slane %v3347, 4
      %v3350 = vor.u32 %v3346, %v3349
      %v3351 = vsel %vm1063, %v3343, %v3350
      %v3352 = vshrl.u32 %v3179, 16
      %v3354 = vrot.slane %v3352, 3
      %v3355 = vshll.u32 %v3179, 16
      %v3357 = vrot.slane %v3355, 4
      %v3358 = vor.u32 %v3354, %v3357
      %v3359 = vshrl.u32 %v3181, 16
      %v3361 = vrot.slane %v3359, 3
      %v3362 = vshll.u32 %v3181, 16
      %v3364 = vrot.slane %v3362, 4
      %v3365 = vor.u32 %v3361, %v3364
      %v3366 = vsel %vm1063, %v3358, %v3365
      %v3367 = vshrl.u32 %v3183, 16
      %v3369 = vrot.slane %v3367, 3
      %v3370 = vshll.u32 %v3183, 16
      %v3372 = vrot.slane %v3370, 4
      %v3373 = vor.u32 %v3369, %v3372
      %v3374 = vshrl.u32 %v3185, 16
      %v3376 = vrot.slane %v3374, 3
      %v3377 = vshll.u32 %v3185, 16
      %v3379 = vrot.slane %v3377, 4
      %v3380 = vor.u32 %v3376, %v3379
      %v3381 = vsel %vm1063, %v3373, %v3380
      %v3382 = vshrl.u32 %v3187, 16
      %v3384 = vrot.slane %v3382, 3
      %v3385 = vshll.u32 %v3187, 16
      %v3387 = vrot.slane %v3385, 4
      %v3388 = vor.u32 %v3384, %v3387
      %v3389 = vshrl.u32 %v3189, 16
      %v3391 = vrot.slane %v3389, 3
      %v3392 = vshll.u32 %v3189, 16
      %v3394 = vrot.slane %v3392, 4
      %v3395 = vor.u32 %v3391, %v3394
      %v3396 = vsel %vm1063, %v3388, %v3395
      %v3397 = vshrl.u32 %v3191, 16
      %v3399 = vrot.slane %v3397, 3
      %v3400 = vshll.u32 %v3191, 16
      %v3402 = vrot.slane %v3400, 4
      %v3403 = vor.u32 %v3399, %v3402
      %v3404 = vshrl.u32 %v3193, 16
      %v3406 = vrot.slane %v3404, 3
      %v3407 = vshll.u32 %v3193, 16
      %v3409 = vrot.slane %v3407, 4
      %v3410 = vor.u32 %v3406, %v3409
      %v3411 = vsel %vm1063, %v3403, %v3410
      %v3412 = vshrl.u32 %v3195, 16
      %v3414 = vrot.slane %v3412, 3
      %v3415 = vshll.u32 %v3195, 16
      %v3417 = vrot.slane %v3415, 4
      %v3418 = vor.u32 %v3414, %v3417
      %v3419 = vshrl.u32 %v3197, 16
      %v3421 = vrot.slane %v3419, 3
      %v3422 = vshll.u32 %v3197, 16
      %v3424 = vrot.slane %v3422, 4
      %v3425 = vor.u32 %v3421, %v3424
      %v3426 = vsel %vm1063, %v3418, %v3425
      %v3427 = vshrl.u32 %v3199, 16
      %v3429 = vrot.slane %v3427, 3
      %v3430 = vshll.u32 %v3199, 16
      %v3432 = vrot.slane %v3430, 4
      %v3433 = vor.u32 %v3429, %v3432
      %v3434 = vshrl.u32 %v3201, 16
      %v3436 = vrot.slane %v3434, 3
      %v3437 = vshll.u32 %v3201, 16
      %v3439 = vrot.slane %v3437, 4
      %v3440 = vor.u32 %v3436, %v3439
      %v3441 = vsel %vm1063, %v3433, %v3440
      %s3442 = scalar_lea.vmem %s1, 16
      %v3443 = vld [vmem:[%s3442] sm:$0xf]
      %v3444 = vld [vmem:[%s3442 + $0x4] sm:$0x3]
      %v3447 = vunpack.c.l.b16 %v3443
      %v3448 = vunpack.c.l.b16 %v3444
      %v3449 = vpack.c.b16 %v3448, %v3447
      %v3451 = vsel %vm2162, %v3216, 0
      %v3454 = vsel %vm2162, %v3231, 0
      %v3457 = vsel %vm2162, %v3246, 0
      %v3460 = vsel %vm2162, %v3261, 0
      %v3463 = vsel %vm2162, %v3276, 0
      %v3466 = vsel %vm2162, %v3291, 0
      %v3469 = vsel %vm2162, %v3306, 0
      %v3472 = vsel %vm2162, %v3321, 0
      %v3475 = vsel %vm2162, %v3336, 0
      %v3478 = vsel %vm2162, %v3351, 0
      %v3481 = vsel %vm2162, %v3366, 0
      %v3484 = vsel %vm2162, %v3381, 0
      %v3487 = vsel %vm2162, %v3396, 0
      %v3490 = vsel %vm2162, %v3411, 0
      %v3493 = vsel %vm2162, %v3426, 0
      %v3496 = vsel %vm2162, %v3441, 0
      %v3499 = vsel %vm2211, %v3449, 0
      %3501 = vmatprep.subr.bf16.mxu0 0
      %3502 = vmatpush1.bf16.msra.mxu0 %v3499
      %3503 = vmatprep.subr.bf16.mxu0 0
      %3504 = vmatpush1.bf16.msra.mxu0 0
      %3505 = vmatprep.subr.bf16.mxu0 0
      %3506 = vmatpush1.bf16.msra.mxu0 0
      %3507 = vmatprep.subr.bf16.mxu0 0
      %3508 = vmatpush1.bf16.msra.mxu0 0
      %3509 = vmatprep.subr.bf16.mxu0 0
      %3510 = vmatpush1.bf16.msra.mxu0 0
      %3511 = vmatprep.subr.bf16.mxu0 0
      %3512 = vmatpush1.bf16.msra.mxu0 0
      %3513 = vmatprep.subr.bf16.mxu0 0
      %3514 = vmatpush1.bf16.msra.mxu0 0
      %3515 = vmatprep.subr.bf16.mxu0 0
      %3516 = vmatpush1.bf16.msra.mxu0 0
      %3517 = vmatprep.subr.bf16.mxu0 0
      %3518 = vmatpush1.bf16.msra.mxu0 0
      %3519 = vmatprep.subr.bf16.mxu0 0
      %3520 = vmatpush1.bf16.msra.mxu0 0
      %3521 = vmatprep.subr.bf16.mxu0 0
      %3522 = vmatpush1.bf16.msra.mxu0 0
      %3523 = vmatprep.subr.bf16.mxu0 0
      %3524 = vmatpush1.bf16.msra.mxu0 0
      %3525 = vmatprep.subr.bf16.mxu0 0
      %3526 = vmatpush1.bf16.msra.mxu0 0
      %3527 = vmatprep.subr.bf16.mxu0 0
      %3528 = vmatpush1.bf16.msra.mxu0 0
      %3529 = vmatprep.subr.bf16.mxu0 0
      %3530 = vmatpush1.bf16.msra.mxu0 0
      %3531 = vmatprep.subr.bf16.mxu0 0
      %3532 = vmatpush1.bf16.msra.mxu0 0
      %3533 = vmatprep.mubr.bf16.mxu0 0
      %3534 = vmatmul.mubr.bf16.gmra.mrb[0].mxu0 %v3451
      %v3535 = vpop.f32.mrb[0].mxu0
      %v3536 = vadd.f32 0.0, %v3535
      %v3537 = vpop.f32.mrb[0].mxu0
      %v3538 = vpop.f32.mrb[0].mxu0
      %v3539 = vadd.f32 0.0, %v3538
      %v3540 = vpop.f32.mrb[0].mxu0
      %3541 = vmatprep.mubr.bf16.mxu0 0
      %3542 = vmatmul.mubr.bf16.gmra.mrb[0].mxu0 %v3454
      %v3543 = vpop.f32.mrb[0].mxu0
      %v3544 = vadd.f32 0.0, %v3543
      %v3545 = vpop.f32.mrb[0].mxu0
      %v3546 = vpop.f32.mrb[0].mxu0
      %v3547 = vadd.f32 0.0, %v3546
      %v3548 = vpop.f32.mrb[0].mxu0
      %3549 = vmatprep.mubr.bf16.mxu0 0
      %3550 = vmatmul.mubr.bf16.gmra.mrb[0].mxu0 %v3457
      %v3551 = vpop.f32.mrb[0].mxu0
      %v3552 = vadd.f32 0.0, %v3551
      %v3553 = vpop.f32.mrb[0].mxu0
      %v3554 = vpop.f32.mrb[0].mxu0
      %v3555 = vadd.f32 0.0, %v3554
      %v3556 = vpop.f32.mrb[0].mxu0
      %3557 = vmatprep.mubr.bf16.mxu0 0
      %3558 = vmatmul.mubr.bf16.gmra.mrb[0].mxu0 %v3460
      %v3559 = vpop.f32.mrb[0].mxu0
      %v3560 = vadd.f32 0.0, %v3559
      %v3561 = vpop.f32.mrb[0].mxu0
      %v3562 = vpop.f32.mrb[0].mxu0
      %v3563 = vadd.f32 0.0, %v3562
      %v3564 = vpop.f32.mrb[0].mxu0
      %3565 = vmatprep.mubr.bf16.mxu0 0
      %3566 = vmatmul.mubr.bf16.gmra.mrb[0].mxu0 %v3463
      %v3567 = vpop.f32.mrb[0].mxu0
      %v3568 = vadd.f32 0.0, %v3567
      %v3569 = vpop.f32.mrb[0].mxu0
      %v3570 = vpop.f32.mrb[0].mxu0
      %v3571 = vadd.f32 0.0, %v3570
      %v3572 = vpop.f32.mrb[0].mxu0
      %3573 = vmatprep.mubr.bf16.mxu0 0
      %3574 = vmatmul.mubr.bf16.gmra.mrb[0].mxu0 %v3466
      %v3575 = vpop.f32.mrb[0].mxu0
      %v3576 = vadd.f32 0.0, %v3575
      %v3577 = vpop.f32.mrb[0].mxu0
      %v3578 = vpop.f32.mrb[0].mxu0
      %v3579 = vadd.f32 0.0, %v3578
      %v3580 = vpop.f32.mrb[0].mxu0
      %3581 = vmatprep.mubr.bf16.mxu0 0
      %3582 = vmatmul.mubr.bf16.gmra.mrb[0].mxu0 %v3469
      %v3583 = vpop.f32.mrb[0].mxu0
      %v3584 = vadd.f32 0.0, %v3583
      %v3585 = vpop.f32.mrb[0].mxu0
      %v3586 = vpop.f32.mrb[0].mxu0
      %v3587 = vadd.f32 0.0, %v3586
      %v3588 = vpop.f32.mrb[0].mxu0
      %3589 = vmatprep.mubr.bf16.mxu0 0
      %3590 = vmatmul.mubr.bf16.gmra.mrb[0].mxu0 %v3472
      %v3591 = vpop.f32.mrb[0].mxu0
      %v3592 = vadd.f32 0.0, %v3591
      %v3593 = vpop.f32.mrb[0].mxu0
      %v3594 = vpop.f32.mrb[0].mxu0
      %v3595 = vadd.f32 0.0, %v3594
      %v3596 = vpop.f32.mrb[0].mxu0
      %3597 = vmatprep.mubr.bf16.mxu0 0
      %3598 = vmatmul.mubr.bf16.gmra.mrb[0].mxu0 %v3475
      %v3599 = vpop.f32.mrb[0].mxu0
      %v3600 = vadd.f32 0.0, %v3599
      %v3601 = vpop.f32.mrb[0].mxu0
      %v3602 = vpop.f32.mrb[0].mxu0
      %v3603 = vadd.f32 0.0, %v3602
      %v3604 = vpop.f32.mrb[0].mxu0
      %3605 = vmatprep.mubr.bf16.mxu0 0
      %3606 = vmatmul.mubr.bf16.gmra.mrb[0].mxu0 %v3478
      %v3607 = vpop.f32.mrb[0].mxu0
      %v3608 = vadd.f32 0.0, %v3607
      %v3609 = vpop.f32.mrb[0].mxu0
      %v3610 = vpop.f32.mrb[0].mxu0
      %v3611 = vadd.f32 0.0, %v3610
      %v3612 = vpop.f32.mrb[0].mxu0
      %3613 = vmatprep.mubr.bf16.mxu0 0
      %3614 = vmatmul.mubr.bf16.gmra.mrb[0].mxu0 %v3481
      %v3615 = vpop.f32.mrb[0].mxu0
      %v3616 = vadd.f32 0.0, %v3615
      %v3617 = vpop.f32.mrb[0].mxu0
      %v3618 = vpop.f32.mrb[0].mxu0
      %v3619 = vadd.f32 0.0, %v3618
      %v3620 = vpop.f32.mrb[0].mxu0
      %3621 = vmatprep.mubr.bf16.mxu0 0
      %3622 = vmatmul.mubr.bf16.gmra.mrb[0].mxu0 %v3484
      %v3623 = vpop.f32.mrb[0].mxu0
      %v3624 = vadd.f32 0.0, %v3623
      %v3625 = vpop.f32.mrb[0].mxu0
      %v3626 = vpop.f32.mrb[0].mxu0
      %v3627 = vadd.f32 0.0, %v3626
      %v3628 = vpop.f32.mrb[0].mxu0
      %3629 = vmatprep.mubr.bf16.mxu0 0
      %3630 = vmatmul.mubr.bf16.gmra.mrb[0].mxu0 %v3487
      %v3631 = vpop.f32.mrb[0].mxu0
      %v3632 = vadd.f32 0.0, %v3631
      %v3633 = vpop.f32.mrb[0].mxu0
      %v3634 = vpop.f32.mrb[0].mxu0
      %v3635 = vadd.f32 0.0, %v3634
      %v3636 = vpop.f32.mrb[0].mxu0
      %3637 = vmatprep.mubr.bf16.mxu0 0
      %3638 = vmatmul.mubr.bf16.gmra.mrb[0].mxu0 %v3490
      %v3639 = vpop.f32.mrb[0].mxu0
      %v3640 = vadd.f32 0.0, %v3639
      %v3641 = vpop.f32.mrb[0].mxu0
      %v3642 = vpop.f32.mrb[0].mxu0
      %v3643 = vadd.f32 0.0, %v3642
      %v3644 = vpop.f32.mrb[0].mxu0
      %3645 = vmatprep.mubr.bf16.mxu0 0
      %3646 = vmatmul.mubr.bf16.gmra.mrb[0].mxu0 %v3493
      %v3647 = vpop.f32.mrb[0].mxu0
      %v3648 = vadd.f32 0.0, %v3647
      %v3649 = vpop.f32.mrb[0].mxu0
      %v3650 = vpop.f32.mrb[0].mxu0
      %v3651 = vadd.f32 0.0, %v3650
      %v3652 = vpop.f32.mrb[0].mxu0
      %3653 = vmatprep.mubr.bf16.mxu0 0
      %3654 = vmatmul.mubr.bf16.gmra.mrb[0].mxu0 %v3496
      %v3655 = vpop.f32.mrb[0].mxu0
      %v3656 = vadd.f32 0.0, %v3655
      %v3657 = vpop.f32.mrb[0].mxu0
      %v3658 = vpop.f32.mrb[0].mxu0
      %v3659 = vadd.f32 0.0, %v3658
      %v3660 = vpop.f32.mrb[0].mxu0
      %3661 = vdwg.mxu0
      %v3662 = vadd.f32 %v2467, %v3536
      %v3663 = vadd.f32 %v2470, %v3539
      %v3664 = vadd.f32 %v2475, %v3544
      %v3665 = vadd.f32 %v2478, %v3547
      %v3666 = vadd.f32 %v2483, %v3552
      %v3667 = vadd.f32 %v2486, %v3555
      %v3668 = vadd.f32 %v2491, %v3560
      %v3669 = vadd.f32 %v2494, %v3563
      %v3670 = vadd.f32 %v2499, %v3568
      %v3671 = vadd.f32 %v2502, %v3571
      %v3672 = vadd.f32 %v2507, %v3576
      %v3673 = vadd.f32 %v2510, %v3579
      %v3674 = vadd.f32 %v2515, %v3584
      %v3675 = vadd.f32 %v2518, %v3587
      %v3676 = vadd.f32 %v2523, %v3592
      %v3677 = vadd.f32 %v2526, %v3595
      %v3678 = vadd.f32 %v2531, %v3600
      %v3679 = vadd.f32 %v2534, %v3603
      %v3680 = vadd.f32 %v2539, %v3608
      %v3681 = vadd.f32 %v2542, %v3611
      %v3682 = vadd.f32 %v2547, %v3616
      %v3683 = vadd.f32 %v2550, %v3619
      %v3684 = vadd.f32 %v2555, %v3624
      %v3685 = vadd.f32 %v2558, %v3627
      %v3686 = vadd.f32 %v2563, %v3632
      %v3687 = vadd.f32 %v2566, %v3635
      %v3688 = vadd.f32 %v2571, %v3640
      %v3689 = vadd.f32 %v2574, %v3643
      %v3690 = vadd.f32 %v2579, %v3648
      %v3691 = vadd.f32 %v2582, %v3651
      %v3692 = vadd.f32 %v2587, %v3656
      %v3693 = vadd.f32 %v2590, %v3659
      %v3694 = vld [vmem:[%s2] sm:$0x1]
      %v3696 = vlaneseq
      %v3697 = vshrl.u32 %v3696, 7
      %v3698 = vsub.s32 0, %v3697
      %v3699 = vrot.slane %v3694, %v3698
      %v3701 = vadd.f32 %v3662, %v3699
      %v3702 = vadd.f32 %v3663, %v3699
      %v3703 = vadd.f32 %v3664, %v3699
      %v3704 = vadd.f32 %v3665, %v3699
      %v3705 = vadd.f32 %v3666, %v3699
      %v3706 = vadd.f32 %v3667, %v3699
      %v3707 = vadd.f32 %v3668, %v3699
      %v3708 = vadd.f32 %v3669, %v3699
      %v3709 = vadd.f32 %v3670, %v3699
      %v3710 = vadd.f32 %v3671, %v3699
      %v3711 = vadd.f32 %v3672, %v3699
      %v3712 = vadd.f32 %v3673, %v3699
      %v3713 = vadd.f32 %v3674, %v3699
      %v3714 = vadd.f32 %v3675, %v3699
      %v3715 = vadd.f32 %v3676, %v3699
      %v3716 = vadd.f32 %v3677, %v3699
      %v3717 = vadd.f32 %v3678, %v3699
      %v3718 = vadd.f32 %v3679, %v3699
      %v3719 = vadd.f32 %v3680, %v3699
      %v3720 = vadd.f32 %v3681, %v3699
      %v3721 = vadd.f32 %v3682, %v3699
      %v3722 = vadd.f32 %v3683, %v3699
      %v3723 = vadd.f32 %v3684, %v3699
      %v3724 = vadd.f32 %v3685, %v3699
      %v3725 = vadd.f32 %v3686, %v3699
      %v3726 = vadd.f32 %v3687, %v3699
      %v3727 = vadd.f32 %v3688, %v3699
      %v3728 = vadd.f32 %v3689, %v3699
      %v3729 = vadd.f32 %v3690, %v3699
      %v3730 = vadd.f32 %v3691, %v3699
      %v3731 = vadd.f32 %v3692, %v3699
      %v3732 = vadd.f32 %v3693, %v3699
      %v3733 = vld [vmem:[%s212] sm:$0xff]
      %v3734 = vld [vmem:[%s212 + $0x8] sm:$0xff]
      %v3735 = vld [vmem:[%s212 + $0x10] sm:$0xff]
      %v3736 = vld [vmem:[%s212 + $0x18] sm:$0xff]
      %v3737 = vld [vmem:[%s212 + $0x20] sm:$0xff]
      %v3738 = vld [vmem:[%s212 + $0x28] sm:$0xff]
      %v3739 = vld [vmem:[%s212 + $0x30] sm:$0xff]
      %v3740 = vld [vmem:[%s212 + $0x38] sm:$0xff]
      %v3741 = vld [vmem:[%s212 + $0x40] sm:$0xff]
      %v3742 = vld [vmem:[%s212 + $0x48] sm:$0xff]
      %v3743 = vld [vmem:[%s212 + $0x50] sm:$0xff]
      %v3744 = vld [vmem:[%s212 + $0x58] sm:$0xff]
      %v3745 = vld [vmem:[%s212 + $0x60] sm:$0xff]
      %v3746 = vld [vmem:[%s212 + $0x68] sm:$0xff]
      %v3747 = vld [vmem:[%s212 + $0x70] sm:$0xff]
      %v3748 = vld [vmem:[%s212 + $0x78] sm:$0xff]
      %v3749 = vld [vmem:[%s212 + $0x80] sm:$0xff]
      %v3750 = vld [vmem:[%s212 + $0x88] sm:$0xff]
      %v3751 = vld [vmem:[%s212 + $0x90] sm:$0xff]
      %v3752 = vld [vmem:[%s212 + $0x98] sm:$0xff]
      %v3753 = vld [vmem:[%s212 + $0xa0] sm:$0xff]
      %v3754 = vld [vmem:[%s212 + $0xa8] sm:$0xff]
      %v3755 = vld [vmem:[%s212 + $0xb0] sm:$0xff]
      %v3756 = vld [vmem:[%s212 + $0xb8] sm:$0xff]
      %v3757 = vld [vmem:[%s212 + $0xc0] sm:$0xff]
      %v3758 = vld [vmem:[%s212 + $0xc8] sm:$0xff]
      %v3759 = vld [vmem:[%s212 + $0xd0] sm:$0xff]
      %v3760 = vld [vmem:[%s212 + $0xd8] sm:$0xff]
      %v3761 = vld [vmem:[%s212 + $0xe0] sm:$0xff]
      %v3762 = vld [vmem:[%s212 + $0xe8] sm:$0xff]
      %v3763 = vld [vmem:[%s212 + $0xf0] sm:$0xff]
      %v3764 = vld [vmem:[%s212 + $0xf8] sm:$0xff]
      %v3765 = vadd.f32 %v3701, %v3733
      %v3766 = vadd.f32 %v3702, %v3734
      %v3767 = vadd.f32 %v3703, %v3735
      %v3768 = vadd.f32 %v3704, %v3736
      %v3769 = vadd.f32 %v3705, %v3737
      %v3770 = vadd.f32 %v3706, %v3738
      %v3771 = vadd.f32 %v3707, %v3739
      %v3772 = vadd.f32 %v3708, %v3740
      %v3773 = vadd.f32 %v3709, %v3741
      %v3774 = vadd.f32 %v3710, %v3742
      %v3775 = vadd.f32 %v3711, %v3743
      %v3776 = vadd.f32 %v3712, %v3744
      %v3777 = vadd.f32 %v3713, %v3745
      %v3778 = vadd.f32 %v3714, %v3746
      %v3779 = vadd.f32 %v3715, %v3747
      %v3780 = vadd.f32 %v3716, %v3748
      %v3781 = vadd.f32 %v3717, %v3749
      %v3782 = vadd.f32 %v3718, %v3750
      %v3783 = vadd.f32 %v3719, %v3751
      %v3784 = vadd.f32 %v3720, %v3752
      %v3785 = vadd.f32 %v3721, %v3753
      %v3786 = vadd.f32 %v3722, %v3754
      %v3787 = vadd.f32 %v3723, %v3755
      %v3788 = vadd.f32 %v3724, %v3756
      %v3789 = vadd.f32 %v3725, %v3757
      %v3790 = vadd.f32 %v3726, %v3758
      %v3791 = vadd.f32 %v3727, %v3759
      %v3792 = vadd.f32 %v3728, %v3760
      %v3793 = vadd.f32 %v3729, %v3761
      %v3794 = vadd.f32 %v3730, %v3762
      %v3795 = vadd.f32 %v3731, %v3763
      %v3796 = vadd.f32 %v3732, %v3764
      %v3797 = vmax.f32 %v3765, 0.0
      %v3798 = vmax.f32 %v3766, 0.0
      %v3799 = vmax.f32 %v3767, 0.0
      %v3800 = vmax.f32 %v3768, 0.0
      %v3801 = vmax.f32 %v3769, 0.0
      %v3802 = vmax.f32 %v3770, 0.0
      %v3803 = vmax.f32 %v3771, 0.0
      %v3804 = vmax.f32 %v3772, 0.0
      %v3805 = vmax.f32 %v3773, 0.0
      %v3806 = vmax.f32 %v3774, 0.0
      %v3807 = vmax.f32 %v3775, 0.0
      %v3808 = vmax.f32 %v3776, 0.0
      %v3809 = vmax.f32 %v3777, 0.0
      %v3810 = vmax.f32 %v3778, 0.0
      %v3811 = vmax.f32 %v3779, 0.0
      %v3812 = vmax.f32 %v3780, 0.0
      %v3813 = vmax.f32 %v3781, 0.0
      %v3814 = vmax.f32 %v3782, 0.0
      %v3815 = vmax.f32 %v3783, 0.0
      %v3816 = vmax.f32 %v3784, 0.0
      %v3817 = vmax.f32 %v3785, 0.0
      %v3818 = vmax.f32 %v3786, 0.0
      %v3819 = vmax.f32 %v3787, 0.0
      %v3820 = vmax.f32 %v3788, 0.0
      %v3821 = vmax.f32 %v3789, 0.0
      %v3822 = vmax.f32 %v3790, 0.0
      %v3823 = vmax.f32 %v3791, 0.0
      %v3824 = vmax.f32 %v3792, 0.0
      %v3825 = vmax.f32 %v3793, 0.0
      %v3826 = vmax.f32 %v3794, 0.0
      %v3827 = vmax.f32 %v3795, 0.0
      %v3828 = vmax.f32 %v3796, 0.0
      %3829 = vst.msk [vmem:[%s217] sm:$0xff] %vm251, %v3797
      %3830 = vst.msk [vmem:[%s217 + $0x8] sm:$0xff] %vm251, %v3798
      %3831 = vst.msk [vmem:[%s217 + $0x10] sm:$0xff] %vm251, %v3799
      %3832 = vst.msk [vmem:[%s217 + $0x18] sm:$0xff] %vm251, %v3800
      %3833 = vst.msk [vmem:[%s217 + $0x20] sm:$0xff] %vm251, %v3801
      %3834 = vst.msk [vmem:[%s217 + $0x28] sm:$0xff] %vm251, %v3802
      %3835 = vst.msk [vmem:[%s217 + $0x30] sm:$0xff] %vm251, %v3803
      %3836 = vst.msk [vmem:[%s217 + $0x38] sm:$0xff] %vm251, %v3804
      %3837 = vst.msk [vmem:[%s217 + $0x40] sm:$0xff] %vm251, %v3805
      %3838 = vst.msk [vmem:[%s217 + $0x48] sm:$0xff] %vm251, %v3806
      %3839 = vst.msk [vmem:[%s217 + $0x50] sm:$0xff] %vm251, %v3807
      %3840 = vst.msk [vmem:[%s217 + $0x58] sm:$0xff] %vm251, %v3808
      %3841 = vst.msk [vmem:[%s217 + $0x60] sm:$0xff] %vm251, %v3809
      %3842 = vst.msk [vmem:[%s217 + $0x68] sm:$0xff] %vm251, %v3810
      %3843 = vst.msk [vmem:[%s217 + $0x70] sm:$0xff] %vm251, %v3811
      %3844 = vst.msk [vmem:[%s217 + $0x78] sm:$0xff] %vm251, %v3812
      %3845 = vst.msk [vmem:[%s217 + $0x80] sm:$0xff] %vm251, %v3813
      %3846 = vst.msk [vmem:[%s217 + $0x88] sm:$0xff] %vm251, %v3814
      %3847 = vst.msk [vmem:[%s217 + $0x90] sm:$0xff] %vm251, %v3815
      %3848 = vst.msk [vmem:[%s217 + $0x98] sm:$0xff] %vm251, %v3816
      %3849 = vst.msk [vmem:[%s217 + $0xa0] sm:$0xff] %vm251, %v3817
      %3850 = vst.msk [vmem:[%s217 + $0xa8] sm:$0xff] %vm251, %v3818
      %3851 = vst.msk [vmem:[%s217 + $0xb0] sm:$0xff] %vm251, %v3819
      %3852 = vst.msk [vmem:[%s217 + $0xb8] sm:$0xff] %vm251, %v3820
      %3853 = vst.msk [vmem:[%s217 + $0xc0] sm:$0xff] %vm251, %v3821
      %3854 = vst.msk [vmem:[%s217 + $0xc8] sm:$0xff] %vm251, %v3822
      %3855 = vst.msk [vmem:[%s217 + $0xd0] sm:$0xff] %vm251, %v3823
      %3856 = vst.msk [vmem:[%s217 + $0xd8] sm:$0xff] %vm251, %v3824
      %3857 = vst.msk [vmem:[%s217 + $0xe0] sm:$0xff] %vm251, %v3825
      %3858 = vst.msk [vmem:[%s217 + $0xe8] sm:$0xff] %vm251, %v3826
      %3859 = vst.msk [vmem:[%s217 + $0xf0] sm:$0xff] %vm251, %v3827
      %3860 = vst.msk [vmem:[%s217 + $0xf8] sm:$0xff] %vm251, %v3828
      %p3861 = scmp.lt.s32.totalorder %s15, 1
      %s3862 = scalar_select %p3861, %s15, 1
      %s3863 = smul.addr %s3862, 32
      %s3864 = smul.addr %s3863, 8
      %s3865 = scalar_lea.vmem %s4, %s3864
      // Predicated region
      $region37: #{basic_block.3} parent=35 // pred_check
        %p3866 = pneg %p127
      $region38: #{basic_block.3} parent=35 // pred_check_branch
        %3868 = sbr.rel (%p3866) target = $region40
      $region39: #{basic_block.3} parent=35 // pred_region
        _
      $region40: #{basic_block.3} parent=35 // pred_fallthru
        _
    $region36: #{basic_block.3} parent=5 // pred_fallthru
      _
    %p3869 = scmp.le.s32.totalorder 2, %s10
    // Predicated region
    $region41: #{basic_block.3} parent=5 // pred_check
      %p3870 = pneg %p3869
    $region42: #{basic_block.3} parent=5 // pred_check_branch
      %3872 = sbr.rel (%p3870) target = $region44
    $region43: #{basic_block.3} parent=5 // pred_region
      %s3873 = ssub.s32 %s10, 2
      // Predicated region
      $region45: #{basic_block.3} parent=43 // pred_check
        %p3874 = pneg %p133
      $region46: #{basic_block.3} parent=43 // pred_check_branch
        %3876 = sbr.rel (%p3874) target = $region48
      $region47: #{basic_block.3} parent=43 // pred_region
        %p3877 = scmp.lt.s32.totalorder %s16, 1
        %s3878 = scalar_select %p3877, %s16, 1
        %s3879 = smul.addr %s3878, 32
        %s3880 = smul.addr %s3879, 8
        %s3881 = scalar_lea.vmem %s4, %s3880
      $region48: #{basic_block.3} parent=43 // pred_fallthru
        _
    $region44: #{basic_block.3} parent=5 // pred_fallthru
      _
  $region6: #{basic_block.3} parent=0 // loop_footer
    %s14 = sadd.s32 1, %s10
  $region7: #{basic_block.3} parent=0 // loop_footer_branch
    %9 = sbr.rel target = $region3
  $region8: #{basic_block.3} parent=0 // loop_exit
    _

</llo_original>
